<compile_context>
chip_gen: v5e
topology: v5e:2x2
jax: 0.10.0
libtpu: 0.0.40
codegen_flags: <defaults>
</compile_context>

<pallas_src>
import functools

import jax
import jax.numpy as jnp
from jax import lax
from jax.experimental import pallas as pl
from jax.experimental.pallas import tpu as pltpu


def _lstm_kernel(xw0_ref,                    # (tT, Bp, 4Hp): x@W_ih0 + b0, i/f/o pre-scaled by 0.5
                 w_hh0_ref,                  # (Hp, 4Hp)
                 w_ih1_ref, w_hh1_ref,       # (Hp, 4Hp) each
                 b1_ref,                     # (1, 4Hp)   i/f/o pre-scaled by 0.5
                 w_fc_ref, b_fc_ref,         # (Hp, Op), (1, Op)
                 out_ref,                    # (Bp, Op)
                 h0, c0, h1, c1,             # VMEM scratch, each (Bp, Hp)
                 *, hidden_pad, unroll, use_bf16):
    Hp = hidden_pad
    tT, Bp, _ = xw0_ref.shape

    ti = pl.program_id(0)
    nt = pl.num_programs(0)

    @pl.when(ti == 0)
    def _():
        h0[...] = jnp.zeros_like(h0)
        c0[...] = jnp.zeros_like(c0)
        h1[...] = jnp.zeros_like(h1)
        c1[...] = jnp.zeros_like(c1)

    cast = (lambda a: a.astype(jnp.bfloat16)) if use_bf16 else (lambda a: a)

    # ---- Hoisted loop invariants (weights resident, mask/bias built once) ----
    w_hh0 = w_hh0_ref[...]
    w_ih1 = w_ih1_ref[...]
    w_hh1 = w_hh1_ref[...]
    b1b = jnp.broadcast_to(b1_ref[...], (Bp, 4 * Hp))
    lane = lax.broadcasted_iota(jnp.int32, (Bp, 4 * Hp), 1)
    g_mask = (lane >= 2 * Hp) & (lane < 3 * Hp)   # lanes holding the "g" gate

    def gates_to_state(gates, c_ref, h_ref):
        # Single full-width tanh (1-slot EUP), then a VPU fixup:
        #   g lanes  : tanh(x)                        (columns left unscaled)
        #   i/f/o    : sigmoid(x) = 0.5*tanh(x/2)+0.5 (0.5 folded into weights)
        act = jnp.tanh(gates)
        act = jnp.where(g_mask, act, 0.5 * act + 0.5)
        i_g = act[:, 0 * Hp:1 * Hp]
        f_g = act[:, 1 * Hp:2 * Hp]
        g_g = act[:, 2 * Hp:3 * Hp]
        o_g = act[:, 3 * Hp:4 * Hp]
        c_new = f_g * c_ref[...] + i_g * g_g
        h_new = o_g * jnp.tanh(c_new)
        c_ref[...] = c_new
        h_ref[...] = h_new
        return h_new

    def step(t, carry):
        # Layer 0: input projection precomputed -> only the recurrent dot.
        g0 = xw0_ref[t] + jnp.dot(cast(h0[...]), w_hh0,
                                  preferred_element_type=jnp.float32)
        h0_new = gates_to_state(g0, c0, h0)

        # Layer 1: two small dots straight from vregs (no per-step concat).
        g1 = (jnp.dot(cast(h0_new), w_ih1, preferred_element_type=jnp.float32)
              + jnp.dot(cast(h1[...]), w_hh1, preferred_element_type=jnp.float32)
              + b1b)
        gates_to_state(g1, c1, h1)
        return carry

    lax.fori_loop(0, tT, step, None, unroll=unroll)

    @pl.when(ti == nt - 1)
    def _():
        out_ref[...] = (jnp.dot(cast(h1[...]), w_fc_ref[...],
                                preferred_element_type=jnp.float32)
                        + b_fc_ref[...]).astype(out_ref.dtype)


def lstm_model_forward(x, params, *, hidden_size, time_tile=None,
                       use_bf16_matmul=False):
    """x: (B, T, input_size) float32 -> (B, output_size) float32."""
    B, T, I = x.shape
    H = hidden_size
    O = params["w_fc"].shape[1]

    # Lane-align hidden / output dims (full-vreg gate slices & state stores).
    Hp = ((H + 127) // 128) * 128
    Op = ((O + 127) // 128) * 128
    # Sublane-align batch (16 rows if matmul operands are bf16-packed).
    row_tile = 16 if use_bf16_matmul else 8
    Bp = ((max(B, row_tile) + row_tile - 1) // row_tile) * row_tile

    f32 = jnp.float32
    mm_dtype = jnp.bfloat16 if use_bf16_matmul else f32

    def pad_gate_cols(w):                       # (..., 4H) -> (..., 4Hp)
        w4 = w.reshape(w.shape[:-1] + (4, H))
        w4 = jnp.pad(w4, [(0, 0)] * (w4.ndim - 1) + [(0, Hp - H)])
        return w4.reshape(w.shape[:-1] + (4 * Hp,))

    def pad_rows(w):                            # (H, X) -> (Hp, X)
        return jnp.pad(w, ((0, Hp - H), (0, 0)))

    # Fold the sigmoid(x) = 0.5*tanh(x/2) + 0.5 pre-scale into i/f/o columns.
    gate_scale = jnp.concatenate([jnp.full((2 * Hp,), 0.5, f32),
                                  jnp.ones((Hp,), f32),
                                  jnp.full((Hp,), 0.5, f32)])

    w_ih0 = pad_gate_cols(params["w_ih0"]) * gate_scale                        # (I, 4Hp)
    b0    = pad_gate_cols(params["b0"]) * gate_scale                           # (1, 4Hp)
    w_hh0 = (pad_rows(pad_gate_cols(params["w_hh0"])) * gate_scale).astype(mm_dtype)
    w_ih1 = (pad_rows(pad_gate_cols(params["w_ih1"])) * gate_scale).astype(mm_dtype)
    w_hh1 = (pad_rows(pad_gate_cols(params["w_hh1"])) * gate_scale).astype(mm_dtype)
    b1    = pad_gate_cols(params["b1"]) * gate_scale                           # (1, 4Hp)
    w_fc  = jnp.pad(params["w_fc"], ((0, Hp - H), (0, Op - O))).astype(mm_dtype)
    b_fc  = jnp.pad(params["b_fc"], ((0, 0), (0, Op - O)))

    # Hoist the layer-0 input projection entirely into the wrapper: stream a
    # lane-dense (T, Bp, 4Hp) tensor instead of a lane-width-I x block.
    if Bp != B:
        x = jnp.pad(x, ((0, Bp - B), (0, 0), (0, 0)))
    x_tm = jnp.transpose(x, (1, 0, 2))                                         # (T, Bp, I)
    xw0_all = (jnp.einsum("tbi,ig->tbg", x_tm, w_ih0) + b0).astype(f32)        # (T, Bp, 4Hp)

    # Time tiling keeps per-step VMEM bounded for long sequences.
    if time_tile is None:
        time_tile = 1
        for cand in (64, 32, 16, 8, 4, 2, 1):
            if T % cand == 0:
                time_tile = min(T, cand)
                break
    assert T % time_tile == 0
    n_tiles = T // time_tile
    unroll = time_tile if time_tile <= 8 else 8   # partial unroll for big tiles

    kernel = functools.partial(_lstm_kernel, hidden_pad=Hp,
                               unroll=unroll, use_bf16=use_bf16_matmul)

    def full(shape):
        return pl.BlockSpec(shape, lambda t, _n=len(shape): (0,) * _n)

    # VMEM budget from actual shapes (double-buffered inputs) + headroom,
    # capped below v7x's 64 MiB of physical VMEM.
    esize = jnp.dtype(mm_dtype).itemsize
    weight_bytes = ((w_hh0.size + w_ih1.size + w_hh1.size + w_fc.size) * esize
                    + (b1.size + b_fc.size) * 4)
    tile_bytes = time_tile * Bp * 4 * Hp * 4
    scratch_bytes = 4 * Bp * Hp * 4
    out_bytes = Bp * Op * 4
    needed = 2 * (weight_bytes + tile_bytes + out_bytes) + scratch_bytes
    vmem_limit = int(min(56 << 20, max(32 << 20, 2 * needed)))

    out = pl.pallas_call(
        kernel,
        out_shape=jax.ShapeDtypeStruct((Bp, Op), jnp.float32),
        grid=(n_tiles,),
        in_specs=[
            pl.BlockSpec((time_tile, Bp, 4 * Hp), lambda t: (t, 0, 0)),  # xw0 tile
            full((Hp, 4 * Hp)),      # w_hh0
            full((Hp, 4 * Hp)),      # w_ih1
            full((Hp, 4 * Hp)),      # w_hh1
            full((1, 4 * Hp)),       # b1
            full((Hp, Op)),          # w_fc
            full((1, Op)),           # b_fc
        ],
        out_specs=pl.BlockSpec((Bp, Op), lambda t: (0, 0)),
        scratch_shapes=[pltpu.VMEM((Bp, Hp), jnp.float32) for _ in range(4)],
        compiler_params=pltpu.CompilerParams(
            # State is carried in VMEM scratch across the time grid -> must be
            # sequential ("arbitrary"); only a batch axis may ever be parallel.
            dimension_semantics=("arbitrary",),
            vmem_limit_bytes=vmem_limit,
        ),
    )(xw0_all, w_hh0, w_ih1, w_hh1, b1, w_fc, b_fc)

    return out[:B, :O]


def init_params(key, input_size, hidden_size, output_size):
    """Deterministic PyTorch-style init: U(-1/sqrt(H), 1/sqrt(H))."""
    H = hidden_size
    bound = 1.0 / jnp.sqrt(jnp.float32(H))
    keys = jax.random.split(key, 12)

    def u(k, shape):
        return jax.random.uniform(k, shape, jnp.float32, -bound, bound)

    # Weights stored already transposed for right-multiplication in the kernel.
    w_ih0 = u(keys[0], (input_size, 4 * H))     # = weight_ih_l0.T
    w_hh0 = u(keys[1], (H, 4 * H))              # = weight_hh_l0.T
    b0 = u(keys[2], (1, 4 * H)) + u(keys[3], (1, 4 * H))   # bias_ih_l0 + bias_hh_l0
    w_ih1 = u(keys[4], (H, 4 * H))              # = weight_ih_l1.T
    w_hh1 = u(keys[5], (H, 4 * H))              # = weight_hh_l1.T
    b1 = u(keys[6], (1, 4 * H)) + u(keys[7], (1, 4 * H))
    w_fc = u(keys[8], (H, output_size))         # = fc.weight.T
    b_fc = u(keys[9], (1, output_size))
    return dict(w_ih0=w_ih0, w_hh0=w_hh0, b0=b0,
                w_ih1=w_ih1, w_hh1=w_hh1, b1=b1,
                w_fc=w_fc, b_fc=b_fc)


def reference_forward(x, params, *, hidden_size):
    """Pure-JAX reference (same semantics as nn.LSTM + Linear) for validation."""
    H = hidden_size
    B, T, _ = x.shape

    def step(carry, x_t):
        h0, c0, h1, c1 = carry

        def cell(inp, h, c, w_ih, w_hh, b):
            g = inp @ w_ih + h @ w_hh + b
            i = jax.nn.sigmoid(g[:, 0 * H:1 * H])
            f = jax.nn.sigmoid(g[:, 1 * H:2 * H])
            gg = jnp.tanh(g[:, 2 * H:3 * H])
            o = jax.nn.sigmoid(g[:, 3 * H:4 * H])
            c_new = f * c + i * gg
            return o * jnp.tanh(c_new), c_new

        h0, c0 = cell(x_t, h0, c0, params["w_ih0"], params["w_hh0"], params["b0"])
        h1, c1 = cell(h0, h1, c1, params["w_ih1"], params["w_hh1"], params["b1"])
        return (h0, c0, h1, c1), None

    z = jnp.zeros((B, H), jnp.float32)
    (h0, c0, h1, c1), _ = lax.scan(step, (z, z, z, z), jnp.transpose(x, (1, 0, 2)))
    return h1 @ params["w_fc"] + params["b_fc"]


if __name__ == "__main__":
    input_size, hidden_size, num_layers, output_size = 1, 64, 2, 1
    B, T = 2, 8

    key = jax.random.PRNGKey(0)
    k_x, k_p = jax.random.split(key)
    x = jax.random.normal(k_x, (B, T, input_size), jnp.float32)
    params = init_params(k_p, input_size, hidden_size, output_size)

    out = lstm_model_forward(x, params, hidden_size=hidden_size)
    out = jax.block_until_ready(out)

    ref = reference_forward(x, params, hidden_size=hidden_size)
    assert out.shape == (B, output_size)
    assert jnp.allclose(out, ref, atol=1e-4, rtol=1e-4), (out, ref)

    print("KERNEL_OK")
</pallas_src>

<mosaic_0001>
module attributes {stable_mosaic.version = 11 : i64} {
  func.func @_lstm_kernel(%arg0: i32, %arg1: memref<8x8x512xf32, #tpu.memory_space<vmem>>, %arg2: memref<128x512xf32, #tpu.memory_space<vmem>>, %arg3: memref<128x512xf32, #tpu.memory_space<vmem>>, %arg4: memref<128x512xf32, #tpu.memory_space<vmem>>, %arg5: memref<1x512xf32, #tpu.memory_space<vmem>>, %arg6: memref<128x128xf32, #tpu.memory_space<vmem>>, %arg7: memref<1x128xf32, #tpu.memory_space<vmem>>, %arg8: memref<8x128xf32, #tpu.memory_space<vmem>>, %arg9: memref<8x128xf32, #tpu.memory_space<vmem>>, %arg10: memref<8x128xf32, #tpu.memory_space<vmem>>, %arg11: memref<8x128xf32, #tpu.memory_space<vmem>>, %arg12: memref<8x128xf32, #tpu.memory_space<vmem>>) attributes {dimension_semantics = [#tpu.dimension_semantics<arbitrary>], iteration_bounds = array<i64: 1>, scalar_prefetch = 0 : i64, scratch_operands = 4 : i64, tpu.core_type = #tpu.core_type<tc>, window_params = [{transform_indices = @transform_0, window_bounds = array<i64: 8, 8, 512>}, {pipeline_mode = #tpu.pipeline_mode<synchronous>, transform_indices = @transform_1, window_bounds = array<i64: 128, 512>}, {pipeline_mode = #tpu.pipeline_mode<synchronous>, transform_indices = @transform_2, window_bounds = array<i64: 128, 512>}, {pipeline_mode = #tpu.pipeline_mode<synchronous>, transform_indices = @transform_3, window_bounds = array<i64: 128, 512>}, {pipeline_mode = #tpu.pipeline_mode<synchronous>, transform_indices = @transform_4, window_bounds = array<i64: 1, 512>}, {pipeline_mode = #tpu.pipeline_mode<synchronous>, transform_indices = @transform_5, window_bounds = array<i64: 128, 128>}, {pipeline_mode = #tpu.pipeline_mode<synchronous>, transform_indices = @transform_6, window_bounds = array<i64: 1, 128>}, {pipeline_mode = #tpu.pipeline_mode<synchronous>, transform_indices = @transform_7, window_bounds = array<i64: 8, 128>}]} {
    %c0_i32 = arith.constant 0 : i32
    %0 = arith.cmpi eq, %arg0, %c0_i32 : i32
    %1 = arith.extui %0 : i1 to i32
    %c0_i32_0 = arith.constant 0 : i32
    %2 = arith.cmpi ne, %1, %c0_i32_0 : i32
    scf.if %2 {
      %cst_210 = arith.constant 0.000000e+00 : f32
      %394 = vector.broadcast %cst_210 : f32 to vector<8x128xf32>
      %c0_211 = arith.constant 0 : index
      %c0_212 = arith.constant 0 : index
      %395 = vector.load %arg9[%c0_211, %c0_212] : memref<8x128xf32, #tpu.memory_space<vmem>>, vector<8x128xf32>
      tpu.vector_store %arg9[%c0_211, %c0_212], %394 {strides = array<i32>} : memref<8x128xf32, #tpu.memory_space<vmem>>, vector<8x128xf32>,
      %cst_213 = arith.constant 0.000000e+00 : f32
      %396 = vector.broadcast %cst_213 : f32 to vector<8x128xf32>
      %c0_214 = arith.constant 0 : index
      %c0_215 = arith.constant 0 : index
      %397 = vector.load %arg10[%c0_214, %c0_215] : memref<8x128xf32, #tpu.memory_space<vmem>>, vector<8x128xf32>
      tpu.vector_store %arg10[%c0_214, %c0_215], %396 {strides = array<i32>} : memref<8x128xf32, #tpu.memory_space<vmem>>, vector<8x128xf32>,
      %cst_216 = arith.constant 0.000000e+00 : f32
      %398 = vector.broadcast %cst_216 : f32 to vector<8x128xf32>
      %c0_217 = arith.constant 0 : index
      %c0_218 = arith.constant 0 : index
      %399 = vector.load %arg11[%c0_217, %c0_218] : memref<8x128xf32, #tpu.memory_space<vmem>>, vector<8x128xf32>
      tpu.vector_store %arg11[%c0_217, %c0_218], %398 {strides = array<i32>} : memref<8x128xf32, #tpu.memory_space<vmem>>, vector<8x128xf32>,
      %cst_219 = arith.constant 0.000000e+00 : f32
      %400 = vector.broadcast %cst_219 : f32 to vector<8x128xf32>
      %c0_220 = arith.constant 0 : index
      %c0_221 = arith.constant 0 : index
      %401 = vector.load %arg12[%c0_220, %c0_221] : memref<8x128xf32, #tpu.memory_space<vmem>>, vector<8x128xf32>
      tpu.vector_store %arg12[%c0_220, %c0_221], %400 {strides = array<i32>} : memref<8x128xf32, #tpu.memory_space<vmem>>, vector<8x128xf32>,
    } else {
    }
    %c0 = arith.constant 0 : index
    %c0_1 = arith.constant 0 : index
    %3 = vector.load %arg2[%c0, %c0_1] : memref<128x512xf32, #tpu.memory_space<vmem>>, vector<128x512xf32>
    %c0_2 = arith.constant 0 : index
    %c0_3 = arith.constant 0 : index
    %4 = vector.load %arg3[%c0_2, %c0_3] : memref<128x512xf32, #tpu.memory_space<vmem>>, vector<128x512xf32>
    %c0_4 = arith.constant 0 : index
    %c0_5 = arith.constant 0 : index
    %5 = vector.load %arg4[%c0_4, %c0_5] : memref<128x512xf32, #tpu.memory_space<vmem>>, vector<128x512xf32>
    %c0_6 = arith.constant 0 : index
    %c0_7 = arith.constant 0 : index
    %6 = vector.load %arg5[%c0_6, %c0_7] : memref<1x512xf32, #tpu.memory_space<vmem>>, vector<1x512xf32>
    %7 = vector.shape_cast %6 : vector<1x512xf32> to vector<1x512xf32>
    %8 = vector.broadcast %7 : vector<1x512xf32> to vector<8x512xf32>
    %9 = tpu.iota {dimensions = array<i32: 1>} : vector<8x512xi32>
    %c256_i32 = arith.constant 256 : i32
    %10 = vector.broadcast %c256_i32 : i32 to vector<8x512xi32>
    %11 = arith.cmpi sge, %9, %10 : vector<8x512xi32>
    %c384_i32 = arith.constant 384 : i32
    %12 = vector.broadcast %c384_i32 : i32 to vector<8x512xi32>
    %13 = arith.cmpi slt, %9, %12 : vector<8x512xi32>
    %14 = arith.andi %11, %13 : vector<8x512xi1>
    %c0_i32_8 = arith.constant 0 : i32
    %15 = arith.index_cast %c0_i32_8 : i32 to index
    %c0_9 = arith.constant 0 : index
    %c0_10 = arith.constant 0 : index
    %16 = vector.load %arg1[%15, %c0_9, %c0_10] : memref<8x8x512xf32, #tpu.memory_space<vmem>>, vector<1x8x512xf32>
    %17 = vector.shape_cast %16 : vector<1x8x512xf32> to vector<8x512xf32>
    %c0_11 = arith.constant 0 : index
    %c0_12 = arith.constant 0 : index
    %18 = vector.load %arg9[%c0_11, %c0_12] : memref<8x128xf32, #tpu.memory_space<vmem>>, vector<8x128xf32>
    %cst = arith.constant dense<0.000000e+00> : vector<8x512xf32>
    %19 = tpu.matmul %18, %3, %cst {dimension_numbers = #tpu.dot_dimension_numbers<[1], [0], [0], [1], [0, 0, 1, 1], [], []>} : vector<8x128xf32>, vector<128x512xf32>, vector<8x512xf32> -> vector<8x512xf32>
    %20 = arith.addf %17, %19 : vector<8x512xf32>
    %21 = math.tanh %20 : vector<8x512xf32>
    %cst_13 = arith.constant 5.000000e-01 : f32
    %22 = vector.broadcast %cst_13 : f32 to vector<8x512xf32>
    %23 = arith.mulf %22, %21 : vector<8x512xf32>
    %cst_14 = arith.constant 5.000000e-01 : f32
    %24 = vector.broadcast %cst_14 : f32 to vector<8x512xf32>
    %25 = arith.addf %23, %24 : vector<8x512xf32>
    %26 = arith.select %14, %21, %25 : vector<8x512xi1>, vector<8x512xf32>
    %27 = vector.extract_strided_slice %26 {offsets = [0, 0], sizes = [8, 128], strides = [1, 1]} : vector<8x512xf32> to vector<8x128xf32>
    %28 = vector.extract_strided_slice %26 {offsets = [0, 128], sizes = [8, 128], strides = [1, 1]} : vector<8x512xf32> to vector<8x128xf32>
    %29 = vector.extract_strided_slice %26 {offsets = [0, 256], sizes = [8, 128], strides = [1, 1]} : vector<8x512xf32> to vector<8x128xf32>
    %30 = vector.extract_strided_slice %26 {offsets = [0, 384], sizes = [8, 128], strides = [1, 1]} : vector<8x512xf32> to vector<8x128xf32>
    %c0_15 = arith.constant 0 : index
    %c0_16 = arith.constant 0 : index
    %31 = vector.load %arg10[%c0_15, %c0_16] : memref<8x128xf32, #tpu.memory_space<vmem>>, vector<8x128xf32>
    %32 = arith.mulf %28, %31 : vector<8x128xf32>
    %33 = arith.mulf %27, %29 : vector<8x128xf32>
    %34 = arith.addf %32, %33 : vector<8x128xf32>
    %35 = math.tanh %34 : vector<8x128xf32>
    %36 = arith.mulf %30, %35 : vector<8x128xf32>
    %c0_17 = arith.constant 0 : index
    %c0_18 = arith.constant 0 : index
    %37 = vector.load %arg10[%c0_17, %c0_18] : memref<8x128xf32, #tpu.memory_space<vmem>>, vector<8x128xf32>
    tpu.vector_store %arg10[%c0_17, %c0_18], %34 {strides = array<i32>} : memref<8x128xf32, #tpu.memory_space<vmem>>, vector<8x128xf32>,
    %c0_19 = arith.constant 0 : index
    %c0_20 = arith.constant 0 : index
    %38 = vector.load %arg9[%c0_19, %c0_20] : memref<8x128xf32, #tpu.memory_space<vmem>>, vector<8x128xf32>
    tpu.vector_store %arg9[%c0_19, %c0_20], %36 {strides = array<i32>} : memref<8x128xf32, #tpu.memory_space<vmem>>, vector<8x128xf32>,
    %cst_21 = arith.constant dense<0.000000e+00> : vector<8x512xf32>
    %39 = tpu.matmul %36, %4, %cst_21 {dimension_numbers = #tpu.dot_dimension_numbers<[1], [0], [0], [1], [0, 0, 1, 1], [], []>} : vector<8x128xf32>, vector<128x512xf32>, vector<8x512xf32> -> vector<8x512xf32>
    %c0_22 = arith.constant 0 : index
    %c0_23 = arith.constant 0 : index
    %40 = vector.load %arg11[%c0_22, %c0_23] : memref<8x128xf32, #tpu.memory_space<vmem>>, vector<8x128xf32>
    %cst_24 = arith.constant dense<0.000000e+00> : vector<8x512xf32>
    %41 = tpu.matmul %40, %5, %cst_24 {dimension_numbers = #tpu.dot_dimension_numbers<[1], [0], [0], [1], [0, 0, 1, 1], [], []>} : vector<8x128xf32>, vector<128x512xf32>, vector<8x512xf32> -> vector<8x512xf32>
    %42 = arith.addf %39, %41 : vector<8x512xf32>
    %43 = arith.addf %42, %8 : vector<8x512xf32>
    %44 = math.tanh %43 : vector<8x512xf32>
    %cst_25 = arith.constant 5.000000e-01 : f32
    %45 = vector.broadcast %cst_25 : f32 to vector<8x512xf32>
    %46 = arith.mulf %45, %44 : vector<8x512xf32>
    %cst_26 = arith.constant 5.000000e-01 : f32
    %47 = vector.broadcast %cst_26 : f32 to vector<8x512xf32>
    %48 = arith.addf %46, %47 : vector<8x512xf32>
    %49 = arith.select %14, %44, %48 : vector<8x512xi1>, vector<8x512xf32>
    %50 = vector.extract_strided_slice %49 {offsets = [0, 0], sizes = [8, 128], strides = [1, 1]} : vector<8x512xf32> to vector<8x128xf32>
    %51 = vector.extract_strided_slice %49 {offsets = [0, 128], sizes = [8, 128], strides = [1, 1]} : vector<8x512xf32> to vector<8x128xf32>
    %52 = vector.extract_strided_slice %49 {offsets = [0, 256], sizes = [8, 128], strides = [1, 1]} : vector<8x512xf32> to vector<8x128xf32>
    %53 = vector.extract_strided_slice %49 {offsets = [0, 384], sizes = [8, 128], strides = [1, 1]} : vector<8x512xf32> to vector<8x128xf32>
    %c0_27 = arith.constant 0 : index
    %c0_28 = arith.constant 0 : index
    %54 = vector.load %arg12[%c0_27, %c0_28] : memref<8x128xf32, #tpu.memory_space<vmem>>, vector<8x128xf32>
    %55 = arith.mulf %51, %54 : vector<8x128xf32>
    %56 = arith.mulf %50, %52 : vector<8x128xf32>
    %57 = arith.addf %55, %56 : vector<8x128xf32>
    %58 = math.tanh %57 : vector<8x128xf32>
    %59 = arith.mulf %53, %58 : vector<8x128xf32>
    %c0_29 = arith.constant 0 : index
    %c0_30 = arith.constant 0 : index
    %60 = vector.load %arg12[%c0_29, %c0_30] : memref<8x128xf32, #tpu.memory_space<vmem>>, vector<8x128xf32>
    tpu.vector_store %arg12[%c0_29, %c0_30], %57 {strides = array<i32>} : memref<8x128xf32, #tpu.memory_space<vmem>>, vector<8x128xf32>,
    %c0_31 = arith.constant 0 : index
    %c0_32 = arith.constant 0 : index
    %61 = vector.load %arg11[%c0_31, %c0_32] : memref<8x128xf32, #tpu.memory_space<vmem>>, vector<8x128xf32>
    tpu.vector_store %arg11[%c0_31, %c0_32], %59 {strides = array<i32>} : memref<8x128xf32, #tpu.memory_space<vmem>>, vector<8x128xf32>,
    %c1_i32 = arith.constant 1 : i32
    %62 = arith.index_cast %c1_i32 : i32 to index
    %c0_33 = arith.constant 0 : index
    %c0_34 = arith.constant 0 : index
    %63 = vector.load %arg1[%62, %c0_33, %c0_34] : memref<8x8x512xf32, #tpu.memory_space<vmem>>, vector<1x8x512xf32>
    %64 = vector.shape_cast %63 : vector<1x8x512xf32> to vector<8x512xf32>
    %c0_35 = arith.constant 0 : index
    %c0_36 = arith.constant 0 : index
    %65 = vector.load %arg9[%c0_35, %c0_36] : memref<8x128xf32, #tpu.memory_space<vmem>>, vector<8x128xf32>
    %cst_37 = arith.constant dense<0.000000e+00> : vector<8x512xf32>
    %66 = tpu.matmul %65, %3, %cst_37 {dimension_numbers = #tpu.dot_dimension_numbers<[1], [0], [0], [1], [0, 0, 1, 1], [], []>} : vector<8x128xf32>, vector<128x512xf32>, vector<8x512xf32> -> vector<8x512xf32>
    %67 = arith.addf %64, %66 : vector<8x512xf32>
    %68 = math.tanh %67 : vector<8x512xf32>
    %cst_38 = arith.constant 5.000000e-01 : f32
    %69 = vector.broadcast %cst_38 : f32 to vector<8x512xf32>
    %70 = arith.mulf %69, %68 : vector<8x512xf32>
    %cst_39 = arith.constant 5.000000e-01 : f32
    %71 = vector.broadcast %cst_39 : f32 to vector<8x512xf32>
    %72 = arith.addf %70, %71 : vector<8x512xf32>
    %73 = arith.select %14, %68, %72 : vector<8x512xi1>, vector<8x512xf32>
    %74 = vector.extract_strided_slice %73 {offsets = [0, 0], sizes = [8, 128], strides = [1, 1]} : vector<8x512xf32> to vector<8x128xf32>
    %75 = vector.extract_strided_slice %73 {offsets = [0, 128], sizes = [8, 128], strides = [1, 1]} : vector<8x512xf32> to vector<8x128xf32>
    %76 = vector.extract_strided_slice %73 {offsets = [0, 256], sizes = [8, 128], strides = [1, 1]} : vector<8x512xf32> to vector<8x128xf32>
    %77 = vector.extract_strided_slice %73 {offsets = [0, 384], sizes = [8, 128], strides = [1, 1]} : vector<8x512xf32> to vector<8x128xf32>
    %c0_40 = arith.constant 0 : index
    %c0_41 = arith.constant 0 : index
    %78 = vector.load %arg10[%c0_40, %c0_41] : memref<8x128xf32, #tpu.memory_space<vmem>>, vector<8x128xf32>
    %79 = arith.mulf %75, %78 : vector<8x128xf32>
    %80 = arith.mulf %74, %76 : vector<8x128xf32>
    %81 = arith.addf %79, %80 : vector<8x128xf32>
    %82 = math.tanh %81 : vector<8x128xf32>
    %83 = arith.mulf %77, %82 : vector<8x128xf32>
    %c0_42 = arith.constant 0 : index
    %c0_43 = arith.constant 0 : index
    %84 = vector.load %arg10[%c0_42, %c0_43] : memref<8x128xf32, #tpu.memory_space<vmem>>, vector<8x128xf32>
    tpu.vector_store %arg10[%c0_42, %c0_43], %81 {strides = array<i32>} : memref<8x128xf32, #tpu.memory_space<vmem>>, vector<8x128xf32>,
    %c0_44 = arith.constant 0 : index
    %c0_45 = arith.constant 0 : index
    %85 = vector.load %arg9[%c0_44, %c0_45] : memref<8x128xf32, #tpu.memory_space<vmem>>, vector<8x128xf32>
    tpu.vector_store %arg9[%c0_44, %c0_45], %83 {strides = array<i32>} : memref<8x128xf32, #tpu.memory_space<vmem>>, vector<8x128xf32>,
    %cst_46 = arith.constant dense<0.000000e+00> : vector<8x512xf32>
    %86 = tpu.matmul %83, %4, %cst_46 {dimension_numbers = #tpu.dot_dimension_numbers<[1], [0], [0], [1], [0, 0, 1, 1], [], []>} : vector<8x128xf32>, vector<128x512xf32>, vector<8x512xf32> -> vector<8x512xf32>
    %c0_47 = arith.constant 0 : index
    %c0_48 = arith.constant 0 : index
    %87 = vector.load %arg11[%c0_47, %c0_48] : memref<8x128xf32, #tpu.memory_space<vmem>>, vector<8x128xf32>
    %cst_49 = arith.constant dense<0.000000e+00> : vector<8x512xf32>
    %88 = tpu.matmul %87, %5, %cst_49 {dimension_numbers = #tpu.dot_dimension_numbers<[1], [0], [0], [1], [0, 0, 1, 1], [], []>} : vector<8x128xf32>, vector<128x512xf32>, vector<8x512xf32> -> vector<8x512xf32>
    %89 = arith.addf %86, %88 : vector<8x512xf32>
    %90 = arith.addf %89, %8 : vector<8x512xf32>
    %91 = math.tanh %90 : vector<8x512xf32>
    %cst_50 = arith.constant 5.000000e-01 : f32
    %92 = vector.broadcast %cst_50 : f32 to vector<8x512xf32>
    %93 = arith.mulf %92, %91 : vector<8x512xf32>
    %cst_51 = arith.constant 5.000000e-01 : f32
    %94 = vector.broadcast %cst_51 : f32 to vector<8x512xf32>
    %95 = arith.addf %93, %94 : vector<8x512xf32>
    %96 = arith.select %14, %91, %95 : vector<8x512xi1>, vector<8x512xf32>
    %97 = vector.extract_strided_slice %96 {offsets = [0, 0], sizes = [8, 128], strides = [1, 1]} : vector<8x512xf32> to vector<8x128xf32>
    %98 = vector.extract_strided_slice %96 {offsets = [0, 128], sizes = [8, 128], strides = [1, 1]} : vector<8x512xf32> to vector<8x128xf32>
    %99 = vector.extract_strided_slice %96 {offsets = [0, 256], sizes = [8, 128], strides = [1, 1]} : vector<8x512xf32> to vector<8x128xf32>
    %100 = vector.extract_strided_slice %96 {offsets = [0, 384], sizes = [8, 128], strides = [1, 1]} : vector<8x512xf32> to vector<8x128xf32>
    %c0_52 = arith.constant 0 : index
    %c0_53 = arith.constant 0 : index
    %101 = vector.load %arg12[%c0_52, %c0_53] : memref<8x128xf32, #tpu.memory_space<vmem>>, vector<8x128xf32>
    %102 = arith.mulf %98, %101 : vector<8x128xf32>
    %103 = arith.mulf %97, %99 : vector<8x128xf32>
    %104 = arith.addf %102, %103 : vector<8x128xf32>
    %105 = math.tanh %104 : vector<8x128xf32>
    %106 = arith.mulf %100, %105 : vector<8x128xf32>
    %c0_54 = arith.constant 0 : index
    %c0_55 = arith.constant 0 : index
    %107 = vector.load %arg12[%c0_54, %c0_55] : memref<8x128xf32, #tpu.memory_space<vmem>>, vector<8x128xf32>
    tpu.vector_store %arg12[%c0_54, %c0_55], %104 {strides = array<i32>} : memref<8x128xf32, #tpu.memory_space<vmem>>, vector<8x128xf32>,
    %c0_56 = arith.constant 0 : index
    %c0_57 = arith.constant 0 : index
    %108 = vector.load %arg11[%c0_56, %c0_57] : memref<8x128xf32, #tpu.memory_space<vmem>>, vector<8x128xf32>
    tpu.vector_store %arg11[%c0_56, %c0_57], %106 {strides = array<i32>} : memref<8x128xf32, #tpu.memory_space<vmem>>, vector<8x128xf32>,
    %c2_i32 = arith.constant 2 : i32
    %109 = arith.index_cast %c2_i32 : i32 to index
    %c0_58 = arith.constant 0 : index
    %c0_59 = arith.constant 0 : index
    %110 = vector.load %arg1[%109, %c0_58, %c0_59] : memref<8x8x512xf32, #tpu.memory_space<vmem>>, vector<1x8x512xf32>
    %111 = vector.shape_cast %110 : vector<1x8x512xf32> to vector<8x512xf32>
    %c0_60 = arith.constant 0 : index
    %c0_61 = arith.constant 0 : index
    %112 = vector.load %arg9[%c0_60, %c0_61] : memref<8x128xf32, #tpu.memory_space<vmem>>, vector<8x128xf32>
    %cst_62 = arith.constant dense<0.000000e+00> : vector<8x512xf32>
    %113 = tpu.matmul %112, %3, %cst_62 {dimension_numbers = #tpu.dot_dimension_numbers<[1], [0], [0], [1], [0, 0, 1, 1], [], []>} : vector<8x128xf32>, vector<128x512xf32>, vector<8x512xf32> -> vector<8x512xf32>
    %114 = arith.addf %111, %113 : vector<8x512xf32>
    %115 = math.tanh %114 : vector<8x512xf32>
    %cst_63 = arith.constant 5.000000e-01 : f32
    %116 = vector.broadcast %cst_63 : f32 to vector<8x512xf32>
    %117 = arith.mulf %116, %115 : vector<8x512xf32>
    %cst_64 = arith.constant 5.000000e-01 : f32
    %118 = vector.broadcast %cst_64 : f32 to vector<8x512xf32>
    %119 = arith.addf %117, %118 : vector<8x512xf32>
    %120 = arith.select %14, %115, %119 : vector<8x512xi1>, vector<8x512xf32>
    %121 = vector.extract_strided_slice %120 {offsets = [0, 0], sizes = [8, 128], strides = [1, 1]} : vector<8x512xf32> to vector<8x128xf32>
    %122 = vector.extract_strided_slice %120 {offsets = [0, 128], sizes = [8, 128], strides = [1, 1]} : vector<8x512xf32> to vector<8x128xf32>
    %123 = vector.extract_strided_slice %120 {offsets = [0, 256], sizes = [8, 128], strides = [1, 1]} : vector<8x512xf32> to vector<8x128xf32>
    %124 = vector.extract_strided_slice %120 {offsets = [0, 384], sizes = [8, 128], strides = [1, 1]} : vector<8x512xf32> to vector<8x128xf32>
    %c0_65 = arith.constant 0 : index
    %c0_66 = arith.constant 0 : index
    %125 = vector.load %arg10[%c0_65, %c0_66] : memref<8x128xf32, #tpu.memory_space<vmem>>, vector<8x128xf32>
    %126 = arith.mulf %122, %125 : vector<8x128xf32>
    %127 = arith.mulf %121, %123 : vector<8x128xf32>
    %128 = arith.addf %126, %127 : vector<8x128xf32>
    %129 = math.tanh %128 : vector<8x128xf32>
    %130 = arith.mulf %124, %129 : vector<8x128xf32>
    %c0_67 = arith.constant 0 : index
    %c0_68 = arith.constant 0 : index
    %131 = vector.load %arg10[%c0_67, %c0_68] : memref<8x128xf32, #tpu.memory_space<vmem>>, vector<8x128xf32>
    tpu.vector_store %arg10[%c0_67, %c0_68], %128 {strides = array<i32>} : memref<8x128xf32, #tpu.memory_space<vmem>>, vector<8x128xf32>,
    %c0_69 = arith.constant 0 : index
    %c0_70 = arith.constant 0 : index
    %132 = vector.load %arg9[%c0_69, %c0_70] : memref<8x128xf32, #tpu.memory_space<vmem>>, vector<8x128xf32>
    tpu.vector_store %arg9[%c0_69, %c0_70], %130 {strides = array<i32>} : memref<8x128xf32, #tpu.memory_space<vmem>>, vector<8x128xf32>,
    %cst_71 = arith.constant dense<0.000000e+00> : vector<8x512xf32>
    %133 = tpu.matmul %130, %4, %cst_71 {dimension_numbers = #tpu.dot_dimension_numbers<[1], [0], [0], [1], [0, 0, 1, 1], [], []>} : vector<8x128xf32>, vector<128x512xf32>, vector<8x512xf32> -> vector<8x512xf32>
    %c0_72 = arith.constant 0 : index
    %c0_73 = arith.constant 0 : index
    %134 = vector.load %arg11[%c0_72, %c0_73] : memref<8x128xf32, #tpu.memory_space<vmem>>, vector<8x128xf32>
    %cst_74 = arith.constant dense<0.000000e+00> : vector<8x512xf32>
    %135 = tpu.matmul %134, %5, %cst_74 {dimension_numbers = #tpu.dot_dimension_numbers<[1], [0], [0], [1], [0, 0, 1, 1], [], []>} : vector<8x128xf32>, vector<128x512xf32>, vector<8x512xf32> -> vector<8x512xf32>
    %136 = arith.addf %133, %135 : vector<8x512xf32>
    %137 = arith.addf %136, %8 : vector<8x512xf32>
    %138 = math.tanh %137 : vector<8x512xf32>
    %cst_75 = arith.constant 5.000000e-01 : f32
    %139 = vector.broadcast %cst_75 : f32 to vector<8x512xf32>
    %140 = arith.mulf %139, %138 : vector<8x512xf32>
    %cst_76 = arith.constant 5.000000e-01 : f32
    %141 = vector.broadcast %cst_76 : f32 to vector<8x512xf32>
    %142 = arith.addf %140, %141 : vector<8x512xf32>
    %143 = arith.select %14, %138, %142 : vector<8x512xi1>, vector<8x512xf32>
    %144 = vector.extract_strided_slice %143 {offsets = [0, 0], sizes = [8, 128], strides = [1, 1]} : vector<8x512xf32> to vector<8x128xf32>
    %145 = vector.extract_strided_slice %143 {offsets = [0, 128], sizes = [8, 128], strides = [1, 1]} : vector<8x512xf32> to vector<8x128xf32>
    %146 = vector.extract_strided_slice %143 {offsets = [0, 256], sizes = [8, 128], strides = [1, 1]} : vector<8x512xf32> to vector<8x128xf32>
    %147 = vector.extract_strided_slice %143 {offsets = [0, 384], sizes = [8, 128], strides = [1, 1]} : vector<8x512xf32> to vector<8x128xf32>
    %c0_77 = arith.constant 0 : index
    %c0_78 = arith.constant 0 : index
    %148 = vector.load %arg12[%c0_77, %c0_78] : memref<8x128xf32, #tpu.memory_space<vmem>>, vector<8x128xf32>
    %149 = arith.mulf %145, %148 : vector<8x128xf32>
    %150 = arith.mulf %144, %146 : vector<8x128xf32>
    %151 = arith.addf %149, %150 : vector<8x128xf32>
    %152 = math.tanh %151 : vector<8x128xf32>
    %153 = arith.mulf %147, %152 : vector<8x128xf32>
    %c0_79 = arith.constant 0 : index
    %c0_80 = arith.constant 0 : index
    %154 = vector.load %arg12[%c0_79, %c0_80] : memref<8x128xf32, #tpu.memory_space<vmem>>, vector<8x128xf32>
    tpu.vector_store %arg12[%c0_79, %c0_80], %151 {strides = array<i32>} : memref<8x128xf32, #tpu.memory_space<vmem>>, vector<8x128xf32>,
    %c0_81 = arith.constant 0 : index
    %c0_82 = arith.constant 0 : index
    %155 = vector.load %arg11[%c0_81, %c0_82] : memref<8x128xf32, #tpu.memory_space<vmem>>, vector<8x128xf32>
    tpu.vector_store %arg11[%c0_81, %c0_82], %153 {strides = array<i32>} : memref<8x128xf32, #tpu.memory_space<vmem>>, vector<8x128xf32>,
    %c3_i32 = arith.constant 3 : i32
    %156 = arith.index_cast %c3_i32 : i32 to index
    %c0_83 = arith.constant 0 : index
    %c0_84 = arith.constant 0 : index
    %157 = vector.load %arg1[%156, %c0_83, %c0_84] : memref<8x8x512xf32, #tpu.memory_space<vmem>>, vector<1x8x512xf32>
    %158 = vector.shape_cast %157 : vector<1x8x512xf32> to vector<8x512xf32>
    %c0_85 = arith.constant 0 : index
    %c0_86 = arith.constant 0 : index
    %159 = vector.load %arg9[%c0_85, %c0_86] : memref<8x128xf32, #tpu.memory_space<vmem>>, vector<8x128xf32>
    %cst_87 = arith.constant dense<0.000000e+00> : vector<8x512xf32>
    %160 = tpu.matmul %159, %3, %cst_87 {dimension_numbers = #tpu.dot_dimension_numbers<[1], [0], [0], [1], [0, 0, 1, 1], [], []>} : vector<8x128xf32>, vector<128x512xf32>, vector<8x512xf32> -> vector<8x512xf32>
    %161 = arith.addf %158, %160 : vector<8x512xf32>
    %162 = math.tanh %161 : vector<8x512xf32>
    %cst_88 = arith.constant 5.000000e-01 : f32
    %163 = vector.broadcast %cst_88 : f32 to vector<8x512xf32>
    %164 = arith.mulf %163, %162 : vector<8x512xf32>
    %cst_89 = arith.constant 5.000000e-01 : f32
    %165 = vector.broadcast %cst_89 : f32 to vector<8x512xf32>
    %166 = arith.addf %164, %165 : vector<8x512xf32>
    %167 = arith.select %14, %162, %166 : vector<8x512xi1>, vector<8x512xf32>
    %168 = vector.extract_strided_slice %167 {offsets = [0, 0], sizes = [8, 128], strides = [1, 1]} : vector<8x512xf32> to vector<8x128xf32>
    %169 = vector.extract_strided_slice %167 {offsets = [0, 128], sizes = [8, 128], strides = [1, 1]} : vector<8x512xf32> to vector<8x128xf32>
    %170 = vector.extract_strided_slice %167 {offsets = [0, 256], sizes = [8, 128], strides = [1, 1]} : vector<8x512xf32> to vector<8x128xf32>
    %171 = vector.extract_strided_slice %167 {offsets = [0, 384], sizes = [8, 128], strides = [1, 1]} : vector<8x512xf32> to vector<8x128xf32>
    %c0_90 = arith.constant 0 : index
    %c0_91 = arith.constant 0 : index
    %172 = vector.load %arg10[%c0_90, %c0_91] : memref<8x128xf32, #tpu.memory_space<vmem>>, vector<8x128xf32>
    %173 = arith.mulf %169, %172 : vector<8x128xf32>
    %174 = arith.mulf %168, %170 : vector<8x128xf32>
    %175 = arith.addf %173, %174 : vector<8x128xf32>
    %176 = math.tanh %175 : vector<8x128xf32>
    %177 = arith.mulf %171, %176 : vector<8x128xf32>
    %c0_92 = arith.constant 0 : index
    %c0_93 = arith.constant 0 : index
    %178 = vector.load %arg10[%c0_92, %c0_93] : memref<8x128xf32, #tpu.memory_space<vmem>>, vector<8x128xf32>
    tpu.vector_store %arg10[%c0_92, %c0_93], %175 {strides = array<i32>} : memref<8x128xf32, #tpu.memory_space<vmem>>, vector<8x128xf32>,
    %c0_94 = arith.constant 0 : index
    %c0_95 = arith.constant 0 : index
    %179 = vector.load %arg9[%c0_94, %c0_95] : memref<8x128xf32, #tpu.memory_space<vmem>>, vector<8x128xf32>
    tpu.vector_store %arg9[%c0_94, %c0_95], %177 {strides = array<i32>} : memref<8x128xf32, #tpu.memory_space<vmem>>, vector<8x128xf32>,
    %cst_96 = arith.constant dense<0.000000e+00> : vector<8x512xf32>
    %180 = tpu.matmul %177, %4, %cst_96 {dimension_numbers = #tpu.dot_dimension_numbers<[1], [0], [0], [1], [0, 0, 1, 1], [], []>} : vector<8x128xf32>, vector<128x512xf32>, vector<8x512xf32> -> vector<8x512xf32>
    %c0_97 = arith.constant 0 : index
    %c0_98 = arith.constant 0 : index
    %181 = vector.load %arg11[%c0_97, %c0_98] : memref<8x128xf32, #tpu.memory_space<vmem>>, vector<8x128xf32>
    %cst_99 = arith.constant dense<0.000000e+00> : vector<8x512xf32>
    %182 = tpu.matmul %181, %5, %cst_99 {dimension_numbers = #tpu.dot_dimension_numbers<[1], [0], [0], [1], [0, 0, 1, 1], [], []>} : vector<8x128xf32>, vector<128x512xf32>, vector<8x512xf32> -> vector<8x512xf32>
    %183 = arith.addf %180, %182 : vector<8x512xf32>
    %184 = arith.addf %183, %8 : vector<8x512xf32>
    %185 = math.tanh %184 : vector<8x512xf32>
    %cst_100 = arith.constant 5.000000e-01 : f32
    %186 = vector.broadcast %cst_100 : f32 to vector<8x512xf32>
    %187 = arith.mulf %186, %185 : vector<8x512xf32>
    %cst_101 = arith.constant 5.000000e-01 : f32
    %188 = vector.broadcast %cst_101 : f32 to vector<8x512xf32>
    %189 = arith.addf %187, %188 : vector<8x512xf32>
    %190 = arith.select %14, %185, %189 : vector<8x512xi1>, vector<8x512xf32>
    %191 = vector.extract_strided_slice %190 {offsets = [0, 0], sizes = [8, 128], strides = [1, 1]} : vector<8x512xf32> to vector<8x128xf32>
    %192 = vector.extract_strided_slice %190 {offsets = [0, 128], sizes = [8, 128], strides = [1, 1]} : vector<8x512xf32> to vector<8x128xf32>
    %193 = vector.extract_strided_slice %190 {offsets = [0, 256], sizes = [8, 128], strides = [1, 1]} : vector<8x512xf32> to vector<8x128xf32>
    %194 = vector.extract_strided_slice %190 {offsets = [0, 384], sizes = [8, 128], strides = [1, 1]} : vector<8x512xf32> to vector<8x128xf32>
    %c0_102 = arith.constant 0 : index
    %c0_103 = arith.constant 0 : index
    %195 = vector.load %arg12[%c0_102, %c0_103] : memref<8x128xf32, #tpu.memory_space<vmem>>, vector<8x128xf32>
    %196 = arith.mulf %192, %195 : vector<8x128xf32>
    %197 = arith.mulf %191, %193 : vector<8x128xf32>
    %198 = arith.addf %196, %197 : vector<8x128xf32>
    %199 = math.tanh %198 : vector<8x128xf32>
    %200 = arith.mulf %194, %199 : vector<8x128xf32>
    %c0_104 = arith.constant 0 : index
    %c0_105 = arith.constant 0 : index
    %201 = vector.load %arg12[%c0_104, %c0_105] : memref<8x128xf32, #tpu.memory_space<vmem>>, vector<8x128xf32>
    tpu.vector_store %arg12[%c0_104, %c0_105], %198 {strides = array<i32>} : memref<8x128xf32, #tpu.memory_space<vmem>>, vector<8x128xf32>,
    %c0_106 = arith.constant 0 : index
    %c0_107 = arith.constant 0 : index
    %202 = vector.load %arg11[%c0_106, %c0_107] : memref<8x128xf32, #tpu.memory_space<vmem>>, vector<8x128xf32>
    tpu.vector_store %arg11[%c0_106, %c0_107], %200 {strides = array<i32>} : memref<8x128xf32, #tpu.memory_space<vmem>>, vector<8x128xf32>,
    %c4_i32 = arith.constant 4 : i32
    %203 = arith.index_cast %c4_i32 : i32 to index
    %c0_108 = arith.constant 0 : index
    %c0_109 = arith.constant 0 : index
    %204 = vector.load %arg1[%203, %c0_108, %c0_109] : memref<8x8x512xf32, #tpu.memory_space<vmem>>, vector<1x8x512xf32>
    %205 = vector.shape_cast %204 : vector<1x8x512xf32> to vector<8x512xf32>
    %c0_110 = arith.constant 0 : index
    %c0_111 = arith.constant 0 : index
    %206 = vector.load %arg9[%c0_110, %c0_111] : memref<8x128xf32, #tpu.memory_space<vmem>>, vector<8x128xf32>
    %cst_112 = arith.constant dense<0.000000e+00> : vector<8x512xf32>
    %207 = tpu.matmul %206, %3, %cst_112 {dimension_numbers = #tpu.dot_dimension_numbers<[1], [0], [0], [1], [0, 0, 1, 1], [], []>} : vector<8x128xf32>, vector<128x512xf32>, vector<8x512xf32> -> vector<8x512xf32>
    %208 = arith.addf %205, %207 : vector<8x512xf32>
    %209 = math.tanh %208 : vector<8x512xf32>
    %cst_113 = arith.constant 5.000000e-01 : f32
    %210 = vector.broadcast %cst_113 : f32 to vector<8x512xf32>
    %211 = arith.mulf %210, %209 : vector<8x512xf32>
    %cst_114 = arith.constant 5.000000e-01 : f32
    %212 = vector.broadcast %cst_114 : f32 to vector<8x512xf32>
    %213 = arith.addf %211, %212 : vector<8x512xf32>
    %214 = arith.select %14, %209, %213 : vector<8x512xi1>, vector<8x512xf32>
    %215 = vector.extract_strided_slice %214 {offsets = [0, 0], sizes = [8, 128], strides = [1, 1]} : vector<8x512xf32> to vector<8x128xf32>
    %216 = vector.extract_strided_slice %214 {offsets = [0, 128], sizes = [8, 128], strides = [1, 1]} : vector<8x512xf32> to vector<8x128xf32>
    %217 = vector.extract_strided_slice %214 {offsets = [0, 256], sizes = [8, 128], strides = [1, 1]} : vector<8x512xf32> to vector<8x128xf32>
    %218 = vector.extract_strided_slice %214 {offsets = [0, 384], sizes = [8, 128], strides = [1, 1]} : vector<8x512xf32> to vector<8x128xf32>
    %c0_115 = arith.constant 0 : index
    %c0_116 = arith.constant 0 : index
    %219 = vector.load %arg10[%c0_115, %c0_116] : memref<8x128xf32, #tpu.memory_space<vmem>>, vector<8x128xf32>
    %220 = arith.mulf %216, %219 : vector<8x128xf32>
    %221 = arith.mulf %215, %217 : vector<8x128xf32>
    %222 = arith.addf %220, %221 : vector<8x128xf32>
    %223 = math.tanh %222 : vector<8x128xf32>
    %224 = arith.mulf %218, %223 : vector<8x128xf32>
    %c0_117 = arith.constant 0 : index
    %c0_118 = arith.constant 0 : index
    %225 = vector.load %arg10[%c0_117, %c0_118] : memref<8x128xf32, #tpu.memory_space<vmem>>, vector<8x128xf32>
    tpu.vector_store %arg10[%c0_117, %c0_118], %222 {strides = array<i32>} : memref<8x128xf32, #tpu.memory_space<vmem>>, vector<8x128xf32>,
    %c0_119 = arith.constant 0 : index
    %c0_120 = arith.constant 0 : index
    %226 = vector.load %arg9[%c0_119, %c0_120] : memref<8x128xf32, #tpu.memory_space<vmem>>, vector<8x128xf32>
    tpu.vector_store %arg9[%c0_119, %c0_120], %224 {strides = array<i32>} : memref<8x128xf32, #tpu.memory_space<vmem>>, vector<8x128xf32>,
    %cst_121 = arith.constant dense<0.000000e+00> : vector<8x512xf32>
    %227 = tpu.matmul %224, %4, %cst_121 {dimension_numbers = #tpu.dot_dimension_numbers<[1], [0], [0], [1], [0, 0, 1, 1], [], []>} : vector<8x128xf32>, vector<128x512xf32>, vector<8x512xf32> -> vector<8x512xf32>
    %c0_122 = arith.constant 0 : index
    %c0_123 = arith.constant 0 : index
    %228 = vector.load %arg11[%c0_122, %c0_123] : memref<8x128xf32, #tpu.memory_space<vmem>>, vector<8x128xf32>
    %cst_124 = arith.constant dense<0.000000e+00> : vector<8x512xf32>
    %229 = tpu.matmul %228, %5, %cst_124 {dimension_numbers = #tpu.dot_dimension_numbers<[1], [0], [0], [1], [0, 0, 1, 1], [], []>} : vector<8x128xf32>, vector<128x512xf32>, vector<8x512xf32> -> vector<8x512xf32>
    %230 = arith.addf %227, %229 : vector<8x512xf32>
    %231 = arith.addf %230, %8 : vector<8x512xf32>
    %232 = math.tanh %231 : vector<8x512xf32>
    %cst_125 = arith.constant 5.000000e-01 : f32
    %233 = vector.broadcast %cst_125 : f32 to vector<8x512xf32>
    %234 = arith.mulf %233, %232 : vector<8x512xf32>
    %cst_126 = arith.constant 5.000000e-01 : f32
    %235 = vector.broadcast %cst_126 : f32 to vector<8x512xf32>
    %236 = arith.addf %234, %235 : vector<8x512xf32>
    %237 = arith.select %14, %232, %236 : vector<8x512xi1>, vector<8x512xf32>
    %238 = vector.extract_strided_slice %237 {offsets = [0, 0], sizes = [8, 128], strides = [1, 1]} : vector<8x512xf32> to vector<8x128xf32>
    %239 = vector.extract_strided_slice %237 {offsets = [0, 128], sizes = [8, 128], strides = [1, 1]} : vector<8x512xf32> to vector<8x128xf32>
    %240 = vector.extract_strided_slice %237 {offsets = [0, 256], sizes = [8, 128], strides = [1, 1]} : vector<8x512xf32> to vector<8x128xf32>
    %241 = vector.extract_strided_slice %237 {offsets = [0, 384], sizes = [8, 128], strides = [1, 1]} : vector<8x512xf32> to vector<8x128xf32>
    %c0_127 = arith.constant 0 : index
    %c0_128 = arith.constant 0 : index
    %242 = vector.load %arg12[%c0_127, %c0_128] : memref<8x128xf32, #tpu.memory_space<vmem>>, vector<8x128xf32>
    %243 = arith.mulf %239, %242 : vector<8x128xf32>
    %244 = arith.mulf %238, %240 : vector<8x128xf32>
    %245 = arith.addf %243, %244 : vector<8x128xf32>
    %246 = math.tanh %245 : vector<8x128xf32>
    %247 = arith.mulf %241, %246 : vector<8x128xf32>
    %c0_129 = arith.constant 0 : index
    %c0_130 = arith.constant 0 : index
    %248 = vector.load %arg12[%c0_129, %c0_130] : memref<8x128xf32, #tpu.memory_space<vmem>>, vector<8x128xf32>
    tpu.vector_store %arg12[%c0_129, %c0_130], %245 {strides = array<i32>} : memref<8x128xf32, #tpu.memory_space<vmem>>, vector<8x128xf32>,
    %c0_131 = arith.constant 0 : index
    %c0_132 = arith.constant 0 : index
    %249 = vector.load %arg11[%c0_131, %c0_132] : memref<8x128xf32, #tpu.memory_space<vmem>>, vector<8x128xf32>
    tpu.vector_store %arg11[%c0_131, %c0_132], %247 {strides = array<i32>} : memref<8x128xf32, #tpu.memory_space<vmem>>, vector<8x128xf32>,
    %c5_i32 = arith.constant 5 : i32
    %250 = arith.index_cast %c5_i32 : i32 to index
    %c0_133 = arith.constant 0 : index
    %c0_134 = arith.constant 0 : index
    %251 = vector.load %arg1[%250, %c0_133, %c0_134] : memref<8x8x512xf32, #tpu.memory_space<vmem>>, vector<1x8x512xf32>
    %252 = vector.shape_cast %251 : vector<1x8x512xf32> to vector<8x512xf32>
    %c0_135 = arith.constant 0 : index
    %c0_136 = arith.constant 0 : index
    %253 = vector.load %arg9[%c0_135, %c0_136] : memref<8x128xf32, #tpu.memory_space<vmem>>, vector<8x128xf32>
    %cst_137 = arith.constant dense<0.000000e+00> : vector<8x512xf32>
    %254 = tpu.matmul %253, %3, %cst_137 {dimension_numbers = #tpu.dot_dimension_numbers<[1], [0], [0], [1], [0, 0, 1, 1], [], []>} : vector<8x128xf32>, vector<128x512xf32>, vector<8x512xf32> -> vector<8x512xf32>
    %255 = arith.addf %252, %254 : vector<8x512xf32>
    %256 = math.tanh %255 : vector<8x512xf32>
    %cst_138 = arith.constant 5.000000e-01 : f32
    %257 = vector.broadcast %cst_138 : f32 to vector<8x512xf32>
    %258 = arith.mulf %257, %256 : vector<8x512xf32>
    %cst_139 = arith.constant 5.000000e-01 : f32
    %259 = vector.broadcast %cst_139 : f32 to vector<8x512xf32>
    %260 = arith.addf %258, %259 : vector<8x512xf32>
    %261 = arith.select %14, %256, %260 : vector<8x512xi1>, vector<8x512xf32>
    %262 = vector.extract_strided_slice %261 {offsets = [0, 0], sizes = [8, 128], strides = [1, 1]} : vector<8x512xf32> to vector<8x128xf32>
    %263 = vector.extract_strided_slice %261 {offsets = [0, 128], sizes = [8, 128], strides = [1, 1]} : vector<8x512xf32> to vector<8x128xf32>
    %264 = vector.extract_strided_slice %261 {offsets = [0, 256], sizes = [8, 128], strides = [1, 1]} : vector<8x512xf32> to vector<8x128xf32>
    %265 = vector.extract_strided_slice %261 {offsets = [0, 384], sizes = [8, 128], strides = [1, 1]} : vector<8x512xf32> to vector<8x128xf32>
    %c0_140 = arith.constant 0 : index
    %c0_141 = arith.constant 0 : index
    %266 = vector.load %arg10[%c0_140, %c0_141] : memref<8x128xf32, #tpu.memory_space<vmem>>, vector<8x128xf32>
    %267 = arith.mulf %263, %266 : vector<8x128xf32>
    %268 = arith.mulf %262, %264 : vector<8x128xf32>
    %269 = arith.addf %267, %268 : vector<8x128xf32>
    %270 = math.tanh %269 : vector<8x128xf32>
    %271 = arith.mulf %265, %270 : vector<8x128xf32>
    %c0_142 = arith.constant 0 : index
    %c0_143 = arith.constant 0 : index
    %272 = vector.load %arg10[%c0_142, %c0_143] : memref<8x128xf32, #tpu.memory_space<vmem>>, vector<8x128xf32>
    tpu.vector_store %arg10[%c0_142, %c0_143], %269 {strides = array<i32>} : memref<8x128xf32, #tpu.memory_space<vmem>>, vector<8x128xf32>,
    %c0_144 = arith.constant 0 : index
    %c0_145 = arith.constant 0 : index
    %273 = vector.load %arg9[%c0_144, %c0_145] : memref<8x128xf32, #tpu.memory_space<vmem>>, vector<8x128xf32>
    tpu.vector_store %arg9[%c0_144, %c0_145], %271 {strides = array<i32>} : memref<8x128xf32, #tpu.memory_space<vmem>>, vector<8x128xf32>,
    %cst_146 = arith.constant dense<0.000000e+00> : vector<8x512xf32>
    %274 = tpu.matmul %271, %4, %cst_146 {dimension_numbers = #tpu.dot_dimension_numbers<[1], [0], [0], [1], [0, 0, 1, 1], [], []>} : vector<8x128xf32>, vector<128x512xf32>, vector<8x512xf32> -> vector<8x512xf32>
    %c0_147 = arith.constant 0 : index
    %c0_148 = arith.constant 0 : index
    %275 = vector.load %arg11[%c0_147, %c0_148] : memref<8x128xf32, #tpu.memory_space<vmem>>, vector<8x128xf32>
    %cst_149 = arith.constant dense<0.000000e+00> : vector<8x512xf32>
    %276 = tpu.matmul %275, %5, %cst_149 {dimension_numbers = #tpu.dot_dimension_numbers<[1], [0], [0], [1], [0, 0, 1, 1], [], []>} : vector<8x128xf32>, vector<128x512xf32>, vector<8x512xf32> -> vector<8x512xf32>
    %277 = arith.addf %274, %276 : vector<8x512xf32>
    %278 = arith.addf %277, %8 : vector<8x512xf32>
    %279 = math.tanh %278 : vector<8x512xf32>
    %cst_150 = arith.constant 5.000000e-01 : f32
    %280 = vector.broadcast %cst_150 : f32 to vector<8x512xf32>
    %281 = arith.mulf %280, %279 : vector<8x512xf32>
    %cst_151 = arith.constant 5.000000e-01 : f32
    %282 = vector.broadcast %cst_151 : f32 to vector<8x512xf32>
    %283 = arith.addf %281, %282 : vector<8x512xf32>
    %284 = arith.select %14, %279, %283 : vector<8x512xi1>, vector<8x512xf32>
    %285 = vector.extract_strided_slice %284 {offsets = [0, 0], sizes = [8, 128], strides = [1, 1]} : vector<8x512xf32> to vector<8x128xf32>
    %286 = vector.extract_strided_slice %284 {offsets = [0, 128], sizes = [8, 128], strides = [1, 1]} : vector<8x512xf32> to vector<8x128xf32>
    %287 = vector.extract_strided_slice %284 {offsets = [0, 256], sizes = [8, 128], strides = [1, 1]} : vector<8x512xf32> to vector<8x128xf32>
    %288 = vector.extract_strided_slice %284 {offsets = [0, 384], sizes = [8, 128], strides = [1, 1]} : vector<8x512xf32> to vector<8x128xf32>
    %c0_152 = arith.constant 0 : index
    %c0_153 = arith.constant 0 : index
    %289 = vector.load %arg12[%c0_152, %c0_153] : memref<8x128xf32, #tpu.memory_space<vmem>>, vector<8x128xf32>
    %290 = arith.mulf %286, %289 : vector<8x128xf32>
    %291 = arith.mulf %285, %287 : vector<8x128xf32>
    %292 = arith.addf %290, %291 : vector<8x128xf32>
    %293 = math.tanh %292 : vector<8x128xf32>
    %294 = arith.mulf %288, %293 : vector<8x128xf32>
    %c0_154 = arith.constant 0 : index
    %c0_155 = arith.constant 0 : index
    %295 = vector.load %arg12[%c0_154, %c0_155] : memref<8x128xf32, #tpu.memory_space<vmem>>, vector<8x128xf32>
    tpu.vector_store %arg12[%c0_154, %c0_155], %292 {strides = array<i32>} : memref<8x128xf32, #tpu.memory_space<vmem>>, vector<8x128xf32>,
    %c0_156 = arith.constant 0 : index
    %c0_157 = arith.constant 0 : index
    %296 = vector.load %arg11[%c0_156, %c0_157] : memref<8x128xf32, #tpu.memory_space<vmem>>, vector<8x128xf32>
    tpu.vector_store %arg11[%c0_156, %c0_157], %294 {strides = array<i32>} : memref<8x128xf32, #tpu.memory_space<vmem>>, vector<8x128xf32>,
    %c6_i32 = arith.constant 6 : i32
    %297 = arith.index_cast %c6_i32 : i32 to index
    %c0_158 = arith.constant 0 : index
    %c0_159 = arith.constant 0 : index
    %298 = vector.load %arg1[%297, %c0_158, %c0_159] : memref<8x8x512xf32, #tpu.memory_space<vmem>>, vector<1x8x512xf32>
    %299 = vector.shape_cast %298 : vector<1x8x512xf32> to vector<8x512xf32>
    %c0_160 = arith.constant 0 : index
    %c0_161 = arith.constant 0 : index
    %300 = vector.load %arg9[%c0_160, %c0_161] : memref<8x128xf32, #tpu.memory_space<vmem>>, vector<8x128xf32>
    %cst_162 = arith.constant dense<0.000000e+00> : vector<8x512xf32>
    %301 = tpu.matmul %300, %3, %cst_162 {dimension_numbers = #tpu.dot_dimension_numbers<[1], [0], [0], [1], [0, 0, 1, 1], [], []>} : vector<8x128xf32>, vector<128x512xf32>, vector<8x512xf32> -> vector<8x512xf32>
    %302 = arith.addf %299, %301 : vector<8x512xf32>
    %303 = math.tanh %302 : vector<8x512xf32>
    %cst_163 = arith.constant 5.000000e-01 : f32
    %304 = vector.broadcast %cst_163 : f32 to vector<8x512xf32>
    %305 = arith.mulf %304, %303 : vector<8x512xf32>
    %cst_164 = arith.constant 5.000000e-01 : f32
    %306 = vector.broadcast %cst_164 : f32 to vector<8x512xf32>
    %307 = arith.addf %305, %306 : vector<8x512xf32>
    %308 = arith.select %14, %303, %307 : vector<8x512xi1>, vector<8x512xf32>
    %309 = vector.extract_strided_slice %308 {offsets = [0, 0], sizes = [8, 128], strides = [1, 1]} : vector<8x512xf32> to vector<8x128xf32>
    %310 = vector.extract_strided_slice %308 {offsets = [0, 128], sizes = [8, 128], strides = [1, 1]} : vector<8x512xf32> to vector<8x128xf32>
    %311 = vector.extract_strided_slice %308 {offsets = [0, 256], sizes = [8, 128], strides = [1, 1]} : vector<8x512xf32> to vector<8x128xf32>
    %312 = vector.extract_strided_slice %308 {offsets = [0, 384], sizes = [8, 128], strides = [1, 1]} : vector<8x512xf32> to vector<8x128xf32>
    %c0_165 = arith.constant 0 : index
    %c0_166 = arith.constant 0 : index
    %313 = vector.load %arg10[%c0_165, %c0_166] : memref<8x128xf32, #tpu.memory_space<vmem>>, vector<8x128xf32>
    %314 = arith.mulf %310, %313 : vector<8x128xf32>
    %315 = arith.mulf %309, %311 : vector<8x128xf32>
    %316 = arith.addf %314, %315 : vector<8x128xf32>
    %317 = math.tanh %316 : vector<8x128xf32>
    %318 = arith.mulf %312, %317 : vector<8x128xf32>
    %c0_167 = arith.constant 0 : index
    %c0_168 = arith.constant 0 : index
    %319 = vector.load %arg10[%c0_167, %c0_168] : memref<8x128xf32, #tpu.memory_space<vmem>>, vector<8x128xf32>
    tpu.vector_store %arg10[%c0_167, %c0_168], %316 {strides = array<i32>} : memref<8x128xf32, #tpu.memory_space<vmem>>, vector<8x128xf32>,
    %c0_169 = arith.constant 0 : index
    %c0_170 = arith.constant 0 : index
    %320 = vector.load %arg9[%c0_169, %c0_170] : memref<8x128xf32, #tpu.memory_space<vmem>>, vector<8x128xf32>
    tpu.vector_store %arg9[%c0_169, %c0_170], %318 {strides = array<i32>} : memref<8x128xf32, #tpu.memory_space<vmem>>, vector<8x128xf32>,
    %cst_171 = arith.constant dense<0.000000e+00> : vector<8x512xf32>
    %321 = tpu.matmul %318, %4, %cst_171 {dimension_numbers = #tpu.dot_dimension_numbers<[1], [0], [0], [1], [0, 0, 1, 1], [], []>} : vector<8x128xf32>, vector<128x512xf32>, vector<8x512xf32> -> vector<8x512xf32>
    %c0_172 = arith.constant 0 : index
    %c0_173 = arith.constant 0 : index
    %322 = vector.load %arg11[%c0_172, %c0_173] : memref<8x128xf32, #tpu.memory_space<vmem>>, vector<8x128xf32>
    %cst_174 = arith.constant dense<0.000000e+00> : vector<8x512xf32>
    %323 = tpu.matmul %322, %5, %cst_174 {dimension_numbers = #tpu.dot_dimension_numbers<[1], [0], [0], [1], [0, 0, 1, 1], [], []>} : vector<8x128xf32>, vector<128x512xf32>, vector<8x512xf32> -> vector<8x512xf32>
    %324 = arith.addf %321, %323 : vector<8x512xf32>
    %325 = arith.addf %324, %8 : vector<8x512xf32>
    %326 = math.tanh %325 : vector<8x512xf32>
    %cst_175 = arith.constant 5.000000e-01 : f32
    %327 = vector.broadcast %cst_175 : f32 to vector<8x512xf32>
    %328 = arith.mulf %327, %326 : vector<8x512xf32>
    %cst_176 = arith.constant 5.000000e-01 : f32
    %329 = vector.broadcast %cst_176 : f32 to vector<8x512xf32>
    %330 = arith.addf %328, %329 : vector<8x512xf32>
    %331 = arith.select %14, %326, %330 : vector<8x512xi1>, vector<8x512xf32>
    %332 = vector.extract_strided_slice %331 {offsets = [0, 0], sizes = [8, 128], strides = [1, 1]} : vector<8x512xf32> to vector<8x128xf32>
    %333 = vector.extract_strided_slice %331 {offsets = [0, 128], sizes = [8, 128], strides = [1, 1]} : vector<8x512xf32> to vector<8x128xf32>
    %334 = vector.extract_strided_slice %331 {offsets = [0, 256], sizes = [8, 128], strides = [1, 1]} : vector<8x512xf32> to vector<8x128xf32>
    %335 = vector.extract_strided_slice %331 {offsets = [0, 384], sizes = [8, 128], strides = [1, 1]} : vector<8x512xf32> to vector<8x128xf32>
    %c0_177 = arith.constant 0 : index
    %c0_178 = arith.constant 0 : index
    %336 = vector.load %arg12[%c0_177, %c0_178] : memref<8x128xf32, #tpu.memory_space<vmem>>, vector<8x128xf32>
    %337 = arith.mulf %333, %336 : vector<8x128xf32>
    %338 = arith.mulf %332, %334 : vector<8x128xf32>
    %339 = arith.addf %337, %338 : vector<8x128xf32>
    %340 = math.tanh %339 : vector<8x128xf32>
    %341 = arith.mulf %335, %340 : vector<8x128xf32>
    %c0_179 = arith.constant 0 : index
    %c0_180 = arith.constant 0 : index
    %342 = vector.load %arg12[%c0_179, %c0_180] : memref<8x128xf32, #tpu.memory_space<vmem>>, vector<8x128xf32>
    tpu.vector_store %arg12[%c0_179, %c0_180], %339 {strides = array<i32>} : memref<8x128xf32, #tpu.memory_space<vmem>>, vector<8x128xf32>,
    %c0_181 = arith.constant 0 : index
    %c0_182 = arith.constant 0 : index
    %343 = vector.load %arg11[%c0_181, %c0_182] : memref<8x128xf32, #tpu.memory_space<vmem>>, vector<8x128xf32>
    tpu.vector_store %arg11[%c0_181, %c0_182], %341 {strides = array<i32>} : memref<8x128xf32, #tpu.memory_space<vmem>>, vector<8x128xf32>,
    %c7_i32 = arith.constant 7 : i32
    %344 = arith.index_cast %c7_i32 : i32 to index
    %c0_183 = arith.constant 0 : index
    %c0_184 = arith.constant 0 : index
    %345 = vector.load %arg1[%344, %c0_183, %c0_184] : memref<8x8x512xf32, #tpu.memory_space<vmem>>, vector<1x8x512xf32>
    %346 = vector.shape_cast %345 : vector<1x8x512xf32> to vector<8x512xf32>
    %c0_185 = arith.constant 0 : index
    %c0_186 = arith.constant 0 : index
    %347 = vector.load %arg9[%c0_185, %c0_186] : memref<8x128xf32, #tpu.memory_space<vmem>>, vector<8x128xf32>
    %cst_187 = arith.constant dense<0.000000e+00> : vector<8x512xf32>
    %348 = tpu.matmul %347, %3, %cst_187 {dimension_numbers = #tpu.dot_dimension_numbers<[1], [0], [0], [1], [0, 0, 1, 1], [], []>} : vector<8x128xf32>, vector<128x512xf32>, vector<8x512xf32> -> vector<8x512xf32>
    %349 = arith.addf %346, %348 : vector<8x512xf32>
    %350 = math.tanh %349 : vector<8x512xf32>
    %cst_188 = arith.constant 5.000000e-01 : f32
    %351 = vector.broadcast %cst_188 : f32 to vector<8x512xf32>
    %352 = arith.mulf %351, %350 : vector<8x512xf32>
    %cst_189 = arith.constant 5.000000e-01 : f32
    %353 = vector.broadcast %cst_189 : f32 to vector<8x512xf32>
    %354 = arith.addf %352, %353 : vector<8x512xf32>
    %355 = arith.select %14, %350, %354 : vector<8x512xi1>, vector<8x512xf32>
    %356 = vector.extract_strided_slice %355 {offsets = [0, 0], sizes = [8, 128], strides = [1, 1]} : vector<8x512xf32> to vector<8x128xf32>
    %357 = vector.extract_strided_slice %355 {offsets = [0, 128], sizes = [8, 128], strides = [1, 1]} : vector<8x512xf32> to vector<8x128xf32>
    %358 = vector.extract_strided_slice %355 {offsets = [0, 256], sizes = [8, 128], strides = [1, 1]} : vector<8x512xf32> to vector<8x128xf32>
    %359 = vector.extract_strided_slice %355 {offsets = [0, 384], sizes = [8, 128], strides = [1, 1]} : vector<8x512xf32> to vector<8x128xf32>
    %c0_190 = arith.constant 0 : index
    %c0_191 = arith.constant 0 : index
    %360 = vector.load %arg10[%c0_190, %c0_191] : memref<8x128xf32, #tpu.memory_space<vmem>>, vector<8x128xf32>
    %361 = arith.mulf %357, %360 : vector<8x128xf32>
    %362 = arith.mulf %356, %358 : vector<8x128xf32>
    %363 = arith.addf %361, %362 : vector<8x128xf32>
    %364 = math.tanh %363 : vector<8x128xf32>
    %365 = arith.mulf %359, %364 : vector<8x128xf32>
    %c0_192 = arith.constant 0 : index
    %c0_193 = arith.constant 0 : index
    %366 = vector.load %arg10[%c0_192, %c0_193] : memref<8x128xf32, #tpu.memory_space<vmem>>, vector<8x128xf32>
    tpu.vector_store %arg10[%c0_192, %c0_193], %363 {strides = array<i32>} : memref<8x128xf32, #tpu.memory_space<vmem>>, vector<8x128xf32>,
    %c0_194 = arith.constant 0 : index
    %c0_195 = arith.constant 0 : index
    %367 = vector.load %arg9[%c0_194, %c0_195] : memref<8x128xf32, #tpu.memory_space<vmem>>, vector<8x128xf32>
    tpu.vector_store %arg9[%c0_194, %c0_195], %365 {strides = array<i32>} : memref<8x128xf32, #tpu.memory_space<vmem>>, vector<8x128xf32>,
    %cst_196 = arith.constant dense<0.000000e+00> : vector<8x512xf32>
    %368 = tpu.matmul %365, %4, %cst_196 {dimension_numbers = #tpu.dot_dimension_numbers<[1], [0], [0], [1], [0, 0, 1, 1], [], []>} : vector<8x128xf32>, vector<128x512xf32>, vector<8x512xf32> -> vector<8x512xf32>
    %c0_197 = arith.constant 0 : index
    %c0_198 = arith.constant 0 : index
    %369 = vector.load %arg11[%c0_197, %c0_198] : memref<8x128xf32, #tpu.memory_space<vmem>>, vector<8x128xf32>
    %cst_199 = arith.constant dense<0.000000e+00> : vector<8x512xf32>
    %370 = tpu.matmul %369, %5, %cst_199 {dimension_numbers = #tpu.dot_dimension_numbers<[1], [0], [0], [1], [0, 0, 1, 1], [], []>} : vector<8x128xf32>, vector<128x512xf32>, vector<8x512xf32> -> vector<8x512xf32>
    %371 = arith.addf %368, %370 : vector<8x512xf32>
    %372 = arith.addf %371, %8 : vector<8x512xf32>
    %373 = math.tanh %372 : vector<8x512xf32>
    %cst_200 = arith.constant 5.000000e-01 : f32
    %374 = vector.broadcast %cst_200 : f32 to vector<8x512xf32>
    %375 = arith.mulf %374, %373 : vector<8x512xf32>
    %cst_201 = arith.constant 5.000000e-01 : f32
    %376 = vector.broadcast %cst_201 : f32 to vector<8x512xf32>
    %377 = arith.addf %375, %376 : vector<8x512xf32>
    %378 = arith.select %14, %373, %377 : vector<8x512xi1>, vector<8x512xf32>
    %379 = vector.extract_strided_slice %378 {offsets = [0, 0], sizes = [8, 128], strides = [1, 1]} : vector<8x512xf32> to vector<8x128xf32>
    %380 = vector.extract_strided_slice %378 {offsets = [0, 128], sizes = [8, 128], strides = [1, 1]} : vector<8x512xf32> to vector<8x128xf32>
    %381 = vector.extract_strided_slice %378 {offsets = [0, 256], sizes = [8, 128], strides = [1, 1]} : vector<8x512xf32> to vector<8x128xf32>
    %382 = vector.extract_strided_slice %378 {offsets = [0, 384], sizes = [8, 128], strides = [1, 1]} : vector<8x512xf32> to vector<8x128xf32>
    %c0_202 = arith.constant 0 : index
    %c0_203 = arith.constant 0 : index
    %383 = vector.load %arg12[%c0_202, %c0_203] : memref<8x128xf32, #tpu.memory_space<vmem>>, vector<8x128xf32>
    %384 = arith.mulf %380, %383 : vector<8x128xf32>
    %385 = arith.mulf %379, %381 : vector<8x128xf32>
    %386 = arith.addf %384, %385 : vector<8x128xf32>
    %387 = math.tanh %386 : vector<8x128xf32>
    %388 = arith.mulf %382, %387 : vector<8x128xf32>
    %c0_204 = arith.constant 0 : index
    %c0_205 = arith.constant 0 : index
    %389 = vector.load %arg12[%c0_204, %c0_205] : memref<8x128xf32, #tpu.memory_space<vmem>>, vector<8x128xf32>
    tpu.vector_store %arg12[%c0_204, %c0_205], %386 {strides = array<i32>} : memref<8x128xf32, #tpu.memory_space<vmem>>, vector<8x128xf32>,
    %c0_206 = arith.constant 0 : index
    %c0_207 = arith.constant 0 : index
    %390 = vector.load %arg11[%c0_206, %c0_207] : memref<8x128xf32, #tpu.memory_space<vmem>>, vector<8x128xf32>
    tpu.vector_store %arg11[%c0_206, %c0_207], %388 {strides = array<i32>} : memref<8x128xf32, #tpu.memory_space<vmem>>, vector<8x128xf32>,
    %c8_i32 = arith.constant 8 : i32
    %c0_i32_208 = arith.constant 0 : i32
    %391 = arith.cmpi eq, %arg0, %c0_i32_208 : i32
    %392 = arith.extui %391 : i1 to i32
    %c0_i32_209 = arith.constant 0 : i32
    %393 = arith.cmpi ne, %392, %c0_i32_209 : i32
    scf.if %393 {
      %c0_210 = arith.constant 0 : index
      %c0_211 = arith.constant 0 : index
      %394 = vector.load %arg11[%c0_210, %c0_211] : memref<8x128xf32, #tpu.memory_space<vmem>>, vector<8x128xf32>
      %c0_212 = arith.constant 0 : index
      %c0_213 = arith.constant 0 : index
      %395 = vector.load %arg6[%c0_212, %c0_213] : memref<128x128xf32, #tpu.memory_space<vmem>>, vector<128x128xf32>
      %cst_214 = arith.constant dense<0.000000e+00> : vector<8x128xf32>
      %396 = tpu.matmul %394, %395, %cst_214 {dimension_numbers = #tpu.dot_dimension_numbers<[1], [0], [0], [1], [0, 0, 1, 1], [], []>} : vector<8x128xf32>, vector<128x128xf32>, vector<8x128xf32> -> vector<8x128xf32>
      %c0_215 = arith.constant 0 : index
      %c0_216 = arith.constant 0 : index
      %397 = vector.load %arg7[%c0_215, %c0_216] : memref<1x128xf32, #tpu.memory_space<vmem>>, vector<1x128xf32>
      %398 = vector.broadcast %397 : vector<1x128xf32> to vector<8x128xf32>
      %399 = arith.addf %396, %398 : vector<8x128xf32>
      %c0_217 = arith.constant 0 : index
      %c0_218 = arith.constant 0 : index
      %400 = vector.load %arg8[%c0_217, %c0_218] : memref<8x128xf32, #tpu.memory_space<vmem>>, vector<8x128xf32>
      tpu.vector_store %arg8[%c0_217, %c0_218], %399 {strides = array<i32>} : memref<8x128xf32, #tpu.memory_space<vmem>>, vector<8x128xf32>,
    } else {
    }
    return
  }
  func.func @transform_0(%arg0: i32) -> (i32, i32, i32) {
    %c0_i32 = arith.constant 0 : i32
    %c0_i32_0 = arith.constant 0 : i32
    %c0_i32_1 = arith.constant 0 : i32
    return %arg0, %c0_i32, %c0_i32_0 : i32, i32, i32
  }
  func.func @transform_1(%arg0: i32) -> (i32, i32) {
    %c0_i32 = arith.constant 0 : i32
    %c0_i32_0 = arith.constant 0 : i32
    %c0_i32_1 = arith.constant 0 : i32
    return %c0_i32, %c0_i32_0 : i32, i32
  }
  func.func @transform_2(%arg0: i32) -> (i32, i32) {
    %c0_i32 = arith.constant 0 : i32
    %c0_i32_0 = arith.constant 0 : i32
    %c0_i32_1 = arith.constant 0 : i32
    return %c0_i32, %c0_i32_0 : i32, i32
  }
  func.func @transform_3(%arg0: i32) -> (i32, i32) {
    %c0_i32 = arith.constant 0 : i32
    %c0_i32_0 = arith.constant 0 : i32
    %c0_i32_1 = arith.constant 0 : i32
    return %c0_i32, %c0_i32_0 : i32, i32
  }
  func.func @transform_4(%arg0: i32) -> (i32, i32) {
    %c0_i32 = arith.constant 0 : i32
    %c0_i32_0 = arith.constant 0 : i32
    %c0_i32_1 = arith.constant 0 : i32
    return %c0_i32, %c0_i32_0 : i32, i32
  }
  func.func @transform_5(%arg0: i32) -> (i32, i32) {
    %c0_i32 = arith.constant 0 : i32
    %c0_i32_0 = arith.constant 0 : i32
    %c0_i32_1 = arith.constant 0 : i32
    return %c0_i32, %c0_i32_0 : i32, i32
  }
  func.func @transform_6(%arg0: i32) -> (i32, i32) {
    %c0_i32 = arith.constant 0 : i32
    %c0_i32_0 = arith.constant 0 : i32
    %c0_i32_1 = arith.constant 0 : i32
    return %c0_i32, %c0_i32_0 : i32, i32
  }
  func.func @transform_7(%arg0: i32) -> (i32, i32) {
    %c0_i32 = arith.constant 0 : i32
    %c0_i32_0 = arith.constant 0 : i32
    %c0_i32_1 = arith.constant 0 : i32
    return %c0_i32, %c0_i32_0 : i32, i32
  }
}

</mosaic_0001>

<llo_original>
// kernel: tpu_custom_call.1
$region0: #{tpu_custom_call.1}
  #allocation0 [shape = 'u32[]', space=smem, size = 0x4, offset = 0x4, fixed_abs, tag = 'smem constant byte address 0x4 - core index']
  #allocation1 [shape = 'u32[72,128]{1,0:T(1,128)}', space=vmem, size = 0x9000, scoped, tag = 'internal scratch']
  #allocation2 [shape = 'f32[8,128]{1,0:T(8,128)}', space=vmem, size = 0x1000, scoped, tag = 'scratch operand']
  #allocation3 [shape = 'f32[8,128]{1,0:T(8,128)}', space=vmem, size = 0x1000, scoped, tag = 'scratch operand']
  #allocation4 [shape = 'f32[8,128]{1,0:T(8,128)}', space=vmem, size = 0x1000, scoped, tag = 'scratch operand']
  #allocation5 [shape = 'f32[8,128]{1,0:T(8,128)}', space=vmem, size = 0x1000, scoped, tag = 'scratch operand']
  %s0 = inlined_call_operand.hbm [shape: f32[8,8,512], index: 0, kind: input, shape index: {}]
  %s1 = inlined_call_operand.hbm [shape: f32[128,512], index: 1, kind: input, shape index: {}]
  %s2 = inlined_call_operand.hbm [shape: f32[128,512], index: 2, kind: input, shape index: {}]
  %s3 = inlined_call_operand.hbm [shape: f32[128,512], index: 3, kind: input, shape index: {}]
  %s4 = inlined_call_operand.hbm [shape: f32[1,512], index: 4, kind: input, shape index: {}]
  %s5 = inlined_call_operand.hbm [shape: f32[128,128], index: 5, kind: input, shape index: {}]
  %s6 = inlined_call_operand.vmem [shape: f32[1,128], index: 6, kind: input, shape index: {}]
  %s7 = inlined_call_operand.hbm [shape: f32[8,128], index: 7, kind: output, shape index: {}]
  %s8 = sld [smem:[#allocation0]]
  $region70: #{tpu_custom_call.1} parent=0
    _
  %s10 = ssub.s32 1, %s8
  %s11 = scalar_select 0, %s10, %s8
  $region1: #{tpu_custom_call.1} parent=0
    #allocation6 [shape = 'u8[131072]{0}', space=vmem, size = 0x20000, scoped, tag = 'input window, operand 0, single buffered']
    #allocation7 [shape = 's32[1]{0}', space=sflag, size = 0x4, scoped, tag = 'scoped memory for tpu_custom_call.1']
    #allocation8 [shape = 's32[1]{0}', space=sflag, size = 0x4, scoped, tag = 'scoped memory for tpu_custom_call.1']
    #allocation9 [shape = 'u8[262144]{0}', space=vmem, size = 0x40000, scoped, tag = 'input window, operand 1, single buffered']
    #allocation10 [shape = 's32[1]{0}', space=sflag, size = 0x4, scoped, tag = 'scoped memory for tpu_custom_call.1']
    #allocation11 [shape = 'u8[262144]{0}', space=vmem, size = 0x40000, scoped, tag = 'input window, operand 2, single buffered']
    #allocation12 [shape = 'u8[262144]{0}', space=vmem, size = 0x40000, scoped, tag = 'input window, operand 3, single buffered']
    #allocation13 [shape = 's32[1]{0}', space=sflag, size = 0x4, scoped, tag = 'scoped memory for tpu_custom_call.1']
    #allocation14 [shape = 'u8[2048]{0}', space=vmem, size = 0x800, scoped, tag = 'input window, operand 4, single buffered']
    #allocation15 [shape = 'u8[65536]{0}', space=vmem, size = 0x10000, scoped, tag = 'input window, operand 5, single buffered']
    #allocation16 [shape = 's32[1]{0}', space=sflag, size = 0x4, scoped, tag = 'scoped memory for tpu_custom_call.1']
    #allocation17 [shape = 'u8[4096]{0}', space=vmem, size = 0x1000, scoped, tag = 'output window, operand 0, single buffered']
    %12 = vsyncpa [#allocation7], 0
    %13 = vsyncpa [#allocation10], 0
    %14 = vsyncpa [#allocation13], 0
    %15 = vsyncpa [#allocation16], 0
    %16 = vsyncpa [#allocation8], 0
    // Predicated region
    $region2: #{tpu_custom_call.1} parent=1 // pred_check
      _
    $region3: #{tpu_custom_call.1} parent=1 // pred_check_branch
      %18 = sbr.rel (0) target = $region5
    $region4: #{tpu_custom_call.1} parent=1 // pred_region
      %20 = vsyncadd [#allocation7], 0
      %s21 = sshll.u32 %s0, 4
      %s22 = int_to_ptr.hbm [resolvable:$true] %s21
      %s23 = sshll.u32 [#allocation6], 4
      %s24 = int_to_ptr.vmem [resolvable:$true] %s23
      %29 = dma.hbm_to_vmem [thread:$0]  %s22, 4096, %s24, [#allocation7], 512, 512, 32
    $region5: #{tpu_custom_call.1} parent=1 // pred_fallthru
      _
    // Predicated region
    $region6: #{tpu_custom_call.1} parent=1 // pred_check
      _
    $region7: #{tpu_custom_call.1} parent=1 // pred_check_branch
      %31 = sbr.rel (0) target = $region9
    $region8: #{tpu_custom_call.1} parent=1 // pred_region
      %33 = vsyncadd [#allocation10], 0
      %s34 = sshll.u32 %s1, 4
      %s35 = int_to_ptr.hbm [resolvable:$true] %s34
      %s36 = sshll.u32 [#allocation9], 4
      %s37 = int_to_ptr.vmem [resolvable:$true] %s36
      %42 = dma.hbm_to_vmem [thread:$0]  %s35, 8192, %s37, [#allocation10], 512, 512, 32
    $region9: #{tpu_custom_call.1} parent=1 // pred_fallthru
      _
    // Predicated region
    $region10: #{tpu_custom_call.1} parent=1 // pred_check
      _
    $region11: #{tpu_custom_call.1} parent=1 // pred_check_branch
      %44 = sbr.rel (0) target = $region13
    $region12: #{tpu_custom_call.1} parent=1 // pred_region
      %46 = vsyncadd [#allocation10], 0
      %s47 = sshll.u32 %s2, 4
      %s48 = int_to_ptr.hbm [resolvable:$true] %s47
      %s49 = sshll.u32 [#allocation11], 4
      %s50 = int_to_ptr.vmem [resolvable:$true] %s49
      %55 = dma.hbm_to_vmem [thread:$0]  %s48, 8192, %s50, [#allocation10], 512, 512, 32
    $region13: #{tpu_custom_call.1} parent=1 // pred_fallthru
      _
    // Predicated region
    $region14: #{tpu_custom_call.1} parent=1 // pred_check
      _
    $region15: #{tpu_custom_call.1} parent=1 // pred_check_branch
      %57 = sbr.rel (0) target = $region17
    $region16: #{tpu_custom_call.1} parent=1 // pred_region
      %59 = vsyncadd [#allocation13], 0
      %s60 = sshll.u32 %s3, 4
      %s61 = int_to_ptr.hbm [resolvable:$true] %s60
      %s62 = sshll.u32 [#allocation12], 4
      %s63 = int_to_ptr.vmem [resolvable:$true] %s62
      %68 = dma.hbm_to_vmem [thread:$0]  %s61, 8192, %s63, [#allocation13], 512, 512, 32
    $region17: #{tpu_custom_call.1} parent=1 // pred_fallthru
      _
    // Predicated region
    $region18: #{tpu_custom_call.1} parent=1 // pred_check
      _
    $region19: #{tpu_custom_call.1} parent=1 // pred_check_branch
      %70 = sbr.rel (0) target = $region21
    $region20: #{tpu_custom_call.1} parent=1 // pred_region
      %72 = vsyncadd [#allocation13], 0
      %s74 = sshll.u32 %s4, 4
      %s75 = int_to_ptr.hbm [resolvable:$true] %s74
      %s76 = sshll.u32 [#allocation14], 4
      %s77 = int_to_ptr.vmem [resolvable:$true] %s76
      %79 = dma.hbm_to_vmem [thread:$0]  %s75, 64, %s77, [#allocation13]
    $region21: #{tpu_custom_call.1} parent=1 // pred_fallthru
      _
    // Predicated region
    $region22: #{tpu_custom_call.1} parent=1 // pred_check
      _
    $region23: #{tpu_custom_call.1} parent=1 // pred_check_branch
      %81 = sbr.rel (0) target = $region25
    $region24: #{tpu_custom_call.1} parent=1 // pred_region
      %83 = vsyncadd [#allocation16], 0
      %s84 = sshll.u32 %s5, 4
      %s85 = int_to_ptr.hbm [resolvable:$true] %s84
      %s86 = sshll.u32 [#allocation15], 4
      %s87 = int_to_ptr.vmem [resolvable:$true] %s86
      %92 = dma.hbm_to_vmem [thread:$0]  %s85, 2048, %s87, [#allocation16], 128, 128, 8
    $region25: #{tpu_custom_call.1} parent=1 // pred_fallthru
      _
    // Predicated region
    $region26: #{tpu_custom_call.1} parent=1 // pred_check
      _
    $region27: #{tpu_custom_call.1} parent=1 // pred_check_branch
      %94 = sbr.rel (0) target = $region29
    $region28: #{tpu_custom_call.1} parent=1 // pred_region
      _
    $region29: #{tpu_custom_call.1} parent=1 // pred_fallthru
      _
    // Predicated region
    $region30: #{tpu_custom_call.1} parent=1 // pred_check
      _
    $region31: #{tpu_custom_call.1} parent=1 // pred_check_branch
      %96 = sbr.rel (0) target = $region33
    $region32: #{tpu_custom_call.1} parent=1 // pred_region
      %98 = dma.done [#allocation7], 4096
    $region33: #{tpu_custom_call.1} parent=1 // pred_fallthru
      _
    // Predicated region
    $region34: #{tpu_custom_call.1} parent=1 // pred_check
      _
    $region35: #{tpu_custom_call.1} parent=1 // pred_check_branch
      %100 = sbr.rel (0) target = $region37
    $region36: #{tpu_custom_call.1} parent=1 // pred_region
      %102 = dma.done [#allocation10], 8192
    $region37: #{tpu_custom_call.1} parent=1 // pred_fallthru
      _
    // Predicated region
    $region38: #{tpu_custom_call.1} parent=1 // pred_check
      _
    $region39: #{tpu_custom_call.1} parent=1 // pred_check_branch
      %104 = sbr.rel (0) target = $region41
    $region40: #{tpu_custom_call.1} parent=1 // pred_region
      %106 = dma.done [#allocation10], 8192
    $region41: #{tpu_custom_call.1} parent=1 // pred_fallthru
      _
    // Predicated region
    $region42: #{tpu_custom_call.1} parent=1 // pred_check
      _
    $region43: #{tpu_custom_call.1} parent=1 // pred_check_branch
      %108 = sbr.rel (0) target = $region45
    $region44: #{tpu_custom_call.1} parent=1 // pred_region
      %110 = dma.done [#allocation13], 8192
    $region45: #{tpu_custom_call.1} parent=1 // pred_fallthru
      _
    // Predicated region
    $region46: #{tpu_custom_call.1} parent=1 // pred_check
      _
    $region47: #{tpu_custom_call.1} parent=1 // pred_check_branch
      %112 = sbr.rel (0) target = $region49
    $region48: #{tpu_custom_call.1} parent=1 // pred_region
      %114 = dma.done [#allocation13], 64
    $region49: #{tpu_custom_call.1} parent=1 // pred_fallthru
      _
    // Predicated region
    $region50: #{tpu_custom_call.1} parent=1 // pred_check
      _
    $region51: #{tpu_custom_call.1} parent=1 // pred_check_branch
      %116 = sbr.rel (0) target = $region53
    $region52: #{tpu_custom_call.1} parent=1 // pred_region
      %118 = dma.done [#allocation16], 2048
    $region53: #{tpu_custom_call.1} parent=1 // pred_fallthru
      _
    %p119 = scmp.eq.s32.totalorder 0, 0
    // Predicated region
    $region54: #{tpu_custom_call.1} parent=1 // pred_check
      %p120 = pneg %p119
    $region55: #{tpu_custom_call.1} parent=1 // pred_check_branch
      %122 = sbr.rel (%p120) target = $region57
    $region56: #{tpu_custom_call.1} parent=1 // pred_region
      %123 = vst [vmem:[#allocation2] sm:$0xff] 0.0
      %124 = vst [vmem:[#allocation3] sm:$0xff] 0.0
      %125 = vst [vmem:[#allocation4] sm:$0xff] 0.0
      %126 = vst [vmem:[#allocation5] sm:$0xff] 0.0
    $region57: #{tpu_custom_call.1} parent=1 // pred_fallthru
      _
    %v127 = vld [vmem:[#allocation9] sm:$0xff]
    %v128 = vld [vmem:[#allocation9 + $0x8] sm:$0xff]
    %v129 = vld [vmem:[#allocation9 + $0x10] sm:$0xff]
    %v130 = vld [vmem:[#allocation9 + $0x18] sm:$0xff]
    %v131 = vld [vmem:[#allocation9 + $0x20] sm:$0xff]
    %v132 = vld [vmem:[#allocation9 + $0x28] sm:$0xff]
    %v133 = vld [vmem:[#allocation9 + $0x30] sm:$0xff]
    %v134 = vld [vmem:[#allocation9 + $0x38] sm:$0xff]
    %v135 = vld [vmem:[#allocation9 + $0x40] sm:$0xff]
    %v136 = vld [vmem:[#allocation9 + $0x48] sm:$0xff]
    %v137 = vld [vmem:[#allocation9 + $0x50] sm:$0xff]
    %v138 = vld [vmem:[#allocation9 + $0x58] sm:$0xff]
    %v139 = vld [vmem:[#allocation9 + $0x60] sm:$0xff]
    %v140 = vld [vmem:[#allocation9 + $0x68] sm:$0xff]
    %v141 = vld [vmem:[#allocation9 + $0x70] sm:$0xff]
    %v142 = vld [vmem:[#allocation9 + $0x78] sm:$0xff]
    %v143 = vld [vmem:[#allocation9 + $0x80] sm:$0xff]
    %v144 = vld [vmem:[#allocation9 + $0x88] sm:$0xff]
    %v145 = vld [vmem:[#allocation9 + $0x90] sm:$0xff]
    %v146 = vld [vmem:[#allocation9 + $0x98] sm:$0xff]
    %v147 = vld [vmem:[#allocation9 + $0xa0] sm:$0xff]
    %v148 = vld [vmem:[#allocation9 + $0xa8] sm:$0xff]
    %v149 = vld [vmem:[#allocation9 + $0xb0] sm:$0xff]
    %v150 = vld [vmem:[#allocation9 + $0xb8] sm:$0xff]
    %v151 = vld [vmem:[#allocation9 + $0xc0] sm:$0xff]
    %v152 = vld [vmem:[#allocation9 + $0xc8] sm:$0xff]
    %v153 = vld [vmem:[#allocation9 + $0xd0] sm:$0xff]
    %v154 = vld [vmem:[#allocation9 + $0xd8] sm:$0xff]
    %v155 = vld [vmem:[#allocation9 + $0xe0] sm:$0xff]
    %v156 = vld [vmem:[#allocation9 + $0xe8] sm:$0xff]
    %v157 = vld [vmem:[#allocation9 + $0xf0] sm:$0xff]
    %v158 = vld [vmem:[#allocation9 + $0xf8] sm:$0xff]
    %v159 = vld [vmem:[#allocation9 + $0x100] sm:$0xff]
    %v160 = vld [vmem:[#allocation9 + $0x108] sm:$0xff]
    %v161 = vld [vmem:[#allocation9 + $0x110] sm:$0xff]
    %v162 = vld [vmem:[#allocation9 + $0x118] sm:$0xff]
    %v163 = vld [vmem:[#allocation9 + $0x120] sm:$0xff]
    %v164 = vld [vmem:[#allocation9 + $0x128] sm:$0xff]
    %v165 = vld [vmem:[#allocation9 + $0x130] sm:$0xff]
    %v166 = vld [vmem:[#allocation9 + $0x138] sm:$0xff]
    %v167 = vld [vmem:[#allocation9 + $0x140] sm:$0xff]
    %v168 = vld [vmem:[#allocation9 + $0x148] sm:$0xff]
    %v169 = vld [vmem:[#allocation9 + $0x150] sm:$0xff]
    %v170 = vld [vmem:[#allocation9 + $0x158] sm:$0xff]
    %v171 = vld [vmem:[#allocation9 + $0x160] sm:$0xff]
    %v172 = vld [vmem:[#allocation9 + $0x168] sm:$0xff]
    %v173 = vld [vmem:[#allocation9 + $0x170] sm:$0xff]
    %v174 = vld [vmem:[#allocation9 + $0x178] sm:$0xff]
    %v175 = vld [vmem:[#allocation9 + $0x180] sm:$0xff]
    %v176 = vld [vmem:[#allocation9 + $0x188] sm:$0xff]
    %v177 = vld [vmem:[#allocation9 + $0x190] sm:$0xff]
    %v178 = vld [vmem:[#allocation9 + $0x198] sm:$0xff]
    %v179 = vld [vmem:[#allocation9 + $0x1a0] sm:$0xff]
    %v180 = vld [vmem:[#allocation9 + $0x1a8] sm:$0xff]
    %v181 = vld [vmem:[#allocation9 + $0x1b0] sm:$0xff]
    %v182 = vld [vmem:[#allocation9 + $0x1b8] sm:$0xff]
    %v183 = vld [vmem:[#allocation9 + $0x1c0] sm:$0xff]
    %v184 = vld [vmem:[#allocation9 + $0x1c8] sm:$0xff]
    %v185 = vld [vmem:[#allocation9 + $0x1d0] sm:$0xff]
    %v186 = vld [vmem:[#allocation9 + $0x1d8] sm:$0xff]
    %v187 = vld [vmem:[#allocation9 + $0x1e0] sm:$0xff]
    %v188 = vld [vmem:[#allocation9 + $0x1e8] sm:$0xff]
    %v189 = vld [vmem:[#allocation9 + $0x1f0] sm:$0xff]
    %v190 = vld [vmem:[#allocation9 + $0x1f8] sm:$0xff]
    %v191 = vld [vmem:[#allocation11] sm:$0xff]
    %v192 = vld [vmem:[#allocation11 + $0x8] sm:$0xff]
    %v193 = vld [vmem:[#allocation11 + $0x10] sm:$0xff]
    %v194 = vld [vmem:[#allocation11 + $0x18] sm:$0xff]
    %v195 = vld [vmem:[#allocation11 + $0x20] sm:$0xff]
    %v196 = vld [vmem:[#allocation11 + $0x28] sm:$0xff]
    %v197 = vld [vmem:[#allocation11 + $0x30] sm:$0xff]
    %v198 = vld [vmem:[#allocation11 + $0x38] sm:$0xff]
    %v199 = vld [vmem:[#allocation11 + $0x40] sm:$0xff]
    %v200 = vld [vmem:[#allocation11 + $0x48] sm:$0xff]
    %v201 = vld [vmem:[#allocation11 + $0x50] sm:$0xff]
    %v202 = vld [vmem:[#allocation11 + $0x58] sm:$0xff]
    %v203 = vld [vmem:[#allocation11 + $0x60] sm:$0xff]
    %v204 = vld [vmem:[#allocation11 + $0x68] sm:$0xff]
    %v205 = vld [vmem:[#allocation11 + $0x70] sm:$0xff]
    %v206 = vld [vmem:[#allocation11 + $0x78] sm:$0xff]
    %v207 = vld [vmem:[#allocation11 + $0x80] sm:$0xff]
    %v208 = vld [vmem:[#allocation11 + $0x88] sm:$0xff]
    %v209 = vld [vmem:[#allocation11 + $0x90] sm:$0xff]
    %v210 = vld [vmem:[#allocation11 + $0x98] sm:$0xff]
    %v211 = vld [vmem:[#allocation11 + $0xa0] sm:$0xff]
    %v212 = vld [vmem:[#allocation11 + $0xa8] sm:$0xff]
    %v213 = vld [vmem:[#allocation11 + $0xb0] sm:$0xff]
    %v214 = vld [vmem:[#allocation11 + $0xb8] sm:$0xff]
    %v215 = vld [vmem:[#allocation11 + $0xc0] sm:$0xff]
    %v216 = vld [vmem:[#allocation11 + $0xc8] sm:$0xff]
    %v217 = vld [vmem:[#allocation11 + $0xd0] sm:$0xff]
    %v218 = vld [vmem:[#allocation11 + $0xd8] sm:$0xff]
    %v219 = vld [vmem:[#allocation11 + $0xe0] sm:$0xff]
    %v220 = vld [vmem:[#allocation11 + $0xe8] sm:$0xff]
    %v221 = vld [vmem:[#allocation11 + $0xf0] sm:$0xff]
    %v222 = vld [vmem:[#allocation11 + $0xf8] sm:$0xff]
    %v223 = vld [vmem:[#allocation11 + $0x100] sm:$0xff]
    %v224 = vld [vmem:[#allocation11 + $0x108] sm:$0xff]
    %v225 = vld [vmem:[#allocation11 + $0x110] sm:$0xff]
    %v226 = vld [vmem:[#allocation11 + $0x118] sm:$0xff]
    %v227 = vld [vmem:[#allocation11 + $0x120] sm:$0xff]
    %v228 = vld [vmem:[#allocation11 + $0x128] sm:$0xff]
    %v229 = vld [vmem:[#allocation11 + $0x130] sm:$0xff]
    %v230 = vld [vmem:[#allocation11 + $0x138] sm:$0xff]
    %v231 = vld [vmem:[#allocation11 + $0x140] sm:$0xff]
    %v232 = vld [vmem:[#allocation11 + $0x148] sm:$0xff]
    %v233 = vld [vmem:[#allocation11 + $0x150] sm:$0xff]
    %v234 = vld [vmem:[#allocation11 + $0x158] sm:$0xff]
    %v235 = vld [vmem:[#allocation11 + $0x160] sm:$0xff]
    %v236 = vld [vmem:[#allocation11 + $0x168] sm:$0xff]
    %v237 = vld [vmem:[#allocation11 + $0x170] sm:$0xff]
    %v238 = vld [vmem:[#allocation11 + $0x178] sm:$0xff]
    %v239 = vld [vmem:[#allocation11 + $0x180] sm:$0xff]
    %v240 = vld [vmem:[#allocation11 + $0x188] sm:$0xff]
    %v241 = vld [vmem:[#allocation11 + $0x190] sm:$0xff]
    %v242 = vld [vmem:[#allocation11 + $0x198] sm:$0xff]
    %v243 = vld [vmem:[#allocation11 + $0x1a0] sm:$0xff]
    %v244 = vld [vmem:[#allocation11 + $0x1a8] sm:$0xff]
    %v245 = vld [vmem:[#allocation11 + $0x1b0] sm:$0xff]
    %v246 = vld [vmem:[#allocation11 + $0x1b8] sm:$0xff]
    %v247 = vld [vmem:[#allocation11 + $0x1c0] sm:$0xff]
    %v248 = vld [vmem:[#allocation11 + $0x1c8] sm:$0xff]
    %v249 = vld [vmem:[#allocation11 + $0x1d0] sm:$0xff]
    %v250 = vld [vmem:[#allocation11 + $0x1d8] sm:$0xff]
    %v251 = vld [vmem:[#allocation11 + $0x1e0] sm:$0xff]
    %v252 = vld [vmem:[#allocation11 + $0x1e8] sm:$0xff]
    %v253 = vld [vmem:[#allocation11 + $0x1f0] sm:$0xff]
    %v254 = vld [vmem:[#allocation11 + $0x1f8] sm:$0xff]
    %v255 = vld [vmem:[#allocation12] sm:$0xff]
    %v256 = vld [vmem:[#allocation12 + $0x8] sm:$0xff]
    %v257 = vld [vmem:[#allocation12 + $0x10] sm:$0xff]
    %v258 = vld [vmem:[#allocation12 + $0x18] sm:$0xff]
    %v259 = vld [vmem:[#allocation12 + $0x20] sm:$0xff]
    %v260 = vld [vmem:[#allocation12 + $0x28] sm:$0xff]
    %v261 = vld [vmem:[#allocation12 + $0x30] sm:$0xff]
    %v262 = vld [vmem:[#allocation12 + $0x38] sm:$0xff]
    %v263 = vld [vmem:[#allocation12 + $0x40] sm:$0xff]
    %v264 = vld [vmem:[#allocation12 + $0x48] sm:$0xff]
    %v265 = vld [vmem:[#allocation12 + $0x50] sm:$0xff]
    %v266 = vld [vmem:[#allocation12 + $0x58] sm:$0xff]
    %v267 = vld [vmem:[#allocation12 + $0x60] sm:$0xff]
    %v268 = vld [vmem:[#allocation12 + $0x68] sm:$0xff]
    %v269 = vld [vmem:[#allocation12 + $0x70] sm:$0xff]
    %v270 = vld [vmem:[#allocation12 + $0x78] sm:$0xff]
    %v271 = vld [vmem:[#allocation12 + $0x80] sm:$0xff]
    %v272 = vld [vmem:[#allocation12 + $0x88] sm:$0xff]
    %v273 = vld [vmem:[#allocation12 + $0x90] sm:$0xff]
    %v274 = vld [vmem:[#allocation12 + $0x98] sm:$0xff]
    %v275 = vld [vmem:[#allocation12 + $0xa0] sm:$0xff]
    %v276 = vld [vmem:[#allocation12 + $0xa8] sm:$0xff]
    %v277 = vld [vmem:[#allocation12 + $0xb0] sm:$0xff]
    %v278 = vld [vmem:[#allocation12 + $0xb8] sm:$0xff]
    %v279 = vld [vmem:[#allocation12 + $0xc0] sm:$0xff]
    %v280 = vld [vmem:[#allocation12 + $0xc8] sm:$0xff]
    %v281 = vld [vmem:[#allocation12 + $0xd0] sm:$0xff]
    %v282 = vld [vmem:[#allocation12 + $0xd8] sm:$0xff]
    %v283 = vld [vmem:[#allocation12 + $0xe0] sm:$0xff]
    %v284 = vld [vmem:[#allocation12 + $0xe8] sm:$0xff]
    %v285 = vld [vmem:[#allocation12 + $0xf0] sm:$0xff]
    %v286 = vld [vmem:[#allocation12 + $0xf8] sm:$0xff]
    %v287 = vld [vmem:[#allocation12 + $0x100] sm:$0xff]
    %v288 = vld [vmem:[#allocation12 + $0x108] sm:$0xff]
    %v289 = vld [vmem:[#allocation12 + $0x110] sm:$0xff]
    %v290 = vld [vmem:[#allocation12 + $0x118] sm:$0xff]
    %v291 = vld [vmem:[#allocation12 + $0x120] sm:$0xff]
    %v292 = vld [vmem:[#allocation12 + $0x128] sm:$0xff]
    %v293 = vld [vmem:[#allocation12 + $0x130] sm:$0xff]
    %v294 = vld [vmem:[#allocation12 + $0x138] sm:$0xff]
    %v295 = vld [vmem:[#allocation12 + $0x140] sm:$0xff]
    %v296 = vld [vmem:[#allocation12 + $0x148] sm:$0xff]
    %v297 = vld [vmem:[#allocation12 + $0x150] sm:$0xff]
    %v298 = vld [vmem:[#allocation12 + $0x158] sm:$0xff]
    %v299 = vld [vmem:[#allocation12 + $0x160] sm:$0xff]
    %v300 = vld [vmem:[#allocation12 + $0x168] sm:$0xff]
    %v301 = vld [vmem:[#allocation12 + $0x170] sm:$0xff]
    %v302 = vld [vmem:[#allocation12 + $0x178] sm:$0xff]
    %v303 = vld [vmem:[#allocation12 + $0x180] sm:$0xff]
    %v304 = vld [vmem:[#allocation12 + $0x188] sm:$0xff]
    %v305 = vld [vmem:[#allocation12 + $0x190] sm:$0xff]
    %v306 = vld [vmem:[#allocation12 + $0x198] sm:$0xff]
    %v307 = vld [vmem:[#allocation12 + $0x1a0] sm:$0xff]
    %v308 = vld [vmem:[#allocation12 + $0x1a8] sm:$0xff]
    %v309 = vld [vmem:[#allocation12 + $0x1b0] sm:$0xff]
    %v310 = vld [vmem:[#allocation12 + $0x1b8] sm:$0xff]
    %v311 = vld [vmem:[#allocation12 + $0x1c0] sm:$0xff]
    %v312 = vld [vmem:[#allocation12 + $0x1c8] sm:$0xff]
    %v313 = vld [vmem:[#allocation12 + $0x1d0] sm:$0xff]
    %v314 = vld [vmem:[#allocation12 + $0x1d8] sm:$0xff]
    %v315 = vld [vmem:[#allocation12 + $0x1e0] sm:$0xff]
    %v316 = vld [vmem:[#allocation12 + $0x1e8] sm:$0xff]
    %v317 = vld [vmem:[#allocation12 + $0x1f0] sm:$0xff]
    %v318 = vld [vmem:[#allocation12 + $0x1f8] sm:$0xff]
    %v319 = vld [vmem:[#allocation14] sm:$0xf]
    %v321 = vperm.slane %v319, 0
    %v322 = vperm.slane %v319, 1
    %v323 = vperm.slane %v319, 2
    %v324 = vperm.slane %v319, 3
    %v329 = vlaneseq
    %v330 = vand.u32 %v329, 127
    %v331 = vadd.s32 %v330, 128
    %v332 = vadd.s32 %v330, 256
    %v333 = vadd.s32 %v330, 384
    %vm334 = vcmp.ge.s32.totalorder %v330, 256
    %vm335 = vcmp.ge.s32.totalorder %v331, 256
    %vm336 = vcmp.ge.s32.totalorder %v332, 256
    %vm337 = vcmp.ge.s32.totalorder %v333, 256
    %vm338 = vcmp.lt.s32.totalorder %v330, 384
    %vm339 = vcmp.lt.s32.totalorder %v331, 384
    %vm340 = vcmp.lt.s32.totalorder %v332, 384
    %vm341 = vcmp.lt.s32.totalorder %v333, 384
    %vm342 = vmand %vm334, %vm338
    %vm343 = vmand %vm335, %vm339
    %vm344 = vmand %vm336, %vm340
    %vm345 = vmand %vm337, %vm341
    %v346 = vld [vmem:[#allocation6] sm:$0xff]
    %v347 = vld [vmem:[#allocation6 + $0x8] sm:$0xff]
    %v348 = vld [vmem:[#allocation6 + $0x10] sm:$0xff]
    %v349 = vld [vmem:[#allocation6 + $0x18] sm:$0xff]
    %v350 = vld [vmem:[#allocation2] sm:$0xff]
    %351 = vmatpush.msra.mxu0 %v187
    %352 = vmatpush.msra.mxu0 %v183
    %353 = vmatpush.msra.mxu0 %v179
    %354 = vmatpush.msra.mxu0 %v175
    %355 = vmatpush.msra.mxu0 %v171
    %356 = vmatpush.msra.mxu0 %v167
    %357 = vmatpush.msra.mxu0 %v163
    %358 = vmatpush.msra.mxu0 %v159
    %359 = vmatpush.msra.mxu0 %v155
    %360 = vmatpush.msra.mxu0 %v151
    %361 = vmatpush.msra.mxu0 %v147
    %362 = vmatpush.msra.mxu0 %v143
    %363 = vmatpush.msra.mxu0 %v139
    %364 = vmatpush.msra.mxu0 %v135
    %365 = vmatpush.msra.mxu0 %v131
    %366 = vmatpush.msra.mxu0 %v127
    %367 = vmatmul.f32.gmra.mxu0 %v350
    %v368 = vpop.f32.mrf.mxu0
    %v369 = vadd.f32 0.0, %v368
    %370 = vdwg.mxu0
    %371 = vmatpush.msra.mxu0 %v188
    %372 = vmatpush.msra.mxu0 %v184
    %373 = vmatpush.msra.mxu0 %v180
    %374 = vmatpush.msra.mxu0 %v176
    %375 = vmatpush.msra.mxu0 %v172
    %376 = vmatpush.msra.mxu0 %v168
    %377 = vmatpush.msra.mxu0 %v164
    %378 = vmatpush.msra.mxu0 %v160
    %379 = vmatpush.msra.mxu0 %v156
    %380 = vmatpush.msra.mxu0 %v152
    %381 = vmatpush.msra.mxu0 %v148
    %382 = vmatpush.msra.mxu0 %v144
    %383 = vmatpush.msra.mxu0 %v140
    %384 = vmatpush.msra.mxu0 %v136
    %385 = vmatpush.msra.mxu0 %v132
    %386 = vmatpush.msra.mxu0 %v128
    %387 = vmatmul.f32.gmra.mxu0 %v350
    %v388 = vpop.f32.mrf.mxu0
    %v389 = vadd.f32 0.0, %v388
    %390 = vdwg.mxu0
    %391 = vmatpush.msra.mxu0 %v189
    %392 = vmatpush.msra.mxu0 %v185
    %393 = vmatpush.msra.mxu0 %v181
    %394 = vmatpush.msra.mxu0 %v177
    %395 = vmatpush.msra.mxu0 %v173
    %396 = vmatpush.msra.mxu0 %v169
    %397 = vmatpush.msra.mxu0 %v165
    %398 = vmatpush.msra.mxu0 %v161
    %399 = vmatpush.msra.mxu0 %v157
    %400 = vmatpush.msra.mxu0 %v153
    %401 = vmatpush.msra.mxu0 %v149
    %402 = vmatpush.msra.mxu0 %v145
    %403 = vmatpush.msra.mxu0 %v141
    %404 = vmatpush.msra.mxu0 %v137
    %405 = vmatpush.msra.mxu0 %v133
    %406 = vmatpush.msra.mxu0 %v129
    %407 = vmatmul.f32.gmra.mxu0 %v350
    %v408 = vpop.f32.mrf.mxu0
    %v409 = vadd.f32 0.0, %v408
    %410 = vdwg.mxu0
    %411 = vmatpush.msra.mxu0 %v190
    %412 = vmatpush.msra.mxu0 %v186
    %413 = vmatpush.msra.mxu0 %v182
    %414 = vmatpush.msra.mxu0 %v178
    %415 = vmatpush.msra.mxu0 %v174
    %416 = vmatpush.msra.mxu0 %v170
    %417 = vmatpush.msra.mxu0 %v166
    %418 = vmatpush.msra.mxu0 %v162
    %419 = vmatpush.msra.mxu0 %v158
    %420 = vmatpush.msra.mxu0 %v154
    %421 = vmatpush.msra.mxu0 %v150
    %422 = vmatpush.msra.mxu0 %v146
    %423 = vmatpush.msra.mxu0 %v142
    %424 = vmatpush.msra.mxu0 %v138
    %425 = vmatpush.msra.mxu0 %v134
    %426 = vmatpush.msra.mxu0 %v130
    %427 = vmatmul.f32.gmra.mxu0 %v350
    %v428 = vpop.f32.mrf.mxu0
    %v429 = vadd.f32 0.0, %v428
    %430 = vdwg.mxu0
    %v431 = vadd.f32 %v346, %v369
    %v432 = vadd.f32 %v347, %v389
    %v433 = vadd.f32 %v348, %v409
    %v434 = vadd.f32 %v349, %v429
    %v435 = vtanh.pop %v431
    %v436 = vtanh.pop %v432
    %v437 = vtanh.pop %v433
    %v438 = vtanh.pop %v434
    %v439 = vmul.f32 %v435, 0.5
    %v440 = vmul.f32 %v436, 0.5
    %v441 = vmul.f32 %v437, 0.5
    %v442 = vmul.f32 %v438, 0.5
    %v443 = vadd.f32 %v439, 0.5
    %v444 = vadd.f32 %v440, 0.5
    %v445 = vadd.f32 %v441, 0.5
    %v446 = vadd.f32 %v442, 0.5
    %v447 = vsel %vm342, %v435, %v443
    %v448 = vsel %vm343, %v436, %v444
    %v449 = vsel %vm344, %v437, %v445
    %v450 = vsel %vm345, %v438, %v446
    %v451 = vld [vmem:[#allocation3] sm:$0xff]
    %v452 = vmul.f32 %v448, %v451
    %v453 = vmul.f32 %v447, %v449
    %v454 = vadd.f32 %v452, %v453
    %v455 = vtanh.pop %v454
    %v456 = vmul.f32 %v450, %v455
    %457 = vst [vmem:[#allocation3] sm:$0xff] %v454
    %458 = vst [vmem:[#allocation2] sm:$0xff] %v456
    %v459 = vld [vmem:[#allocation4] sm:$0xff]
    %460 = vmatpush.msra.mxu0 %v315
    %461 = vmatpush.msra.mxu0 %v311
    %462 = vmatpush.msra.mxu0 %v307
    %463 = vmatpush.msra.mxu0 %v303
    %464 = vmatpush.msra.mxu0 %v299
    %465 = vmatpush.msra.mxu0 %v295
    %466 = vmatpush.msra.mxu0 %v291
    %467 = vmatpush.msra.mxu0 %v287
    %468 = vmatpush.msra.mxu0 %v283
    %469 = vmatpush.msra.mxu0 %v279
    %470 = vmatpush.msra.mxu0 %v275
    %471 = vmatpush.msra.mxu0 %v271
    %472 = vmatpush.msra.mxu0 %v267
    %473 = vmatpush.msra.mxu0 %v263
    %474 = vmatpush.msra.mxu0 %v259
    %475 = vmatpush.msra.mxu0 %v255
    %476 = vmatmul.f32.gmra.mxu0 %v459
    %v477 = vpop.f32.mrf.mxu0
    %v478 = vadd.f32 0.0, %v477
    %479 = vdwg.mxu0
    %480 = vmatpush.msra.mxu0 %v316
    %481 = vmatpush.msra.mxu0 %v312
    %482 = vmatpush.msra.mxu0 %v308
    %483 = vmatpush.msra.mxu0 %v304
    %484 = vmatpush.msra.mxu0 %v300
    %485 = vmatpush.msra.mxu0 %v296
    %486 = vmatpush.msra.mxu0 %v292
    %487 = vmatpush.msra.mxu0 %v288
    %488 = vmatpush.msra.mxu0 %v284
    %489 = vmatpush.msra.mxu0 %v280
    %490 = vmatpush.msra.mxu0 %v276
    %491 = vmatpush.msra.mxu0 %v272
    %492 = vmatpush.msra.mxu0 %v268
    %493 = vmatpush.msra.mxu0 %v264
    %494 = vmatpush.msra.mxu0 %v260
    %495 = vmatpush.msra.mxu0 %v256
    %496 = vmatmul.f32.gmra.mxu0 %v459
    %v497 = vpop.f32.mrf.mxu0
    %v498 = vadd.f32 0.0, %v497
    %499 = vdwg.mxu0
    %500 = vmatpush.msra.mxu0 %v317
    %501 = vmatpush.msra.mxu0 %v313
    %502 = vmatpush.msra.mxu0 %v309
    %503 = vmatpush.msra.mxu0 %v305
    %504 = vmatpush.msra.mxu0 %v301
    %505 = vmatpush.msra.mxu0 %v297
    %506 = vmatpush.msra.mxu0 %v293
    %507 = vmatpush.msra.mxu0 %v289
    %508 = vmatpush.msra.mxu0 %v285
    %509 = vmatpush.msra.mxu0 %v281
    %510 = vmatpush.msra.mxu0 %v277
    %511 = vmatpush.msra.mxu0 %v273
    %512 = vmatpush.msra.mxu0 %v269
    %513 = vmatpush.msra.mxu0 %v265
    %514 = vmatpush.msra.mxu0 %v261
    %515 = vmatpush.msra.mxu0 %v257
    %516 = vmatmul.f32.gmra.mxu0 %v459
    %v517 = vpop.f32.mrf.mxu0
    %v518 = vadd.f32 0.0, %v517
    %519 = vdwg.mxu0
    %520 = vmatpush.msra.mxu0 %v318
    %521 = vmatpush.msra.mxu0 %v314
    %522 = vmatpush.msra.mxu0 %v310
    %523 = vmatpush.msra.mxu0 %v306
    %524 = vmatpush.msra.mxu0 %v302
    %525 = vmatpush.msra.mxu0 %v298
    %526 = vmatpush.msra.mxu0 %v294
    %527 = vmatpush.msra.mxu0 %v290
    %528 = vmatpush.msra.mxu0 %v286
    %529 = vmatpush.msra.mxu0 %v282
    %530 = vmatpush.msra.mxu0 %v278
    %531 = vmatpush.msra.mxu0 %v274
    %532 = vmatpush.msra.mxu0 %v270
    %533 = vmatpush.msra.mxu0 %v266
    %534 = vmatpush.msra.mxu0 %v262
    %535 = vmatpush.msra.mxu0 %v258
    %536 = vmatmul.f32.gmra.mxu0 %v459
    %v537 = vpop.f32.mrf.mxu0
    %v538 = vadd.f32 0.0, %v537
    %539 = vdwg.mxu0
    %540 = vmatpush.msra.mxu0 %v251
    %541 = vmatpush.msra.mxu0 %v247
    %542 = vmatpush.msra.mxu0 %v243
    %543 = vmatpush.msra.mxu0 %v239
    %544 = vmatpush.msra.mxu0 %v235
    %545 = vmatpush.msra.mxu0 %v231
    %546 = vmatpush.msra.mxu0 %v227
    %547 = vmatpush.msra.mxu0 %v223
    %548 = vmatpush.msra.mxu0 %v219
    %549 = vmatpush.msra.mxu0 %v215
    %550 = vmatpush.msra.mxu0 %v211
    %551 = vmatpush.msra.mxu0 %v207
    %552 = vmatpush.msra.mxu0 %v203
    %553 = vmatpush.msra.mxu0 %v199
    %554 = vmatpush.msra.mxu0 %v195
    %555 = vmatpush.msra.mxu0 %v191
    %556 = vmatmul.f32.gmra.mxu0 %v456
    %v557 = vpop.f32.mrf.mxu0
    %v558 = vadd.f32 %v478, %v557
    %559 = vdwg.mxu0
    %560 = vmatpush.msra.mxu0 %v252
    %561 = vmatpush.msra.mxu0 %v248
    %562 = vmatpush.msra.mxu0 %v244
    %563 = vmatpush.msra.mxu0 %v240
    %564 = vmatpush.msra.mxu0 %v236
    %565 = vmatpush.msra.mxu0 %v232
    %566 = vmatpush.msra.mxu0 %v228
    %567 = vmatpush.msra.mxu0 %v224
    %568 = vmatpush.msra.mxu0 %v220
    %569 = vmatpush.msra.mxu0 %v216
    %570 = vmatpush.msra.mxu0 %v212
    %571 = vmatpush.msra.mxu0 %v208
    %572 = vmatpush.msra.mxu0 %v204
    %573 = vmatpush.msra.mxu0 %v200
    %574 = vmatpush.msra.mxu0 %v196
    %575 = vmatpush.msra.mxu0 %v192
    %576 = vmatmul.f32.gmra.mxu0 %v456
    %v577 = vpop.f32.mrf.mxu0
    %v578 = vadd.f32 %v498, %v577
    %579 = vdwg.mxu0
    %580 = vmatpush.msra.mxu0 %v253
    %581 = vmatpush.msra.mxu0 %v249
    %582 = vmatpush.msra.mxu0 %v245
    %583 = vmatpush.msra.mxu0 %v241
    %584 = vmatpush.msra.mxu0 %v237
    %585 = vmatpush.msra.mxu0 %v233
    %586 = vmatpush.msra.mxu0 %v229
    %587 = vmatpush.msra.mxu0 %v225
    %588 = vmatpush.msra.mxu0 %v221
    %589 = vmatpush.msra.mxu0 %v217
    %590 = vmatpush.msra.mxu0 %v213
    %591 = vmatpush.msra.mxu0 %v209
    %592 = vmatpush.msra.mxu0 %v205
    %593 = vmatpush.msra.mxu0 %v201
    %594 = vmatpush.msra.mxu0 %v197
    %595 = vmatpush.msra.mxu0 %v193
    %596 = vmatmul.f32.gmra.mxu0 %v456
    %v597 = vpop.f32.mrf.mxu0
    %v598 = vadd.f32 %v518, %v597
    %599 = vdwg.mxu0
    %600 = vmatpush.msra.mxu0 %v254
    %601 = vmatpush.msra.mxu0 %v250
    %602 = vmatpush.msra.mxu0 %v246
    %603 = vmatpush.msra.mxu0 %v242
    %604 = vmatpush.msra.mxu0 %v238
    %605 = vmatpush.msra.mxu0 %v234
    %606 = vmatpush.msra.mxu0 %v230
    %607 = vmatpush.msra.mxu0 %v226
    %608 = vmatpush.msra.mxu0 %v222
    %609 = vmatpush.msra.mxu0 %v218
    %610 = vmatpush.msra.mxu0 %v214
    %611 = vmatpush.msra.mxu0 %v210
    %612 = vmatpush.msra.mxu0 %v206
    %613 = vmatpush.msra.mxu0 %v202
    %614 = vmatpush.msra.mxu0 %v198
    %615 = vmatpush.msra.mxu0 %v194
    %616 = vmatmul.f32.gmra.mxu0 %v456
    %v617 = vpop.f32.mrf.mxu0
    %v618 = vadd.f32 %v538, %v617
    %619 = vdwg.mxu0
    %v620 = vadd.f32 %v558, %v321
    %v621 = vadd.f32 %v578, %v322
    %v622 = vadd.f32 %v598, %v323
    %v623 = vadd.f32 %v618, %v324
    %v624 = vtanh.pop %v620
    %v625 = vtanh.pop %v621
    %v626 = vtanh.pop %v622
    %v627 = vtanh.pop %v623
    %v628 = vmul.f32 %v624, 0.5
    %v629 = vmul.f32 %v625, 0.5
    %v630 = vmul.f32 %v626, 0.5
    %v631 = vmul.f32 %v627, 0.5
    %v632 = vadd.f32 %v628, 0.5
    %v633 = vadd.f32 %v629, 0.5
    %v634 = vadd.f32 %v630, 0.5
    %v635 = vadd.f32 %v631, 0.5
    %v636 = vsel %vm342, %v624, %v632
    %v637 = vsel %vm343, %v625, %v633
    %v638 = vsel %vm344, %v626, %v634
    %v639 = vsel %vm345, %v627, %v635
    %v640 = vld [vmem:[#allocation5] sm:$0xff]
    %v641 = vmul.f32 %v637, %v640
    %v642 = vmul.f32 %v636, %v638
    %v643 = vadd.f32 %v641, %v642
    %v644 = vtanh.pop %v643
    %v645 = vmul.f32 %v639, %v644
    %646 = vst [vmem:[#allocation5] sm:$0xff] %v643
    %647 = vst [vmem:[#allocation4] sm:$0xff] %v645
    %s648 = scalar_lea.vmem [#allocation6], 32
    %v649 = vld [vmem:[%s648] sm:$0xff]
    %v650 = vld [vmem:[%s648 + $0x8] sm:$0xff]
    %v651 = vld [vmem:[%s648 + $0x10] sm:$0xff]
    %v652 = vld [vmem:[%s648 + $0x18] sm:$0xff]
    %v653 = vld [vmem:[#allocation2] sm:$0xff]
    %654 = vmatpush.msra.mxu0 %v187
    %655 = vmatpush.msra.mxu0 %v183
    %656 = vmatpush.msra.mxu0 %v179
    %657 = vmatpush.msra.mxu0 %v175
    %658 = vmatpush.msra.mxu0 %v171
    %659 = vmatpush.msra.mxu0 %v167
    %660 = vmatpush.msra.mxu0 %v163
    %661 = vmatpush.msra.mxu0 %v159
    %662 = vmatpush.msra.mxu0 %v155
    %663 = vmatpush.msra.mxu0 %v151
    %664 = vmatpush.msra.mxu0 %v147
    %665 = vmatpush.msra.mxu0 %v143
    %666 = vmatpush.msra.mxu0 %v139
    %667 = vmatpush.msra.mxu0 %v135
    %668 = vmatpush.msra.mxu0 %v131
    %669 = vmatpush.msra.mxu0 %v127
    %670 = vmatmul.f32.gmra.mxu0 %v653
    %v671 = vpop.f32.mrf.mxu0
    %v672 = vadd.f32 0.0, %v671
    %673 = vdwg.mxu0
    %674 = vmatpush.msra.mxu0 %v188
    %675 = vmatpush.msra.mxu0 %v184
    %676 = vmatpush.msra.mxu0 %v180
    %677 = vmatpush.msra.mxu0 %v176
    %678 = vmatpush.msra.mxu0 %v172
    %679 = vmatpush.msra.mxu0 %v168
    %680 = vmatpush.msra.mxu0 %v164
    %681 = vmatpush.msra.mxu0 %v160
    %682 = vmatpush.msra.mxu0 %v156
    %683 = vmatpush.msra.mxu0 %v152
    %684 = vmatpush.msra.mxu0 %v148
    %685 = vmatpush.msra.mxu0 %v144
    %686 = vmatpush.msra.mxu0 %v140
    %687 = vmatpush.msra.mxu0 %v136
    %688 = vmatpush.msra.mxu0 %v132
    %689 = vmatpush.msra.mxu0 %v128
    %690 = vmatmul.f32.gmra.mxu0 %v653
    %v691 = vpop.f32.mrf.mxu0
    %v692 = vadd.f32 0.0, %v691
    %693 = vdwg.mxu0
    %694 = vmatpush.msra.mxu0 %v189
    %695 = vmatpush.msra.mxu0 %v185
    %696 = vmatpush.msra.mxu0 %v181
    %697 = vmatpush.msra.mxu0 %v177
    %698 = vmatpush.msra.mxu0 %v173
    %699 = vmatpush.msra.mxu0 %v169
    %700 = vmatpush.msra.mxu0 %v165
    %701 = vmatpush.msra.mxu0 %v161
    %702 = vmatpush.msra.mxu0 %v157
    %703 = vmatpush.msra.mxu0 %v153
    %704 = vmatpush.msra.mxu0 %v149
    %705 = vmatpush.msra.mxu0 %v145
    %706 = vmatpush.msra.mxu0 %v141
    %707 = vmatpush.msra.mxu0 %v137
    %708 = vmatpush.msra.mxu0 %v133
    %709 = vmatpush.msra.mxu0 %v129
    %710 = vmatmul.f32.gmra.mxu0 %v653
    %v711 = vpop.f32.mrf.mxu0
    %v712 = vadd.f32 0.0, %v711
    %713 = vdwg.mxu0
    %714 = vmatpush.msra.mxu0 %v190
    %715 = vmatpush.msra.mxu0 %v186
    %716 = vmatpush.msra.mxu0 %v182
    %717 = vmatpush.msra.mxu0 %v178
    %718 = vmatpush.msra.mxu0 %v174
    %719 = vmatpush.msra.mxu0 %v170
    %720 = vmatpush.msra.mxu0 %v166
    %721 = vmatpush.msra.mxu0 %v162
    %722 = vmatpush.msra.mxu0 %v158
    %723 = vmatpush.msra.mxu0 %v154
    %724 = vmatpush.msra.mxu0 %v150
    %725 = vmatpush.msra.mxu0 %v146
    %726 = vmatpush.msra.mxu0 %v142
    %727 = vmatpush.msra.mxu0 %v138
    %728 = vmatpush.msra.mxu0 %v134
    %729 = vmatpush.msra.mxu0 %v130
    %730 = vmatmul.f32.gmra.mxu0 %v653
    %v731 = vpop.f32.mrf.mxu0
    %v732 = vadd.f32 0.0, %v731
    %733 = vdwg.mxu0
    %v734 = vadd.f32 %v649, %v672
    %v735 = vadd.f32 %v650, %v692
    %v736 = vadd.f32 %v651, %v712
    %v737 = vadd.f32 %v652, %v732
    %v738 = vtanh.pop %v734
    %v739 = vtanh.pop %v735
    %v740 = vtanh.pop %v736
    %v741 = vtanh.pop %v737
    %v742 = vmul.f32 %v738, 0.5
    %v743 = vmul.f32 %v739, 0.5
    %v744 = vmul.f32 %v740, 0.5
    %v745 = vmul.f32 %v741, 0.5
    %v746 = vadd.f32 %v742, 0.5
    %v747 = vadd.f32 %v743, 0.5
    %v748 = vadd.f32 %v744, 0.5
    %v749 = vadd.f32 %v745, 0.5
    %v750 = vsel %vm342, %v738, %v746
    %v751 = vsel %vm343, %v739, %v747
    %v752 = vsel %vm344, %v740, %v748
    %v753 = vsel %vm345, %v741, %v749
    %v754 = vld [vmem:[#allocation3] sm:$0xff]
    %v755 = vmul.f32 %v751, %v754
    %v756 = vmul.f32 %v750, %v752
    %v757 = vadd.f32 %v755, %v756
    %v758 = vtanh.pop %v757
    %v759 = vmul.f32 %v753, %v758
    %760 = vst [vmem:[#allocation3] sm:$0xff] %v757
    %761 = vst [vmem:[#allocation2] sm:$0xff] %v759
    %v762 = vld [vmem:[#allocation4] sm:$0xff]
    %763 = vmatpush.msra.mxu0 %v315
    %764 = vmatpush.msra.mxu0 %v311
    %765 = vmatpush.msra.mxu0 %v307
    %766 = vmatpush.msra.mxu0 %v303
    %767 = vmatpush.msra.mxu0 %v299
    %768 = vmatpush.msra.mxu0 %v295
    %769 = vmatpush.msra.mxu0 %v291
    %770 = vmatpush.msra.mxu0 %v287
    %771 = vmatpush.msra.mxu0 %v283
    %772 = vmatpush.msra.mxu0 %v279
    %773 = vmatpush.msra.mxu0 %v275
    %774 = vmatpush.msra.mxu0 %v271
    %775 = vmatpush.msra.mxu0 %v267
    %776 = vmatpush.msra.mxu0 %v263
    %777 = vmatpush.msra.mxu0 %v259
    %778 = vmatpush.msra.mxu0 %v255
    %779 = vmatmul.f32.gmra.mxu0 %v762
    %v780 = vpop.f32.mrf.mxu0
    %v781 = vadd.f32 0.0, %v780
    %782 = vdwg.mxu0
    %783 = vmatpush.msra.mxu0 %v316
    %784 = vmatpush.msra.mxu0 %v312
    %785 = vmatpush.msra.mxu0 %v308
    %786 = vmatpush.msra.mxu0 %v304
    %787 = vmatpush.msra.mxu0 %v300
    %788 = vmatpush.msra.mxu0 %v296
    %789 = vmatpush.msra.mxu0 %v292
    %790 = vmatpush.msra.mxu0 %v288
    %791 = vmatpush.msra.mxu0 %v284
    %792 = vmatpush.msra.mxu0 %v280
    %793 = vmatpush.msra.mxu0 %v276
    %794 = vmatpush.msra.mxu0 %v272
    %795 = vmatpush.msra.mxu0 %v268
    %796 = vmatpush.msra.mxu0 %v264
    %797 = vmatpush.msra.mxu0 %v260
    %798 = vmatpush.msra.mxu0 %v256
    %799 = vmatmul.f32.gmra.mxu0 %v762
    %v800 = vpop.f32.mrf.mxu0
    %v801 = vadd.f32 0.0, %v800
    %802 = vdwg.mxu0
    %803 = vmatpush.msra.mxu0 %v317
    %804 = vmatpush.msra.mxu0 %v313
    %805 = vmatpush.msra.mxu0 %v309
    %806 = vmatpush.msra.mxu0 %v305
    %807 = vmatpush.msra.mxu0 %v301
    %808 = vmatpush.msra.mxu0 %v297
    %809 = vmatpush.msra.mxu0 %v293
    %810 = vmatpush.msra.mxu0 %v289
    %811 = vmatpush.msra.mxu0 %v285
    %812 = vmatpush.msra.mxu0 %v281
    %813 = vmatpush.msra.mxu0 %v277
    %814 = vmatpush.msra.mxu0 %v273
    %815 = vmatpush.msra.mxu0 %v269
    %816 = vmatpush.msra.mxu0 %v265
    %817 = vmatpush.msra.mxu0 %v261
    %818 = vmatpush.msra.mxu0 %v257
    %819 = vmatmul.f32.gmra.mxu0 %v762
    %v820 = vpop.f32.mrf.mxu0
    %v821 = vadd.f32 0.0, %v820
    %822 = vdwg.mxu0
    %823 = vmatpush.msra.mxu0 %v318
    %824 = vmatpush.msra.mxu0 %v314
    %825 = vmatpush.msra.mxu0 %v310
    %826 = vmatpush.msra.mxu0 %v306
    %827 = vmatpush.msra.mxu0 %v302
    %828 = vmatpush.msra.mxu0 %v298
    %829 = vmatpush.msra.mxu0 %v294
    %830 = vmatpush.msra.mxu0 %v290
    %831 = vmatpush.msra.mxu0 %v286
    %832 = vmatpush.msra.mxu0 %v282
    %833 = vmatpush.msra.mxu0 %v278
    %834 = vmatpush.msra.mxu0 %v274
    %835 = vmatpush.msra.mxu0 %v270
    %836 = vmatpush.msra.mxu0 %v266
    %837 = vmatpush.msra.mxu0 %v262
    %838 = vmatpush.msra.mxu0 %v258
    %839 = vmatmul.f32.gmra.mxu0 %v762
    %v840 = vpop.f32.mrf.mxu0
    %v841 = vadd.f32 0.0, %v840
    %842 = vdwg.mxu0
    %843 = vmatpush.msra.mxu0 %v251
    %844 = vmatpush.msra.mxu0 %v247
    %845 = vmatpush.msra.mxu0 %v243
    %846 = vmatpush.msra.mxu0 %v239
    %847 = vmatpush.msra.mxu0 %v235
    %848 = vmatpush.msra.mxu0 %v231
    %849 = vmatpush.msra.mxu0 %v227
    %850 = vmatpush.msra.mxu0 %v223
    %851 = vmatpush.msra.mxu0 %v219
    %852 = vmatpush.msra.mxu0 %v215
    %853 = vmatpush.msra.mxu0 %v211
    %854 = vmatpush.msra.mxu0 %v207
    %855 = vmatpush.msra.mxu0 %v203
    %856 = vmatpush.msra.mxu0 %v199
    %857 = vmatpush.msra.mxu0 %v195
    %858 = vmatpush.msra.mxu0 %v191
    %859 = vmatmul.f32.gmra.mxu0 %v759
    %v860 = vpop.f32.mrf.mxu0
    %v861 = vadd.f32 %v781, %v860
    %862 = vdwg.mxu0
    %863 = vmatpush.msra.mxu0 %v252
    %864 = vmatpush.msra.mxu0 %v248
    %865 = vmatpush.msra.mxu0 %v244
    %866 = vmatpush.msra.mxu0 %v240
    %867 = vmatpush.msra.mxu0 %v236
    %868 = vmatpush.msra.mxu0 %v232
    %869 = vmatpush.msra.mxu0 %v228
    %870 = vmatpush.msra.mxu0 %v224
    %871 = vmatpush.msra.mxu0 %v220
    %872 = vmatpush.msra.mxu0 %v216
    %873 = vmatpush.msra.mxu0 %v212
    %874 = vmatpush.msra.mxu0 %v208
    %875 = vmatpush.msra.mxu0 %v204
    %876 = vmatpush.msra.mxu0 %v200
    %877 = vmatpush.msra.mxu0 %v196
    %878 = vmatpush.msra.mxu0 %v192
    %879 = vmatmul.f32.gmra.mxu0 %v759
    %v880 = vpop.f32.mrf.mxu0
    %v881 = vadd.f32 %v801, %v880
    %882 = vdwg.mxu0
    %883 = vmatpush.msra.mxu0 %v253
    %884 = vmatpush.msra.mxu0 %v249
    %885 = vmatpush.msra.mxu0 %v245
    %886 = vmatpush.msra.mxu0 %v241
    %887 = vmatpush.msra.mxu0 %v237
    %888 = vmatpush.msra.mxu0 %v233
    %889 = vmatpush.msra.mxu0 %v229
    %890 = vmatpush.msra.mxu0 %v225
    %891 = vmatpush.msra.mxu0 %v221
    %892 = vmatpush.msra.mxu0 %v217
    %893 = vmatpush.msra.mxu0 %v213
    %894 = vmatpush.msra.mxu0 %v209
    %895 = vmatpush.msra.mxu0 %v205
    %896 = vmatpush.msra.mxu0 %v201
    %897 = vmatpush.msra.mxu0 %v197
    %898 = vmatpush.msra.mxu0 %v193
    %899 = vmatmul.f32.gmra.mxu0 %v759
    %v900 = vpop.f32.mrf.mxu0
    %v901 = vadd.f32 %v821, %v900
    %902 = vdwg.mxu0
    %903 = vmatpush.msra.mxu0 %v254
    %904 = vmatpush.msra.mxu0 %v250
    %905 = vmatpush.msra.mxu0 %v246
    %906 = vmatpush.msra.mxu0 %v242
    %907 = vmatpush.msra.mxu0 %v238
    %908 = vmatpush.msra.mxu0 %v234
    %909 = vmatpush.msra.mxu0 %v230
    %910 = vmatpush.msra.mxu0 %v226
    %911 = vmatpush.msra.mxu0 %v222
    %912 = vmatpush.msra.mxu0 %v218
    %913 = vmatpush.msra.mxu0 %v214
    %914 = vmatpush.msra.mxu0 %v210
    %915 = vmatpush.msra.mxu0 %v206
    %916 = vmatpush.msra.mxu0 %v202
    %917 = vmatpush.msra.mxu0 %v198
    %918 = vmatpush.msra.mxu0 %v194
    %919 = vmatmul.f32.gmra.mxu0 %v759
    %v920 = vpop.f32.mrf.mxu0
    %v921 = vadd.f32 %v841, %v920
    %922 = vdwg.mxu0
    %v923 = vadd.f32 %v861, %v321
    %v924 = vadd.f32 %v881, %v322
    %v925 = vadd.f32 %v901, %v323
    %v926 = vadd.f32 %v921, %v324
    %v927 = vtanh.pop %v923
    %v928 = vtanh.pop %v924
    %v929 = vtanh.pop %v925
    %v930 = vtanh.pop %v926
    %v931 = vmul.f32 %v927, 0.5
    %v932 = vmul.f32 %v928, 0.5
    %v933 = vmul.f32 %v929, 0.5
    %v934 = vmul.f32 %v930, 0.5
    %v935 = vadd.f32 %v931, 0.5
    %v936 = vadd.f32 %v932, 0.5
    %v937 = vadd.f32 %v933, 0.5
    %v938 = vadd.f32 %v934, 0.5
    %v939 = vsel %vm342, %v927, %v935
    %v940 = vsel %vm343, %v928, %v936
    %v941 = vsel %vm344, %v929, %v937
    %v942 = vsel %vm345, %v930, %v938
    %v943 = vld [vmem:[#allocation5] sm:$0xff]
    %v944 = vmul.f32 %v940, %v943
    %v945 = vmul.f32 %v939, %v941
    %v946 = vadd.f32 %v944, %v945
    %v947 = vtanh.pop %v946
    %v948 = vmul.f32 %v942, %v947
    %949 = vst [vmem:[#allocation5] sm:$0xff] %v946
    %950 = vst [vmem:[#allocation4] sm:$0xff] %v948
    %s951 = scalar_lea.vmem [#allocation6], 64
    %v952 = vld [vmem:[%s951] sm:$0xff]
    %v953 = vld [vmem:[%s951 + $0x8] sm:$0xff]
    %v954 = vld [vmem:[%s951 + $0x10] sm:$0xff]
    %v955 = vld [vmem:[%s951 + $0x18] sm:$0xff]
    %v956 = vld [vmem:[#allocation2] sm:$0xff]
    %957 = vmatpush.msra.mxu0 %v187
    %958 = vmatpush.msra.mxu0 %v183
    %959 = vmatpush.msra.mxu0 %v179
    %960 = vmatpush.msra.mxu0 %v175
    %961 = vmatpush.msra.mxu0 %v171
    %962 = vmatpush.msra.mxu0 %v167
    %963 = vmatpush.msra.mxu0 %v163
    %964 = vmatpush.msra.mxu0 %v159
    %965 = vmatpush.msra.mxu0 %v155
    %966 = vmatpush.msra.mxu0 %v151
    %967 = vmatpush.msra.mxu0 %v147
    %968 = vmatpush.msra.mxu0 %v143
    %969 = vmatpush.msra.mxu0 %v139
    %970 = vmatpush.msra.mxu0 %v135
    %971 = vmatpush.msra.mxu0 %v131
    %972 = vmatpush.msra.mxu0 %v127
    %973 = vmatmul.f32.gmra.mxu0 %v956
    %v974 = vpop.f32.mrf.mxu0
    %v975 = vadd.f32 0.0, %v974
    %976 = vdwg.mxu0
    %977 = vmatpush.msra.mxu0 %v188
    %978 = vmatpush.msra.mxu0 %v184
    %979 = vmatpush.msra.mxu0 %v180
    %980 = vmatpush.msra.mxu0 %v176
    %981 = vmatpush.msra.mxu0 %v172
    %982 = vmatpush.msra.mxu0 %v168
    %983 = vmatpush.msra.mxu0 %v164
    %984 = vmatpush.msra.mxu0 %v160
    %985 = vmatpush.msra.mxu0 %v156
    %986 = vmatpush.msra.mxu0 %v152
    %987 = vmatpush.msra.mxu0 %v148
    %988 = vmatpush.msra.mxu0 %v144
    %989 = vmatpush.msra.mxu0 %v140
    %990 = vmatpush.msra.mxu0 %v136
    %991 = vmatpush.msra.mxu0 %v132
    %992 = vmatpush.msra.mxu0 %v128
    %993 = vmatmul.f32.gmra.mxu0 %v956
    %v994 = vpop.f32.mrf.mxu0
    %v995 = vadd.f32 0.0, %v994
    %996 = vdwg.mxu0
    %997 = vmatpush.msra.mxu0 %v189
    %998 = vmatpush.msra.mxu0 %v185
    %999 = vmatpush.msra.mxu0 %v181
    %1000 = vmatpush.msra.mxu0 %v177
    %1001 = vmatpush.msra.mxu0 %v173
    %1002 = vmatpush.msra.mxu0 %v169
    %1003 = vmatpush.msra.mxu0 %v165
    %1004 = vmatpush.msra.mxu0 %v161
    %1005 = vmatpush.msra.mxu0 %v157
    %1006 = vmatpush.msra.mxu0 %v153
    %1007 = vmatpush.msra.mxu0 %v149
    %1008 = vmatpush.msra.mxu0 %v145
    %1009 = vmatpush.msra.mxu0 %v141
    %1010 = vmatpush.msra.mxu0 %v137
    %1011 = vmatpush.msra.mxu0 %v133
    %1012 = vmatpush.msra.mxu0 %v129
    %1013 = vmatmul.f32.gmra.mxu0 %v956
    %v1014 = vpop.f32.mrf.mxu0
    %v1015 = vadd.f32 0.0, %v1014
    %1016 = vdwg.mxu0
    %1017 = vmatpush.msra.mxu0 %v190
    %1018 = vmatpush.msra.mxu0 %v186
    %1019 = vmatpush.msra.mxu0 %v182
    %1020 = vmatpush.msra.mxu0 %v178
    %1021 = vmatpush.msra.mxu0 %v174
    %1022 = vmatpush.msra.mxu0 %v170
    %1023 = vmatpush.msra.mxu0 %v166
    %1024 = vmatpush.msra.mxu0 %v162
    %1025 = vmatpush.msra.mxu0 %v158
    %1026 = vmatpush.msra.mxu0 %v154
    %1027 = vmatpush.msra.mxu0 %v150
    %1028 = vmatpush.msra.mxu0 %v146
    %1029 = vmatpush.msra.mxu0 %v142
    %1030 = vmatpush.msra.mxu0 %v138
    %1031 = vmatpush.msra.mxu0 %v134
    %1032 = vmatpush.msra.mxu0 %v130
    %1033 = vmatmul.f32.gmra.mxu0 %v956
    %v1034 = vpop.f32.mrf.mxu0
    %v1035 = vadd.f32 0.0, %v1034
    %1036 = vdwg.mxu0
    %v1037 = vadd.f32 %v952, %v975
    %v1038 = vadd.f32 %v953, %v995
    %v1039 = vadd.f32 %v954, %v1015
    %v1040 = vadd.f32 %v955, %v1035
    %v1041 = vtanh.pop %v1037
    %v1042 = vtanh.pop %v1038
    %v1043 = vtanh.pop %v1039
    %v1044 = vtanh.pop %v1040
    %v1045 = vmul.f32 %v1041, 0.5
    %v1046 = vmul.f32 %v1042, 0.5
    %v1047 = vmul.f32 %v1043, 0.5
    %v1048 = vmul.f32 %v1044, 0.5
    %v1049 = vadd.f32 %v1045, 0.5
    %v1050 = vadd.f32 %v1046, 0.5
    %v1051 = vadd.f32 %v1047, 0.5
    %v1052 = vadd.f32 %v1048, 0.5
    %v1053 = vsel %vm342, %v1041, %v1049
    %v1054 = vsel %vm343, %v1042, %v1050
    %v1055 = vsel %vm344, %v1043, %v1051
    %v1056 = vsel %vm345, %v1044, %v1052
    %v1057 = vld [vmem:[#allocation3] sm:$0xff]
    %v1058 = vmul.f32 %v1054, %v1057
    %v1059 = vmul.f32 %v1053, %v1055
    %v1060 = vadd.f32 %v1058, %v1059
    %v1061 = vtanh.pop %v1060
    %v1062 = vmul.f32 %v1056, %v1061
    %1063 = vst [vmem:[#allocation3] sm:$0xff] %v1060
    %1064 = vst [vmem:[#allocation2] sm:$0xff] %v1062
    %v1065 = vld [vmem:[#allocation4] sm:$0xff]
    %1066 = vmatpush.msra.mxu0 %v315
    %1067 = vmatpush.msra.mxu0 %v311
    %1068 = vmatpush.msra.mxu0 %v307
    %1069 = vmatpush.msra.mxu0 %v303
    %1070 = vmatpush.msra.mxu0 %v299
    %1071 = vmatpush.msra.mxu0 %v295
    %1072 = vmatpush.msra.mxu0 %v291
    %1073 = vmatpush.msra.mxu0 %v287
    %1074 = vmatpush.msra.mxu0 %v283
    %1075 = vmatpush.msra.mxu0 %v279
    %1076 = vmatpush.msra.mxu0 %v275
    %1077 = vmatpush.msra.mxu0 %v271
    %1078 = vmatpush.msra.mxu0 %v267
    %1079 = vmatpush.msra.mxu0 %v263
    %1080 = vmatpush.msra.mxu0 %v259
    %1081 = vmatpush.msra.mxu0 %v255
    %1082 = vmatmul.f32.gmra.mxu0 %v1065
    %v1083 = vpop.f32.mrf.mxu0
    %v1084 = vadd.f32 0.0, %v1083
    %1085 = vdwg.mxu0
    %1086 = vmatpush.msra.mxu0 %v316
    %1087 = vmatpush.msra.mxu0 %v312
    %1088 = vmatpush.msra.mxu0 %v308
    %1089 = vmatpush.msra.mxu0 %v304
    %1090 = vmatpush.msra.mxu0 %v300
    %1091 = vmatpush.msra.mxu0 %v296
    %1092 = vmatpush.msra.mxu0 %v292
    %1093 = vmatpush.msra.mxu0 %v288
    %1094 = vmatpush.msra.mxu0 %v284
    %1095 = vmatpush.msra.mxu0 %v280
    %1096 = vmatpush.msra.mxu0 %v276
    %1097 = vmatpush.msra.mxu0 %v272
    %1098 = vmatpush.msra.mxu0 %v268
    %1099 = vmatpush.msra.mxu0 %v264
    %1100 = vmatpush.msra.mxu0 %v260
    %1101 = vmatpush.msra.mxu0 %v256
    %1102 = vmatmul.f32.gmra.mxu0 %v1065
    %v1103 = vpop.f32.mrf.mxu0
    %v1104 = vadd.f32 0.0, %v1103
    %1105 = vdwg.mxu0
    %1106 = vmatpush.msra.mxu0 %v317
    %1107 = vmatpush.msra.mxu0 %v313
    %1108 = vmatpush.msra.mxu0 %v309
    %1109 = vmatpush.msra.mxu0 %v305
    %1110 = vmatpush.msra.mxu0 %v301
    %1111 = vmatpush.msra.mxu0 %v297
    %1112 = vmatpush.msra.mxu0 %v293
    %1113 = vmatpush.msra.mxu0 %v289
    %1114 = vmatpush.msra.mxu0 %v285
    %1115 = vmatpush.msra.mxu0 %v281
    %1116 = vmatpush.msra.mxu0 %v277
    %1117 = vmatpush.msra.mxu0 %v273
    %1118 = vmatpush.msra.mxu0 %v269
    %1119 = vmatpush.msra.mxu0 %v265
    %1120 = vmatpush.msra.mxu0 %v261
    %1121 = vmatpush.msra.mxu0 %v257
    %1122 = vmatmul.f32.gmra.mxu0 %v1065
    %v1123 = vpop.f32.mrf.mxu0
    %v1124 = vadd.f32 0.0, %v1123
    %1125 = vdwg.mxu0
    %1126 = vmatpush.msra.mxu0 %v318
    %1127 = vmatpush.msra.mxu0 %v314
    %1128 = vmatpush.msra.mxu0 %v310
    %1129 = vmatpush.msra.mxu0 %v306
    %1130 = vmatpush.msra.mxu0 %v302
    %1131 = vmatpush.msra.mxu0 %v298
    %1132 = vmatpush.msra.mxu0 %v294
    %1133 = vmatpush.msra.mxu0 %v290
    %1134 = vmatpush.msra.mxu0 %v286
    %1135 = vmatpush.msra.mxu0 %v282
    %1136 = vmatpush.msra.mxu0 %v278
    %1137 = vmatpush.msra.mxu0 %v274
    %1138 = vmatpush.msra.mxu0 %v270
    %1139 = vmatpush.msra.mxu0 %v266
    %1140 = vmatpush.msra.mxu0 %v262
    %1141 = vmatpush.msra.mxu0 %v258
    %1142 = vmatmul.f32.gmra.mxu0 %v1065
    %v1143 = vpop.f32.mrf.mxu0
    %v1144 = vadd.f32 0.0, %v1143
    %1145 = vdwg.mxu0
    %1146 = vmatpush.msra.mxu0 %v251
    %1147 = vmatpush.msra.mxu0 %v247
    %1148 = vmatpush.msra.mxu0 %v243
    %1149 = vmatpush.msra.mxu0 %v239
    %1150 = vmatpush.msra.mxu0 %v235
    %1151 = vmatpush.msra.mxu0 %v231
    %1152 = vmatpush.msra.mxu0 %v227
    %1153 = vmatpush.msra.mxu0 %v223
    %1154 = vmatpush.msra.mxu0 %v219
    %1155 = vmatpush.msra.mxu0 %v215
    %1156 = vmatpush.msra.mxu0 %v211
    %1157 = vmatpush.msra.mxu0 %v207
    %1158 = vmatpush.msra.mxu0 %v203
    %1159 = vmatpush.msra.mxu0 %v199
    %1160 = vmatpush.msra.mxu0 %v195
    %1161 = vmatpush.msra.mxu0 %v191
    %1162 = vmatmul.f32.gmra.mxu0 %v1062
    %v1163 = vpop.f32.mrf.mxu0
    %v1164 = vadd.f32 %v1084, %v1163
    %1165 = vdwg.mxu0
    %1166 = vmatpush.msra.mxu0 %v252
    %1167 = vmatpush.msra.mxu0 %v248
    %1168 = vmatpush.msra.mxu0 %v244
    %1169 = vmatpush.msra.mxu0 %v240
    %1170 = vmatpush.msra.mxu0 %v236
    %1171 = vmatpush.msra.mxu0 %v232
    %1172 = vmatpush.msra.mxu0 %v228
    %1173 = vmatpush.msra.mxu0 %v224
    %1174 = vmatpush.msra.mxu0 %v220
    %1175 = vmatpush.msra.mxu0 %v216
    %1176 = vmatpush.msra.mxu0 %v212
    %1177 = vmatpush.msra.mxu0 %v208
    %1178 = vmatpush.msra.mxu0 %v204
    %1179 = vmatpush.msra.mxu0 %v200
    %1180 = vmatpush.msra.mxu0 %v196
    %1181 = vmatpush.msra.mxu0 %v192
    %1182 = vmatmul.f32.gmra.mxu0 %v1062
    %v1183 = vpop.f32.mrf.mxu0
    %v1184 = vadd.f32 %v1104, %v1183
    %1185 = vdwg.mxu0
    %1186 = vmatpush.msra.mxu0 %v253
    %1187 = vmatpush.msra.mxu0 %v249
    %1188 = vmatpush.msra.mxu0 %v245
    %1189 = vmatpush.msra.mxu0 %v241
    %1190 = vmatpush.msra.mxu0 %v237
    %1191 = vmatpush.msra.mxu0 %v233
    %1192 = vmatpush.msra.mxu0 %v229
    %1193 = vmatpush.msra.mxu0 %v225
    %1194 = vmatpush.msra.mxu0 %v221
    %1195 = vmatpush.msra.mxu0 %v217
    %1196 = vmatpush.msra.mxu0 %v213
    %1197 = vmatpush.msra.mxu0 %v209
    %1198 = vmatpush.msra.mxu0 %v205
    %1199 = vmatpush.msra.mxu0 %v201
    %1200 = vmatpush.msra.mxu0 %v197
    %1201 = vmatpush.msra.mxu0 %v193
    %1202 = vmatmul.f32.gmra.mxu0 %v1062
    %v1203 = vpop.f32.mrf.mxu0
    %v1204 = vadd.f32 %v1124, %v1203
    %1205 = vdwg.mxu0
    %1206 = vmatpush.msra.mxu0 %v254
    %1207 = vmatpush.msra.mxu0 %v250
    %1208 = vmatpush.msra.mxu0 %v246
    %1209 = vmatpush.msra.mxu0 %v242
    %1210 = vmatpush.msra.mxu0 %v238
    %1211 = vmatpush.msra.mxu0 %v234
    %1212 = vmatpush.msra.mxu0 %v230
    %1213 = vmatpush.msra.mxu0 %v226
    %1214 = vmatpush.msra.mxu0 %v222
    %1215 = vmatpush.msra.mxu0 %v218
    %1216 = vmatpush.msra.mxu0 %v214
    %1217 = vmatpush.msra.mxu0 %v210
    %1218 = vmatpush.msra.mxu0 %v206
    %1219 = vmatpush.msra.mxu0 %v202
    %1220 = vmatpush.msra.mxu0 %v198
    %1221 = vmatpush.msra.mxu0 %v194
    %1222 = vmatmul.f32.gmra.mxu0 %v1062
    %v1223 = vpop.f32.mrf.mxu0
    %v1224 = vadd.f32 %v1144, %v1223
    %1225 = vdwg.mxu0
    %v1226 = vadd.f32 %v1164, %v321
    %v1227 = vadd.f32 %v1184, %v322
    %v1228 = vadd.f32 %v1204, %v323
    %v1229 = vadd.f32 %v1224, %v324
    %v1230 = vtanh.pop %v1226
    %v1231 = vtanh.pop %v1227
    %v1232 = vtanh.pop %v1228
    %v1233 = vtanh.pop %v1229
    %v1234 = vmul.f32 %v1230, 0.5
    %v1235 = vmul.f32 %v1231, 0.5
    %v1236 = vmul.f32 %v1232, 0.5
    %v1237 = vmul.f32 %v1233, 0.5
    %v1238 = vadd.f32 %v1234, 0.5
    %v1239 = vadd.f32 %v1235, 0.5
    %v1240 = vadd.f32 %v1236, 0.5
    %v1241 = vadd.f32 %v1237, 0.5
    %v1242 = vsel %vm342, %v1230, %v1238
    %v1243 = vsel %vm343, %v1231, %v1239
    %v1244 = vsel %vm344, %v1232, %v1240
    %v1245 = vsel %vm345, %v1233, %v1241
    %v1246 = vld [vmem:[#allocation5] sm:$0xff]
    %v1247 = vmul.f32 %v1243, %v1246
    %v1248 = vmul.f32 %v1242, %v1244
    %v1249 = vadd.f32 %v1247, %v1248
    %v1250 = vtanh.pop %v1249
    %v1251 = vmul.f32 %v1245, %v1250
    %1252 = vst [vmem:[#allocation5] sm:$0xff] %v1249
    %1253 = vst [vmem:[#allocation4] sm:$0xff] %v1251
    %s1254 = scalar_lea.vmem [#allocation6], 96
    %v1255 = vld [vmem:[%s1254] sm:$0xff]
    %v1256 = vld [vmem:[%s1254 + $0x8] sm:$0xff]
    %v1257 = vld [vmem:[%s1254 + $0x10] sm:$0xff]
    %v1258 = vld [vmem:[%s1254 + $0x18] sm:$0xff]
    %v1259 = vld [vmem:[#allocation2] sm:$0xff]
    %1260 = vmatpush.msra.mxu0 %v187
    %1261 = vmatpush.msra.mxu0 %v183
    %1262 = vmatpush.msra.mxu0 %v179
    %1263 = vmatpush.msra.mxu0 %v175
    %1264 = vmatpush.msra.mxu0 %v171
    %1265 = vmatpush.msra.mxu0 %v167
    %1266 = vmatpush.msra.mxu0 %v163
    %1267 = vmatpush.msra.mxu0 %v159
    %1268 = vmatpush.msra.mxu0 %v155
    %1269 = vmatpush.msra.mxu0 %v151
    %1270 = vmatpush.msra.mxu0 %v147
    %1271 = vmatpush.msra.mxu0 %v143
    %1272 = vmatpush.msra.mxu0 %v139
    %1273 = vmatpush.msra.mxu0 %v135
    %1274 = vmatpush.msra.mxu0 %v131
    %1275 = vmatpush.msra.mxu0 %v127
    %1276 = vmatmul.f32.gmra.mxu0 %v1259
    %v1277 = vpop.f32.mrf.mxu0
    %v1278 = vadd.f32 0.0, %v1277
    %1279 = vdwg.mxu0
    %1280 = vmatpush.msra.mxu0 %v188
    %1281 = vmatpush.msra.mxu0 %v184
    %1282 = vmatpush.msra.mxu0 %v180
    %1283 = vmatpush.msra.mxu0 %v176
    %1284 = vmatpush.msra.mxu0 %v172
    %1285 = vmatpush.msra.mxu0 %v168
    %1286 = vmatpush.msra.mxu0 %v164
    %1287 = vmatpush.msra.mxu0 %v160
    %1288 = vmatpush.msra.mxu0 %v156
    %1289 = vmatpush.msra.mxu0 %v152
    %1290 = vmatpush.msra.mxu0 %v148
    %1291 = vmatpush.msra.mxu0 %v144
    %1292 = vmatpush.msra.mxu0 %v140
    %1293 = vmatpush.msra.mxu0 %v136
    %1294 = vmatpush.msra.mxu0 %v132
    %1295 = vmatpush.msra.mxu0 %v128
    %1296 = vmatmul.f32.gmra.mxu0 %v1259
    %v1297 = vpop.f32.mrf.mxu0
    %v1298 = vadd.f32 0.0, %v1297
    %1299 = vdwg.mxu0
    %1300 = vmatpush.msra.mxu0 %v189
    %1301 = vmatpush.msra.mxu0 %v185
    %1302 = vmatpush.msra.mxu0 %v181
    %1303 = vmatpush.msra.mxu0 %v177
    %1304 = vmatpush.msra.mxu0 %v173
    %1305 = vmatpush.msra.mxu0 %v169
    %1306 = vmatpush.msra.mxu0 %v165
    %1307 = vmatpush.msra.mxu0 %v161
    %1308 = vmatpush.msra.mxu0 %v157
    %1309 = vmatpush.msra.mxu0 %v153
    %1310 = vmatpush.msra.mxu0 %v149
    %1311 = vmatpush.msra.mxu0 %v145
    %1312 = vmatpush.msra.mxu0 %v141
    %1313 = vmatpush.msra.mxu0 %v137
    %1314 = vmatpush.msra.mxu0 %v133
    %1315 = vmatpush.msra.mxu0 %v129
    %1316 = vmatmul.f32.gmra.mxu0 %v1259
    %v1317 = vpop.f32.mrf.mxu0
    %v1318 = vadd.f32 0.0, %v1317
    %1319 = vdwg.mxu0
    %1320 = vmatpush.msra.mxu0 %v190
    %1321 = vmatpush.msra.mxu0 %v186
    %1322 = vmatpush.msra.mxu0 %v182
    %1323 = vmatpush.msra.mxu0 %v178
    %1324 = vmatpush.msra.mxu0 %v174
    %1325 = vmatpush.msra.mxu0 %v170
    %1326 = vmatpush.msra.mxu0 %v166
    %1327 = vmatpush.msra.mxu0 %v162
    %1328 = vmatpush.msra.mxu0 %v158
    %1329 = vmatpush.msra.mxu0 %v154
    %1330 = vmatpush.msra.mxu0 %v150
    %1331 = vmatpush.msra.mxu0 %v146
    %1332 = vmatpush.msra.mxu0 %v142
    %1333 = vmatpush.msra.mxu0 %v138
    %1334 = vmatpush.msra.mxu0 %v134
    %1335 = vmatpush.msra.mxu0 %v130
    %1336 = vmatmul.f32.gmra.mxu0 %v1259
    %v1337 = vpop.f32.mrf.mxu0
    %v1338 = vadd.f32 0.0, %v1337
    %1339 = vdwg.mxu0
    %v1340 = vadd.f32 %v1255, %v1278
    %v1341 = vadd.f32 %v1256, %v1298
    %v1342 = vadd.f32 %v1257, %v1318
    %v1343 = vadd.f32 %v1258, %v1338
    %v1344 = vtanh.pop %v1340
    %v1345 = vtanh.pop %v1341
    %v1346 = vtanh.pop %v1342
    %v1347 = vtanh.pop %v1343
    %v1348 = vmul.f32 %v1344, 0.5
    %v1349 = vmul.f32 %v1345, 0.5
    %v1350 = vmul.f32 %v1346, 0.5
    %v1351 = vmul.f32 %v1347, 0.5
    %v1352 = vadd.f32 %v1348, 0.5
    %v1353 = vadd.f32 %v1349, 0.5
    %v1354 = vadd.f32 %v1350, 0.5
    %v1355 = vadd.f32 %v1351, 0.5
    %v1356 = vsel %vm342, %v1344, %v1352
    %v1357 = vsel %vm343, %v1345, %v1353
    %v1358 = vsel %vm344, %v1346, %v1354
    %v1359 = vsel %vm345, %v1347, %v1355
    %v1360 = vld [vmem:[#allocation3] sm:$0xff]
    %v1361 = vmul.f32 %v1357, %v1360
    %v1362 = vmul.f32 %v1356, %v1358
    %v1363 = vadd.f32 %v1361, %v1362
    %v1364 = vtanh.pop %v1363
    %v1365 = vmul.f32 %v1359, %v1364
    %1366 = vst [vmem:[#allocation3] sm:$0xff] %v1363
    %1367 = vst [vmem:[#allocation2] sm:$0xff] %v1365
    %v1368 = vld [vmem:[#allocation4] sm:$0xff]
    %1369 = vmatpush.msra.mxu0 %v315
    %1370 = vmatpush.msra.mxu0 %v311
    %1371 = vmatpush.msra.mxu0 %v307
    %1372 = vmatpush.msra.mxu0 %v303
    %1373 = vmatpush.msra.mxu0 %v299
    %1374 = vmatpush.msra.mxu0 %v295
    %1375 = vmatpush.msra.mxu0 %v291
    %1376 = vmatpush.msra.mxu0 %v287
    %1377 = vmatpush.msra.mxu0 %v283
    %1378 = vmatpush.msra.mxu0 %v279
    %1379 = vmatpush.msra.mxu0 %v275
    %1380 = vmatpush.msra.mxu0 %v271
    %1381 = vmatpush.msra.mxu0 %v267
    %1382 = vmatpush.msra.mxu0 %v263
    %1383 = vmatpush.msra.mxu0 %v259
    %1384 = vmatpush.msra.mxu0 %v255
    %1385 = vmatmul.f32.gmra.mxu0 %v1368
    %v1386 = vpop.f32.mrf.mxu0
    %v1387 = vadd.f32 0.0, %v1386
    %1388 = vdwg.mxu0
    %1389 = vmatpush.msra.mxu0 %v316
    %1390 = vmatpush.msra.mxu0 %v312
    %1391 = vmatpush.msra.mxu0 %v308
    %1392 = vmatpush.msra.mxu0 %v304
    %1393 = vmatpush.msra.mxu0 %v300
    %1394 = vmatpush.msra.mxu0 %v296
    %1395 = vmatpush.msra.mxu0 %v292
    %1396 = vmatpush.msra.mxu0 %v288
    %1397 = vmatpush.msra.mxu0 %v284
    %1398 = vmatpush.msra.mxu0 %v280
    %1399 = vmatpush.msra.mxu0 %v276
    %1400 = vmatpush.msra.mxu0 %v272
    %1401 = vmatpush.msra.mxu0 %v268
    %1402 = vmatpush.msra.mxu0 %v264
    %1403 = vmatpush.msra.mxu0 %v260
    %1404 = vmatpush.msra.mxu0 %v256
    %1405 = vmatmul.f32.gmra.mxu0 %v1368
    %v1406 = vpop.f32.mrf.mxu0
    %v1407 = vadd.f32 0.0, %v1406
    %1408 = vdwg.mxu0
    %1409 = vmatpush.msra.mxu0 %v317
    %1410 = vmatpush.msra.mxu0 %v313
    %1411 = vmatpush.msra.mxu0 %v309
    %1412 = vmatpush.msra.mxu0 %v305
    %1413 = vmatpush.msra.mxu0 %v301
    %1414 = vmatpush.msra.mxu0 %v297
    %1415 = vmatpush.msra.mxu0 %v293
    %1416 = vmatpush.msra.mxu0 %v289
    %1417 = vmatpush.msra.mxu0 %v285
    %1418 = vmatpush.msra.mxu0 %v281
    %1419 = vmatpush.msra.mxu0 %v277
    %1420 = vmatpush.msra.mxu0 %v273
    %1421 = vmatpush.msra.mxu0 %v269
    %1422 = vmatpush.msra.mxu0 %v265
    %1423 = vmatpush.msra.mxu0 %v261
    %1424 = vmatpush.msra.mxu0 %v257
    %1425 = vmatmul.f32.gmra.mxu0 %v1368
    %v1426 = vpop.f32.mrf.mxu0
    %v1427 = vadd.f32 0.0, %v1426
    %1428 = vdwg.mxu0
    %1429 = vmatpush.msra.mxu0 %v318
    %1430 = vmatpush.msra.mxu0 %v314
    %1431 = vmatpush.msra.mxu0 %v310
    %1432 = vmatpush.msra.mxu0 %v306
    %1433 = vmatpush.msra.mxu0 %v302
    %1434 = vmatpush.msra.mxu0 %v298
    %1435 = vmatpush.msra.mxu0 %v294
    %1436 = vmatpush.msra.mxu0 %v290
    %1437 = vmatpush.msra.mxu0 %v286
    %1438 = vmatpush.msra.mxu0 %v282
    %1439 = vmatpush.msra.mxu0 %v278
    %1440 = vmatpush.msra.mxu0 %v274
    %1441 = vmatpush.msra.mxu0 %v270
    %1442 = vmatpush.msra.mxu0 %v266
    %1443 = vmatpush.msra.mxu0 %v262
    %1444 = vmatpush.msra.mxu0 %v258
    %1445 = vmatmul.f32.gmra.mxu0 %v1368
    %v1446 = vpop.f32.mrf.mxu0
    %v1447 = vadd.f32 0.0, %v1446
    %1448 = vdwg.mxu0
    %1449 = vmatpush.msra.mxu0 %v251
    %1450 = vmatpush.msra.mxu0 %v247
    %1451 = vmatpush.msra.mxu0 %v243
    %1452 = vmatpush.msra.mxu0 %v239
    %1453 = vmatpush.msra.mxu0 %v235
    %1454 = vmatpush.msra.mxu0 %v231
    %1455 = vmatpush.msra.mxu0 %v227
    %1456 = vmatpush.msra.mxu0 %v223
    %1457 = vmatpush.msra.mxu0 %v219
    %1458 = vmatpush.msra.mxu0 %v215
    %1459 = vmatpush.msra.mxu0 %v211
    %1460 = vmatpush.msra.mxu0 %v207
    %1461 = vmatpush.msra.mxu0 %v203
    %1462 = vmatpush.msra.mxu0 %v199
    %1463 = vmatpush.msra.mxu0 %v195
    %1464 = vmatpush.msra.mxu0 %v191
    %1465 = vmatmul.f32.gmra.mxu0 %v1365
    %v1466 = vpop.f32.mrf.mxu0
    %v1467 = vadd.f32 %v1387, %v1466
    %1468 = vdwg.mxu0
    %1469 = vmatpush.msra.mxu0 %v252
    %1470 = vmatpush.msra.mxu0 %v248
    %1471 = vmatpush.msra.mxu0 %v244
    %1472 = vmatpush.msra.mxu0 %v240
    %1473 = vmatpush.msra.mxu0 %v236
    %1474 = vmatpush.msra.mxu0 %v232
    %1475 = vmatpush.msra.mxu0 %v228
    %1476 = vmatpush.msra.mxu0 %v224
    %1477 = vmatpush.msra.mxu0 %v220
    %1478 = vmatpush.msra.mxu0 %v216
    %1479 = vmatpush.msra.mxu0 %v212
    %1480 = vmatpush.msra.mxu0 %v208
    %1481 = vmatpush.msra.mxu0 %v204
    %1482 = vmatpush.msra.mxu0 %v200
    %1483 = vmatpush.msra.mxu0 %v196
    %1484 = vmatpush.msra.mxu0 %v192
    %1485 = vmatmul.f32.gmra.mxu0 %v1365
    %v1486 = vpop.f32.mrf.mxu0
    %v1487 = vadd.f32 %v1407, %v1486
    %1488 = vdwg.mxu0
    %1489 = vmatpush.msra.mxu0 %v253
    %1490 = vmatpush.msra.mxu0 %v249
    %1491 = vmatpush.msra.mxu0 %v245
    %1492 = vmatpush.msra.mxu0 %v241
    %1493 = vmatpush.msra.mxu0 %v237
    %1494 = vmatpush.msra.mxu0 %v233
    %1495 = vmatpush.msra.mxu0 %v229
    %1496 = vmatpush.msra.mxu0 %v225
    %1497 = vmatpush.msra.mxu0 %v221
    %1498 = vmatpush.msra.mxu0 %v217
    %1499 = vmatpush.msra.mxu0 %v213
    %1500 = vmatpush.msra.mxu0 %v209
    %1501 = vmatpush.msra.mxu0 %v205
    %1502 = vmatpush.msra.mxu0 %v201
    %1503 = vmatpush.msra.mxu0 %v197
    %1504 = vmatpush.msra.mxu0 %v193
    %1505 = vmatmul.f32.gmra.mxu0 %v1365
    %v1506 = vpop.f32.mrf.mxu0
    %v1507 = vadd.f32 %v1427, %v1506
    %1508 = vdwg.mxu0
    %1509 = vmatpush.msra.mxu0 %v254
    %1510 = vmatpush.msra.mxu0 %v250
    %1511 = vmatpush.msra.mxu0 %v246
    %1512 = vmatpush.msra.mxu0 %v242
    %1513 = vmatpush.msra.mxu0 %v238
    %1514 = vmatpush.msra.mxu0 %v234
    %1515 = vmatpush.msra.mxu0 %v230
    %1516 = vmatpush.msra.mxu0 %v226
    %1517 = vmatpush.msra.mxu0 %v222
    %1518 = vmatpush.msra.mxu0 %v218
    %1519 = vmatpush.msra.mxu0 %v214
    %1520 = vmatpush.msra.mxu0 %v210
    %1521 = vmatpush.msra.mxu0 %v206
    %1522 = vmatpush.msra.mxu0 %v202
    %1523 = vmatpush.msra.mxu0 %v198
    %1524 = vmatpush.msra.mxu0 %v194
    %1525 = vmatmul.f32.gmra.mxu0 %v1365
    %v1526 = vpop.f32.mrf.mxu0
    %v1527 = vadd.f32 %v1447, %v1526
    %1528 = vdwg.mxu0
    %v1529 = vadd.f32 %v1467, %v321
    %v1530 = vadd.f32 %v1487, %v322
    %v1531 = vadd.f32 %v1507, %v323
    %v1532 = vadd.f32 %v1527, %v324
    %v1533 = vtanh.pop %v1529
    %v1534 = vtanh.pop %v1530
    %v1535 = vtanh.pop %v1531
    %v1536 = vtanh.pop %v1532
    %v1537 = vmul.f32 %v1533, 0.5
    %v1538 = vmul.f32 %v1534, 0.5
    %v1539 = vmul.f32 %v1535, 0.5
    %v1540 = vmul.f32 %v1536, 0.5
    %v1541 = vadd.f32 %v1537, 0.5
    %v1542 = vadd.f32 %v1538, 0.5
    %v1543 = vadd.f32 %v1539, 0.5
    %v1544 = vadd.f32 %v1540, 0.5
    %v1545 = vsel %vm342, %v1533, %v1541
    %v1546 = vsel %vm343, %v1534, %v1542
    %v1547 = vsel %vm344, %v1535, %v1543
    %v1548 = vsel %vm345, %v1536, %v1544
    %v1549 = vld [vmem:[#allocation5] sm:$0xff]
    %v1550 = vmul.f32 %v1546, %v1549
    %v1551 = vmul.f32 %v1545, %v1547
    %v1552 = vadd.f32 %v1550, %v1551
    %v1553 = vtanh.pop %v1552
    %v1554 = vmul.f32 %v1548, %v1553
    %1555 = vst [vmem:[#allocation5] sm:$0xff] %v1552
    %1556 = vst [vmem:[#allocation4] sm:$0xff] %v1554
    %s1557 = scalar_lea.vmem [#allocation6], 128
    %v1558 = vld [vmem:[%s1557] sm:$0xff]
    %v1559 = vld [vmem:[%s1557 + $0x8] sm:$0xff]
    %v1560 = vld [vmem:[%s1557 + $0x10] sm:$0xff]
    %v1561 = vld [vmem:[%s1557 + $0x18] sm:$0xff]
    %v1562 = vld [vmem:[#allocation2] sm:$0xff]
    %1563 = vmatpush.msra.mxu0 %v187
    %1564 = vmatpush.msra.mxu0 %v183
    %1565 = vmatpush.msra.mxu0 %v179
    %1566 = vmatpush.msra.mxu0 %v175
    %1567 = vmatpush.msra.mxu0 %v171
    %1568 = vmatpush.msra.mxu0 %v167
    %1569 = vmatpush.msra.mxu0 %v163
    %1570 = vmatpush.msra.mxu0 %v159
    %1571 = vmatpush.msra.mxu0 %v155
    %1572 = vmatpush.msra.mxu0 %v151
    %1573 = vmatpush.msra.mxu0 %v147
    %1574 = vmatpush.msra.mxu0 %v143
    %1575 = vmatpush.msra.mxu0 %v139
    %1576 = vmatpush.msra.mxu0 %v135
    %1577 = vmatpush.msra.mxu0 %v131
    %1578 = vmatpush.msra.mxu0 %v127
    %1579 = vmatmul.f32.gmra.mxu0 %v1562
    %v1580 = vpop.f32.mrf.mxu0
    %v1581 = vadd.f32 0.0, %v1580
    %1582 = vdwg.mxu0
    %1583 = vmatpush.msra.mxu0 %v188
    %1584 = vmatpush.msra.mxu0 %v184
    %1585 = vmatpush.msra.mxu0 %v180
    %1586 = vmatpush.msra.mxu0 %v176
    %1587 = vmatpush.msra.mxu0 %v172
    %1588 = vmatpush.msra.mxu0 %v168
    %1589 = vmatpush.msra.mxu0 %v164
    %1590 = vmatpush.msra.mxu0 %v160
    %1591 = vmatpush.msra.mxu0 %v156
    %1592 = vmatpush.msra.mxu0 %v152
    %1593 = vmatpush.msra.mxu0 %v148
    %1594 = vmatpush.msra.mxu0 %v144
    %1595 = vmatpush.msra.mxu0 %v140
    %1596 = vmatpush.msra.mxu0 %v136
    %1597 = vmatpush.msra.mxu0 %v132
    %1598 = vmatpush.msra.mxu0 %v128
    %1599 = vmatmul.f32.gmra.mxu0 %v1562
    %v1600 = vpop.f32.mrf.mxu0
    %v1601 = vadd.f32 0.0, %v1600
    %1602 = vdwg.mxu0
    %1603 = vmatpush.msra.mxu0 %v189
    %1604 = vmatpush.msra.mxu0 %v185
    %1605 = vmatpush.msra.mxu0 %v181
    %1606 = vmatpush.msra.mxu0 %v177
    %1607 = vmatpush.msra.mxu0 %v173
    %1608 = vmatpush.msra.mxu0 %v169
    %1609 = vmatpush.msra.mxu0 %v165
    %1610 = vmatpush.msra.mxu0 %v161
    %1611 = vmatpush.msra.mxu0 %v157
    %1612 = vmatpush.msra.mxu0 %v153
    %1613 = vmatpush.msra.mxu0 %v149
    %1614 = vmatpush.msra.mxu0 %v145
    %1615 = vmatpush.msra.mxu0 %v141
    %1616 = vmatpush.msra.mxu0 %v137
    %1617 = vmatpush.msra.mxu0 %v133
    %1618 = vmatpush.msra.mxu0 %v129
    %1619 = vmatmul.f32.gmra.mxu0 %v1562
    %v1620 = vpop.f32.mrf.mxu0
    %v1621 = vadd.f32 0.0, %v1620
    %1622 = vdwg.mxu0
    %1623 = vmatpush.msra.mxu0 %v190
    %1624 = vmatpush.msra.mxu0 %v186
    %1625 = vmatpush.msra.mxu0 %v182
    %1626 = vmatpush.msra.mxu0 %v178
    %1627 = vmatpush.msra.mxu0 %v174
    %1628 = vmatpush.msra.mxu0 %v170
    %1629 = vmatpush.msra.mxu0 %v166
    %1630 = vmatpush.msra.mxu0 %v162
    %1631 = vmatpush.msra.mxu0 %v158
    %1632 = vmatpush.msra.mxu0 %v154
    %1633 = vmatpush.msra.mxu0 %v150
    %1634 = vmatpush.msra.mxu0 %v146
    %1635 = vmatpush.msra.mxu0 %v142
    %1636 = vmatpush.msra.mxu0 %v138
    %1637 = vmatpush.msra.mxu0 %v134
    %1638 = vmatpush.msra.mxu0 %v130
    %1639 = vmatmul.f32.gmra.mxu0 %v1562
    %v1640 = vpop.f32.mrf.mxu0
    %v1641 = vadd.f32 0.0, %v1640
    %1642 = vdwg.mxu0
    %v1643 = vadd.f32 %v1558, %v1581
    %v1644 = vadd.f32 %v1559, %v1601
    %v1645 = vadd.f32 %v1560, %v1621
    %v1646 = vadd.f32 %v1561, %v1641
    %v1647 = vtanh.pop %v1643
    %v1648 = vtanh.pop %v1644
    %v1649 = vtanh.pop %v1645
    %v1650 = vtanh.pop %v1646
    %v1651 = vmul.f32 %v1647, 0.5
    %v1652 = vmul.f32 %v1648, 0.5
    %v1653 = vmul.f32 %v1649, 0.5
    %v1654 = vmul.f32 %v1650, 0.5
    %v1655 = vadd.f32 %v1651, 0.5
    %v1656 = vadd.f32 %v1652, 0.5
    %v1657 = vadd.f32 %v1653, 0.5
    %v1658 = vadd.f32 %v1654, 0.5
    %v1659 = vsel %vm342, %v1647, %v1655
    %v1660 = vsel %vm343, %v1648, %v1656
    %v1661 = vsel %vm344, %v1649, %v1657
    %v1662 = vsel %vm345, %v1650, %v1658
    %v1663 = vld [vmem:[#allocation3] sm:$0xff]
    %v1664 = vmul.f32 %v1660, %v1663
    %v1665 = vmul.f32 %v1659, %v1661
    %v1666 = vadd.f32 %v1664, %v1665
    %v1667 = vtanh.pop %v1666
    %v1668 = vmul.f32 %v1662, %v1667
    %1669 = vst [vmem:[#allocation3] sm:$0xff] %v1666
    %1670 = vst [vmem:[#allocation2] sm:$0xff] %v1668
    %v1671 = vld [vmem:[#allocation4] sm:$0xff]
    %1672 = vmatpush.msra.mxu0 %v315
    %1673 = vmatpush.msra.mxu0 %v311
    %1674 = vmatpush.msra.mxu0 %v307
    %1675 = vmatpush.msra.mxu0 %v303
    %1676 = vmatpush.msra.mxu0 %v299
    %1677 = vmatpush.msra.mxu0 %v295
    %1678 = vmatpush.msra.mxu0 %v291
    %1679 = vmatpush.msra.mxu0 %v287
    %1680 = vmatpush.msra.mxu0 %v283
    %1681 = vmatpush.msra.mxu0 %v279
    %1682 = vmatpush.msra.mxu0 %v275
    %1683 = vmatpush.msra.mxu0 %v271
    %1684 = vmatpush.msra.mxu0 %v267
    %1685 = vmatpush.msra.mxu0 %v263
    %1686 = vmatpush.msra.mxu0 %v259
    %1687 = vmatpush.msra.mxu0 %v255
    %1688 = vmatmul.f32.gmra.mxu0 %v1671
    %v1689 = vpop.f32.mrf.mxu0
    %v1690 = vadd.f32 0.0, %v1689
    %1691 = vdwg.mxu0
    %1692 = vmatpush.msra.mxu0 %v316
    %1693 = vmatpush.msra.mxu0 %v312
    %1694 = vmatpush.msra.mxu0 %v308
    %1695 = vmatpush.msra.mxu0 %v304
    %1696 = vmatpush.msra.mxu0 %v300
    %1697 = vmatpush.msra.mxu0 %v296
    %1698 = vmatpush.msra.mxu0 %v292
    %1699 = vmatpush.msra.mxu0 %v288
    %1700 = vmatpush.msra.mxu0 %v284
    %1701 = vmatpush.msra.mxu0 %v280
    %1702 = vmatpush.msra.mxu0 %v276
    %1703 = vmatpush.msra.mxu0 %v272
    %1704 = vmatpush.msra.mxu0 %v268
    %1705 = vmatpush.msra.mxu0 %v264
    %1706 = vmatpush.msra.mxu0 %v260
    %1707 = vmatpush.msra.mxu0 %v256
    %1708 = vmatmul.f32.gmra.mxu0 %v1671
    %v1709 = vpop.f32.mrf.mxu0
    %v1710 = vadd.f32 0.0, %v1709
    %1711 = vdwg.mxu0
    %1712 = vmatpush.msra.mxu0 %v317
    %1713 = vmatpush.msra.mxu0 %v313
    %1714 = vmatpush.msra.mxu0 %v309
    %1715 = vmatpush.msra.mxu0 %v305
    %1716 = vmatpush.msra.mxu0 %v301
    %1717 = vmatpush.msra.mxu0 %v297
    %1718 = vmatpush.msra.mxu0 %v293
    %1719 = vmatpush.msra.mxu0 %v289
    %1720 = vmatpush.msra.mxu0 %v285
    %1721 = vmatpush.msra.mxu0 %v281
    %1722 = vmatpush.msra.mxu0 %v277
    %1723 = vmatpush.msra.mxu0 %v273
    %1724 = vmatpush.msra.mxu0 %v269
    %1725 = vmatpush.msra.mxu0 %v265
    %1726 = vmatpush.msra.mxu0 %v261
    %1727 = vmatpush.msra.mxu0 %v257
    %1728 = vmatmul.f32.gmra.mxu0 %v1671
    %v1729 = vpop.f32.mrf.mxu0
    %v1730 = vadd.f32 0.0, %v1729
    %1731 = vdwg.mxu0
    %1732 = vmatpush.msra.mxu0 %v318
    %1733 = vmatpush.msra.mxu0 %v314
    %1734 = vmatpush.msra.mxu0 %v310
    %1735 = vmatpush.msra.mxu0 %v306
    %1736 = vmatpush.msra.mxu0 %v302
    %1737 = vmatpush.msra.mxu0 %v298
    %1738 = vmatpush.msra.mxu0 %v294
    %1739 = vmatpush.msra.mxu0 %v290
    %1740 = vmatpush.msra.mxu0 %v286
    %1741 = vmatpush.msra.mxu0 %v282
    %1742 = vmatpush.msra.mxu0 %v278
    %1743 = vmatpush.msra.mxu0 %v274
    %1744 = vmatpush.msra.mxu0 %v270
    %1745 = vmatpush.msra.mxu0 %v266
    %1746 = vmatpush.msra.mxu0 %v262
    %1747 = vmatpush.msra.mxu0 %v258
    %1748 = vmatmul.f32.gmra.mxu0 %v1671
    %v1749 = vpop.f32.mrf.mxu0
    %v1750 = vadd.f32 0.0, %v1749
    %1751 = vdwg.mxu0
    %1752 = vmatpush.msra.mxu0 %v251
    %1753 = vmatpush.msra.mxu0 %v247
    %1754 = vmatpush.msra.mxu0 %v243
    %1755 = vmatpush.msra.mxu0 %v239
    %1756 = vmatpush.msra.mxu0 %v235
    %1757 = vmatpush.msra.mxu0 %v231
    %1758 = vmatpush.msra.mxu0 %v227
    %1759 = vmatpush.msra.mxu0 %v223
    %1760 = vmatpush.msra.mxu0 %v219
    %1761 = vmatpush.msra.mxu0 %v215
    %1762 = vmatpush.msra.mxu0 %v211
    %1763 = vmatpush.msra.mxu0 %v207
    %1764 = vmatpush.msra.mxu0 %v203
    %1765 = vmatpush.msra.mxu0 %v199
    %1766 = vmatpush.msra.mxu0 %v195
    %1767 = vmatpush.msra.mxu0 %v191
    %1768 = vmatmul.f32.gmra.mxu0 %v1668
    %v1769 = vpop.f32.mrf.mxu0
    %v1770 = vadd.f32 %v1690, %v1769
    %1771 = vdwg.mxu0
    %1772 = vmatpush.msra.mxu0 %v252
    %1773 = vmatpush.msra.mxu0 %v248
    %1774 = vmatpush.msra.mxu0 %v244
    %1775 = vmatpush.msra.mxu0 %v240
    %1776 = vmatpush.msra.mxu0 %v236
    %1777 = vmatpush.msra.mxu0 %v232
    %1778 = vmatpush.msra.mxu0 %v228
    %1779 = vmatpush.msra.mxu0 %v224
    %1780 = vmatpush.msra.mxu0 %v220
    %1781 = vmatpush.msra.mxu0 %v216
    %1782 = vmatpush.msra.mxu0 %v212
    %1783 = vmatpush.msra.mxu0 %v208
    %1784 = vmatpush.msra.mxu0 %v204
    %1785 = vmatpush.msra.mxu0 %v200
    %1786 = vmatpush.msra.mxu0 %v196
    %1787 = vmatpush.msra.mxu0 %v192
    %1788 = vmatmul.f32.gmra.mxu0 %v1668
    %v1789 = vpop.f32.mrf.mxu0
    %v1790 = vadd.f32 %v1710, %v1789
    %1791 = vdwg.mxu0
    %1792 = vmatpush.msra.mxu0 %v253
    %1793 = vmatpush.msra.mxu0 %v249
    %1794 = vmatpush.msra.mxu0 %v245
    %1795 = vmatpush.msra.mxu0 %v241
    %1796 = vmatpush.msra.mxu0 %v237
    %1797 = vmatpush.msra.mxu0 %v233
    %1798 = vmatpush.msra.mxu0 %v229
    %1799 = vmatpush.msra.mxu0 %v225
    %1800 = vmatpush.msra.mxu0 %v221
    %1801 = vmatpush.msra.mxu0 %v217
    %1802 = vmatpush.msra.mxu0 %v213
    %1803 = vmatpush.msra.mxu0 %v209
    %1804 = vmatpush.msra.mxu0 %v205
    %1805 = vmatpush.msra.mxu0 %v201
    %1806 = vmatpush.msra.mxu0 %v197
    %1807 = vmatpush.msra.mxu0 %v193
    %1808 = vmatmul.f32.gmra.mxu0 %v1668
    %v1809 = vpop.f32.mrf.mxu0
    %v1810 = vadd.f32 %v1730, %v1809
    %1811 = vdwg.mxu0
    %1812 = vmatpush.msra.mxu0 %v254
    %1813 = vmatpush.msra.mxu0 %v250
    %1814 = vmatpush.msra.mxu0 %v246
    %1815 = vmatpush.msra.mxu0 %v242
    %1816 = vmatpush.msra.mxu0 %v238
    %1817 = vmatpush.msra.mxu0 %v234
    %1818 = vmatpush.msra.mxu0 %v230
    %1819 = vmatpush.msra.mxu0 %v226
    %1820 = vmatpush.msra.mxu0 %v222
    %1821 = vmatpush.msra.mxu0 %v218
    %1822 = vmatpush.msra.mxu0 %v214
    %1823 = vmatpush.msra.mxu0 %v210
    %1824 = vmatpush.msra.mxu0 %v206
    %1825 = vmatpush.msra.mxu0 %v202
    %1826 = vmatpush.msra.mxu0 %v198
    %1827 = vmatpush.msra.mxu0 %v194
    %1828 = vmatmul.f32.gmra.mxu0 %v1668
    %v1829 = vpop.f32.mrf.mxu0
    %v1830 = vadd.f32 %v1750, %v1829
    %1831 = vdwg.mxu0
    %v1832 = vadd.f32 %v1770, %v321
    %v1833 = vadd.f32 %v1790, %v322
    %v1834 = vadd.f32 %v1810, %v323
    %v1835 = vadd.f32 %v1830, %v324
    %v1836 = vtanh.pop %v1832
    %v1837 = vtanh.pop %v1833
    %v1838 = vtanh.pop %v1834
    %v1839 = vtanh.pop %v1835
    %v1840 = vmul.f32 %v1836, 0.5
    %v1841 = vmul.f32 %v1837, 0.5
    %v1842 = vmul.f32 %v1838, 0.5
    %v1843 = vmul.f32 %v1839, 0.5
    %v1844 = vadd.f32 %v1840, 0.5
    %v1845 = vadd.f32 %v1841, 0.5
    %v1846 = vadd.f32 %v1842, 0.5
    %v1847 = vadd.f32 %v1843, 0.5
    %v1848 = vsel %vm342, %v1836, %v1844
    %v1849 = vsel %vm343, %v1837, %v1845
    %v1850 = vsel %vm344, %v1838, %v1846
    %v1851 = vsel %vm345, %v1839, %v1847
    %v1852 = vld [vmem:[#allocation5] sm:$0xff]
    %v1853 = vmul.f32 %v1849, %v1852
    %v1854 = vmul.f32 %v1848, %v1850
    %v1855 = vadd.f32 %v1853, %v1854
    %v1856 = vtanh.pop %v1855
    %v1857 = vmul.f32 %v1851, %v1856
    %1858 = vst [vmem:[#allocation5] sm:$0xff] %v1855
    %1859 = vst [vmem:[#allocation4] sm:$0xff] %v1857
    %s1860 = scalar_lea.vmem [#allocation6], 160
    %v1861 = vld [vmem:[%s1860] sm:$0xff]
    %v1862 = vld [vmem:[%s1860 + $0x8] sm:$0xff]
    %v1863 = vld [vmem:[%s1860 + $0x10] sm:$0xff]
    %v1864 = vld [vmem:[%s1860 + $0x18] sm:$0xff]
    %v1865 = vld [vmem:[#allocation2] sm:$0xff]
    %1866 = vmatpush.msra.mxu0 %v187
    %1867 = vmatpush.msra.mxu0 %v183
    %1868 = vmatpush.msra.mxu0 %v179
    %1869 = vmatpush.msra.mxu0 %v175
    %1870 = vmatpush.msra.mxu0 %v171
    %1871 = vmatpush.msra.mxu0 %v167
    %1872 = vmatpush.msra.mxu0 %v163
    %1873 = vmatpush.msra.mxu0 %v159
    %1874 = vmatpush.msra.mxu0 %v155
    %1875 = vmatpush.msra.mxu0 %v151
    %1876 = vmatpush.msra.mxu0 %v147
    %1877 = vmatpush.msra.mxu0 %v143
    %1878 = vmatpush.msra.mxu0 %v139
    %1879 = vmatpush.msra.mxu0 %v135
    %1880 = vmatpush.msra.mxu0 %v131
    %1881 = vmatpush.msra.mxu0 %v127
    %1882 = vmatmul.f32.gmra.mxu0 %v1865
    %v1883 = vpop.f32.mrf.mxu0
    %v1884 = vadd.f32 0.0, %v1883
    %1885 = vdwg.mxu0
    %1886 = vmatpush.msra.mxu0 %v188
    %1887 = vmatpush.msra.mxu0 %v184
    %1888 = vmatpush.msra.mxu0 %v180
    %1889 = vmatpush.msra.mxu0 %v176
    %1890 = vmatpush.msra.mxu0 %v172
    %1891 = vmatpush.msra.mxu0 %v168
    %1892 = vmatpush.msra.mxu0 %v164
    %1893 = vmatpush.msra.mxu0 %v160
    %1894 = vmatpush.msra.mxu0 %v156
    %1895 = vmatpush.msra.mxu0 %v152
    %1896 = vmatpush.msra.mxu0 %v148
    %1897 = vmatpush.msra.mxu0 %v144
    %1898 = vmatpush.msra.mxu0 %v140
    %1899 = vmatpush.msra.mxu0 %v136
    %1900 = vmatpush.msra.mxu0 %v132
    %1901 = vmatpush.msra.mxu0 %v128
    %1902 = vmatmul.f32.gmra.mxu0 %v1865
    %v1903 = vpop.f32.mrf.mxu0
    %v1904 = vadd.f32 0.0, %v1903
    %1905 = vdwg.mxu0
    %1906 = vmatpush.msra.mxu0 %v189
    %1907 = vmatpush.msra.mxu0 %v185
    %1908 = vmatpush.msra.mxu0 %v181
    %1909 = vmatpush.msra.mxu0 %v177
    %1910 = vmatpush.msra.mxu0 %v173
    %1911 = vmatpush.msra.mxu0 %v169
    %1912 = vmatpush.msra.mxu0 %v165
    %1913 = vmatpush.msra.mxu0 %v161
    %1914 = vmatpush.msra.mxu0 %v157
    %1915 = vmatpush.msra.mxu0 %v153
    %1916 = vmatpush.msra.mxu0 %v149
    %1917 = vmatpush.msra.mxu0 %v145
    %1918 = vmatpush.msra.mxu0 %v141
    %1919 = vmatpush.msra.mxu0 %v137
    %1920 = vmatpush.msra.mxu0 %v133
    %1921 = vmatpush.msra.mxu0 %v129
    %1922 = vmatmul.f32.gmra.mxu0 %v1865
    %v1923 = vpop.f32.mrf.mxu0
    %v1924 = vadd.f32 0.0, %v1923
    %1925 = vdwg.mxu0
    %1926 = vmatpush.msra.mxu0 %v190
    %1927 = vmatpush.msra.mxu0 %v186
    %1928 = vmatpush.msra.mxu0 %v182
    %1929 = vmatpush.msra.mxu0 %v178
    %1930 = vmatpush.msra.mxu0 %v174
    %1931 = vmatpush.msra.mxu0 %v170
    %1932 = vmatpush.msra.mxu0 %v166
    %1933 = vmatpush.msra.mxu0 %v162
    %1934 = vmatpush.msra.mxu0 %v158
    %1935 = vmatpush.msra.mxu0 %v154
    %1936 = vmatpush.msra.mxu0 %v150
    %1937 = vmatpush.msra.mxu0 %v146
    %1938 = vmatpush.msra.mxu0 %v142
    %1939 = vmatpush.msra.mxu0 %v138
    %1940 = vmatpush.msra.mxu0 %v134
    %1941 = vmatpush.msra.mxu0 %v130
    %1942 = vmatmul.f32.gmra.mxu0 %v1865
    %v1943 = vpop.f32.mrf.mxu0
    %v1944 = vadd.f32 0.0, %v1943
    %1945 = vdwg.mxu0
    %v1946 = vadd.f32 %v1861, %v1884
    %v1947 = vadd.f32 %v1862, %v1904
    %v1948 = vadd.f32 %v1863, %v1924
    %v1949 = vadd.f32 %v1864, %v1944
    %v1950 = vtanh.pop %v1946
    %v1951 = vtanh.pop %v1947
    %v1952 = vtanh.pop %v1948
    %v1953 = vtanh.pop %v1949
    %v1954 = vmul.f32 %v1950, 0.5
    %v1955 = vmul.f32 %v1951, 0.5
    %v1956 = vmul.f32 %v1952, 0.5
    %v1957 = vmul.f32 %v1953, 0.5
    %v1958 = vadd.f32 %v1954, 0.5
    %v1959 = vadd.f32 %v1955, 0.5
    %v1960 = vadd.f32 %v1956, 0.5
    %v1961 = vadd.f32 %v1957, 0.5
    %v1962 = vsel %vm342, %v1950, %v1958
    %v1963 = vsel %vm343, %v1951, %v1959
    %v1964 = vsel %vm344, %v1952, %v1960
    %v1965 = vsel %vm345, %v1953, %v1961
    %v1966 = vld [vmem:[#allocation3] sm:$0xff]
    %v1967 = vmul.f32 %v1963, %v1966
    %v1968 = vmul.f32 %v1962, %v1964
    %v1969 = vadd.f32 %v1967, %v1968
    %v1970 = vtanh.pop %v1969
    %v1971 = vmul.f32 %v1965, %v1970
    %1972 = vst [vmem:[#allocation3] sm:$0xff] %v1969
    %1973 = vst [vmem:[#allocation2] sm:$0xff] %v1971
    %v1974 = vld [vmem:[#allocation4] sm:$0xff]
    %1975 = vmatpush.msra.mxu0 %v315
    %1976 = vmatpush.msra.mxu0 %v311
    %1977 = vmatpush.msra.mxu0 %v307
    %1978 = vmatpush.msra.mxu0 %v303
    %1979 = vmatpush.msra.mxu0 %v299
    %1980 = vmatpush.msra.mxu0 %v295
    %1981 = vmatpush.msra.mxu0 %v291
    %1982 = vmatpush.msra.mxu0 %v287
    %1983 = vmatpush.msra.mxu0 %v283
    %1984 = vmatpush.msra.mxu0 %v279
    %1985 = vmatpush.msra.mxu0 %v275
    %1986 = vmatpush.msra.mxu0 %v271
    %1987 = vmatpush.msra.mxu0 %v267
    %1988 = vmatpush.msra.mxu0 %v263
    %1989 = vmatpush.msra.mxu0 %v259
    %1990 = vmatpush.msra.mxu0 %v255
    %1991 = vmatmul.f32.gmra.mxu0 %v1974
    %v1992 = vpop.f32.mrf.mxu0
    %v1993 = vadd.f32 0.0, %v1992
    %1994 = vdwg.mxu0
    %1995 = vmatpush.msra.mxu0 %v316
    %1996 = vmatpush.msra.mxu0 %v312
    %1997 = vmatpush.msra.mxu0 %v308
    %1998 = vmatpush.msra.mxu0 %v304
    %1999 = vmatpush.msra.mxu0 %v300
    %2000 = vmatpush.msra.mxu0 %v296
    %2001 = vmatpush.msra.mxu0 %v292
    %2002 = vmatpush.msra.mxu0 %v288
    %2003 = vmatpush.msra.mxu0 %v284
    %2004 = vmatpush.msra.mxu0 %v280
    %2005 = vmatpush.msra.mxu0 %v276
    %2006 = vmatpush.msra.mxu0 %v272
    %2007 = vmatpush.msra.mxu0 %v268
    %2008 = vmatpush.msra.mxu0 %v264
    %2009 = vmatpush.msra.mxu0 %v260
    %2010 = vmatpush.msra.mxu0 %v256
    %2011 = vmatmul.f32.gmra.mxu0 %v1974
    %v2012 = vpop.f32.mrf.mxu0
    %v2013 = vadd.f32 0.0, %v2012
    %2014 = vdwg.mxu0
    %2015 = vmatpush.msra.mxu0 %v317
    %2016 = vmatpush.msra.mxu0 %v313
    %2017 = vmatpush.msra.mxu0 %v309
    %2018 = vmatpush.msra.mxu0 %v305
    %2019 = vmatpush.msra.mxu0 %v301
    %2020 = vmatpush.msra.mxu0 %v297
    %2021 = vmatpush.msra.mxu0 %v293
    %2022 = vmatpush.msra.mxu0 %v289
    %2023 = vmatpush.msra.mxu0 %v285
    %2024 = vmatpush.msra.mxu0 %v281
    %2025 = vmatpush.msra.mxu0 %v277
    %2026 = vmatpush.msra.mxu0 %v273
    %2027 = vmatpush.msra.mxu0 %v269
    %2028 = vmatpush.msra.mxu0 %v265
    %2029 = vmatpush.msra.mxu0 %v261
    %2030 = vmatpush.msra.mxu0 %v257
    %2031 = vmatmul.f32.gmra.mxu0 %v1974
    %v2032 = vpop.f32.mrf.mxu0
    %v2033 = vadd.f32 0.0, %v2032
    %2034 = vdwg.mxu0
    %2035 = vmatpush.msra.mxu0 %v318
    %2036 = vmatpush.msra.mxu0 %v314
    %2037 = vmatpush.msra.mxu0 %v310
    %2038 = vmatpush.msra.mxu0 %v306
    %2039 = vmatpush.msra.mxu0 %v302
    %2040 = vmatpush.msra.mxu0 %v298
    %2041 = vmatpush.msra.mxu0 %v294
    %2042 = vmatpush.msra.mxu0 %v290
    %2043 = vmatpush.msra.mxu0 %v286
    %2044 = vmatpush.msra.mxu0 %v282
    %2045 = vmatpush.msra.mxu0 %v278
    %2046 = vmatpush.msra.mxu0 %v274
    %2047 = vmatpush.msra.mxu0 %v270
    %2048 = vmatpush.msra.mxu0 %v266
    %2049 = vmatpush.msra.mxu0 %v262
    %2050 = vmatpush.msra.mxu0 %v258
    %2051 = vmatmul.f32.gmra.mxu0 %v1974
    %v2052 = vpop.f32.mrf.mxu0
    %v2053 = vadd.f32 0.0, %v2052
    %2054 = vdwg.mxu0
    %2055 = vmatpush.msra.mxu0 %v251
    %2056 = vmatpush.msra.mxu0 %v247
    %2057 = vmatpush.msra.mxu0 %v243
    %2058 = vmatpush.msra.mxu0 %v239
    %2059 = vmatpush.msra.mxu0 %v235
    %2060 = vmatpush.msra.mxu0 %v231
    %2061 = vmatpush.msra.mxu0 %v227
    %2062 = vmatpush.msra.mxu0 %v223
    %2063 = vmatpush.msra.mxu0 %v219
    %2064 = vmatpush.msra.mxu0 %v215
    %2065 = vmatpush.msra.mxu0 %v211
    %2066 = vmatpush.msra.mxu0 %v207
    %2067 = vmatpush.msra.mxu0 %v203
    %2068 = vmatpush.msra.mxu0 %v199
    %2069 = vmatpush.msra.mxu0 %v195
    %2070 = vmatpush.msra.mxu0 %v191
    %2071 = vmatmul.f32.gmra.mxu0 %v1971
    %v2072 = vpop.f32.mrf.mxu0
    %v2073 = vadd.f32 %v1993, %v2072
    %2074 = vdwg.mxu0
    %2075 = vmatpush.msra.mxu0 %v252
    %2076 = vmatpush.msra.mxu0 %v248
    %2077 = vmatpush.msra.mxu0 %v244
    %2078 = vmatpush.msra.mxu0 %v240
    %2079 = vmatpush.msra.mxu0 %v236
    %2080 = vmatpush.msra.mxu0 %v232
    %2081 = vmatpush.msra.mxu0 %v228
    %2082 = vmatpush.msra.mxu0 %v224
    %2083 = vmatpush.msra.mxu0 %v220
    %2084 = vmatpush.msra.mxu0 %v216
    %2085 = vmatpush.msra.mxu0 %v212
    %2086 = vmatpush.msra.mxu0 %v208
    %2087 = vmatpush.msra.mxu0 %v204
    %2088 = vmatpush.msra.mxu0 %v200
    %2089 = vmatpush.msra.mxu0 %v196
    %2090 = vmatpush.msra.mxu0 %v192
    %2091 = vmatmul.f32.gmra.mxu0 %v1971
    %v2092 = vpop.f32.mrf.mxu0
    %v2093 = vadd.f32 %v2013, %v2092
    %2094 = vdwg.mxu0
    %2095 = vmatpush.msra.mxu0 %v253
    %2096 = vmatpush.msra.mxu0 %v249
    %2097 = vmatpush.msra.mxu0 %v245
    %2098 = vmatpush.msra.mxu0 %v241
    %2099 = vmatpush.msra.mxu0 %v237
    %2100 = vmatpush.msra.mxu0 %v233
    %2101 = vmatpush.msra.mxu0 %v229
    %2102 = vmatpush.msra.mxu0 %v225
    %2103 = vmatpush.msra.mxu0 %v221
    %2104 = vmatpush.msra.mxu0 %v217
    %2105 = vmatpush.msra.mxu0 %v213
    %2106 = vmatpush.msra.mxu0 %v209
    %2107 = vmatpush.msra.mxu0 %v205
    %2108 = vmatpush.msra.mxu0 %v201
    %2109 = vmatpush.msra.mxu0 %v197
    %2110 = vmatpush.msra.mxu0 %v193
    %2111 = vmatmul.f32.gmra.mxu0 %v1971
    %v2112 = vpop.f32.mrf.mxu0
    %v2113 = vadd.f32 %v2033, %v2112
    %2114 = vdwg.mxu0
    %2115 = vmatpush.msra.mxu0 %v254
    %2116 = vmatpush.msra.mxu0 %v250
    %2117 = vmatpush.msra.mxu0 %v246
    %2118 = vmatpush.msra.mxu0 %v242
    %2119 = vmatpush.msra.mxu0 %v238
    %2120 = vmatpush.msra.mxu0 %v234
    %2121 = vmatpush.msra.mxu0 %v230
    %2122 = vmatpush.msra.mxu0 %v226
    %2123 = vmatpush.msra.mxu0 %v222
    %2124 = vmatpush.msra.mxu0 %v218
    %2125 = vmatpush.msra.mxu0 %v214
    %2126 = vmatpush.msra.mxu0 %v210
    %2127 = vmatpush.msra.mxu0 %v206
    %2128 = vmatpush.msra.mxu0 %v202
    %2129 = vmatpush.msra.mxu0 %v198
    %2130 = vmatpush.msra.mxu0 %v194
    %2131 = vmatmul.f32.gmra.mxu0 %v1971
    %v2132 = vpop.f32.mrf.mxu0
    %v2133 = vadd.f32 %v2053, %v2132
    %2134 = vdwg.mxu0
    %v2135 = vadd.f32 %v2073, %v321
    %v2136 = vadd.f32 %v2093, %v322
    %v2137 = vadd.f32 %v2113, %v323
    %v2138 = vadd.f32 %v2133, %v324
    %v2139 = vtanh.pop %v2135
    %v2140 = vtanh.pop %v2136
    %v2141 = vtanh.pop %v2137
    %v2142 = vtanh.pop %v2138
    %v2143 = vmul.f32 %v2139, 0.5
    %v2144 = vmul.f32 %v2140, 0.5
    %v2145 = vmul.f32 %v2141, 0.5
    %v2146 = vmul.f32 %v2142, 0.5
    %v2147 = vadd.f32 %v2143, 0.5
    %v2148 = vadd.f32 %v2144, 0.5
    %v2149 = vadd.f32 %v2145, 0.5
    %v2150 = vadd.f32 %v2146, 0.5
    %v2151 = vsel %vm342, %v2139, %v2147
    %v2152 = vsel %vm343, %v2140, %v2148
    %v2153 = vsel %vm344, %v2141, %v2149
    %v2154 = vsel %vm345, %v2142, %v2150
    %v2155 = vld [vmem:[#allocation5] sm:$0xff]
    %v2156 = vmul.f32 %v2152, %v2155
    %v2157 = vmul.f32 %v2151, %v2153
    %v2158 = vadd.f32 %v2156, %v2157
    %v2159 = vtanh.pop %v2158
    %v2160 = vmul.f32 %v2154, %v2159
    %2161 = vst [vmem:[#allocation5] sm:$0xff] %v2158
    %2162 = vst [vmem:[#allocation4] sm:$0xff] %v2160
    %s2163 = scalar_lea.vmem [#allocation6], 192
    %v2164 = vld [vmem:[%s2163] sm:$0xff]
    %v2165 = vld [vmem:[%s2163 + $0x8] sm:$0xff]
    %v2166 = vld [vmem:[%s2163 + $0x10] sm:$0xff]
    %v2167 = vld [vmem:[%s2163 + $0x18] sm:$0xff]
    %v2168 = vld [vmem:[#allocation2] sm:$0xff]
    %2169 = vmatpush.msra.mxu0 %v187
    %2170 = vmatpush.msra.mxu0 %v183
    %2171 = vmatpush.msra.mxu0 %v179
    %2172 = vmatpush.msra.mxu0 %v175
    %2173 = vmatpush.msra.mxu0 %v171
    %2174 = vmatpush.msra.mxu0 %v167
    %2175 = vmatpush.msra.mxu0 %v163
    %2176 = vmatpush.msra.mxu0 %v159
    %2177 = vmatpush.msra.mxu0 %v155
    %2178 = vmatpush.msra.mxu0 %v151
    %2179 = vmatpush.msra.mxu0 %v147
    %2180 = vmatpush.msra.mxu0 %v143
    %2181 = vmatpush.msra.mxu0 %v139
    %2182 = vmatpush.msra.mxu0 %v135
    %2183 = vmatpush.msra.mxu0 %v131
    %2184 = vmatpush.msra.mxu0 %v127
    %2185 = vmatmul.f32.gmra.mxu0 %v2168
    %v2186 = vpop.f32.mrf.mxu0
    %v2187 = vadd.f32 0.0, %v2186
    %2188 = vdwg.mxu0
    %2189 = vmatpush.msra.mxu0 %v188
    %2190 = vmatpush.msra.mxu0 %v184
    %2191 = vmatpush.msra.mxu0 %v180
    %2192 = vmatpush.msra.mxu0 %v176
    %2193 = vmatpush.msra.mxu0 %v172
    %2194 = vmatpush.msra.mxu0 %v168
    %2195 = vmatpush.msra.mxu0 %v164
    %2196 = vmatpush.msra.mxu0 %v160
    %2197 = vmatpush.msra.mxu0 %v156
    %2198 = vmatpush.msra.mxu0 %v152
    %2199 = vmatpush.msra.mxu0 %v148
    %2200 = vmatpush.msra.mxu0 %v144
    %2201 = vmatpush.msra.mxu0 %v140
    %2202 = vmatpush.msra.mxu0 %v136
    %2203 = vmatpush.msra.mxu0 %v132
    %2204 = vmatpush.msra.mxu0 %v128
    %2205 = vmatmul.f32.gmra.mxu0 %v2168
    %v2206 = vpop.f32.mrf.mxu0
    %v2207 = vadd.f32 0.0, %v2206
    %2208 = vdwg.mxu0
    %2209 = vmatpush.msra.mxu0 %v189
    %2210 = vmatpush.msra.mxu0 %v185
    %2211 = vmatpush.msra.mxu0 %v181
    %2212 = vmatpush.msra.mxu0 %v177
    %2213 = vmatpush.msra.mxu0 %v173
    %2214 = vmatpush.msra.mxu0 %v169
    %2215 = vmatpush.msra.mxu0 %v165
    %2216 = vmatpush.msra.mxu0 %v161
    %2217 = vmatpush.msra.mxu0 %v157
    %2218 = vmatpush.msra.mxu0 %v153
    %2219 = vmatpush.msra.mxu0 %v149
    %2220 = vmatpush.msra.mxu0 %v145
    %2221 = vmatpush.msra.mxu0 %v141
    %2222 = vmatpush.msra.mxu0 %v137
    %2223 = vmatpush.msra.mxu0 %v133
    %2224 = vmatpush.msra.mxu0 %v129
    %2225 = vmatmul.f32.gmra.mxu0 %v2168
    %v2226 = vpop.f32.mrf.mxu0
    %v2227 = vadd.f32 0.0, %v2226
    %2228 = vdwg.mxu0
    %2229 = vmatpush.msra.mxu0 %v190
    %2230 = vmatpush.msra.mxu0 %v186
    %2231 = vmatpush.msra.mxu0 %v182
    %2232 = vmatpush.msra.mxu0 %v178
    %2233 = vmatpush.msra.mxu0 %v174
    %2234 = vmatpush.msra.mxu0 %v170
    %2235 = vmatpush.msra.mxu0 %v166
    %2236 = vmatpush.msra.mxu0 %v162
    %2237 = vmatpush.msra.mxu0 %v158
    %2238 = vmatpush.msra.mxu0 %v154
    %2239 = vmatpush.msra.mxu0 %v150
    %2240 = vmatpush.msra.mxu0 %v146
    %2241 = vmatpush.msra.mxu0 %v142
    %2242 = vmatpush.msra.mxu0 %v138
    %2243 = vmatpush.msra.mxu0 %v134
    %2244 = vmatpush.msra.mxu0 %v130
    %2245 = vmatmul.f32.gmra.mxu0 %v2168
    %v2246 = vpop.f32.mrf.mxu0
    %v2247 = vadd.f32 0.0, %v2246
    %2248 = vdwg.mxu0
    %v2249 = vadd.f32 %v2164, %v2187
    %v2250 = vadd.f32 %v2165, %v2207
    %v2251 = vadd.f32 %v2166, %v2227
    %v2252 = vadd.f32 %v2167, %v2247
    %v2253 = vtanh.pop %v2249
    %v2254 = vtanh.pop %v2250
    %v2255 = vtanh.pop %v2251
    %v2256 = vtanh.pop %v2252
    %v2257 = vmul.f32 %v2253, 0.5
    %v2258 = vmul.f32 %v2254, 0.5
    %v2259 = vmul.f32 %v2255, 0.5
    %v2260 = vmul.f32 %v2256, 0.5
    %v2261 = vadd.f32 %v2257, 0.5
    %v2262 = vadd.f32 %v2258, 0.5
    %v2263 = vadd.f32 %v2259, 0.5
    %v2264 = vadd.f32 %v2260, 0.5
    %v2265 = vsel %vm342, %v2253, %v2261
    %v2266 = vsel %vm343, %v2254, %v2262
    %v2267 = vsel %vm344, %v2255, %v2263
    %v2268 = vsel %vm345, %v2256, %v2264
    %v2269 = vld [vmem:[#allocation3] sm:$0xff]
    %v2270 = vmul.f32 %v2266, %v2269
    %v2271 = vmul.f32 %v2265, %v2267
    %v2272 = vadd.f32 %v2270, %v2271
    %v2273 = vtanh.pop %v2272
    %v2274 = vmul.f32 %v2268, %v2273
    %2275 = vst [vmem:[#allocation3] sm:$0xff] %v2272
    %2276 = vst [vmem:[#allocation2] sm:$0xff] %v2274
    %v2277 = vld [vmem:[#allocation4] sm:$0xff]
    %2278 = vmatpush.msra.mxu0 %v315
    %2279 = vmatpush.msra.mxu0 %v311
    %2280 = vmatpush.msra.mxu0 %v307
    %2281 = vmatpush.msra.mxu0 %v303
    %2282 = vmatpush.msra.mxu0 %v299
    %2283 = vmatpush.msra.mxu0 %v295
    %2284 = vmatpush.msra.mxu0 %v291
    %2285 = vmatpush.msra.mxu0 %v287
    %2286 = vmatpush.msra.mxu0 %v283
    %2287 = vmatpush.msra.mxu0 %v279
    %2288 = vmatpush.msra.mxu0 %v275
    %2289 = vmatpush.msra.mxu0 %v271
    %2290 = vmatpush.msra.mxu0 %v267
    %2291 = vmatpush.msra.mxu0 %v263
    %2292 = vmatpush.msra.mxu0 %v259
    %2293 = vmatpush.msra.mxu0 %v255
    %2294 = vmatmul.f32.gmra.mxu0 %v2277
    %v2295 = vpop.f32.mrf.mxu0
    %v2296 = vadd.f32 0.0, %v2295
    %2297 = vdwg.mxu0
    %2298 = vmatpush.msra.mxu0 %v316
    %2299 = vmatpush.msra.mxu0 %v312
    %2300 = vmatpush.msra.mxu0 %v308
    %2301 = vmatpush.msra.mxu0 %v304
    %2302 = vmatpush.msra.mxu0 %v300
    %2303 = vmatpush.msra.mxu0 %v296
    %2304 = vmatpush.msra.mxu0 %v292
    %2305 = vmatpush.msra.mxu0 %v288
    %2306 = vmatpush.msra.mxu0 %v284
    %2307 = vmatpush.msra.mxu0 %v280
    %2308 = vmatpush.msra.mxu0 %v276
    %2309 = vmatpush.msra.mxu0 %v272
    %2310 = vmatpush.msra.mxu0 %v268
    %2311 = vmatpush.msra.mxu0 %v264
    %2312 = vmatpush.msra.mxu0 %v260
    %2313 = vmatpush.msra.mxu0 %v256
    %2314 = vmatmul.f32.gmra.mxu0 %v2277
    %v2315 = vpop.f32.mrf.mxu0
    %v2316 = vadd.f32 0.0, %v2315
    %2317 = vdwg.mxu0
    %2318 = vmatpush.msra.mxu0 %v317
    %2319 = vmatpush.msra.mxu0 %v313
    %2320 = vmatpush.msra.mxu0 %v309
    %2321 = vmatpush.msra.mxu0 %v305
    %2322 = vmatpush.msra.mxu0 %v301
    %2323 = vmatpush.msra.mxu0 %v297
    %2324 = vmatpush.msra.mxu0 %v293
    %2325 = vmatpush.msra.mxu0 %v289
    %2326 = vmatpush.msra.mxu0 %v285
    %2327 = vmatpush.msra.mxu0 %v281
    %2328 = vmatpush.msra.mxu0 %v277
    %2329 = vmatpush.msra.mxu0 %v273
    %2330 = vmatpush.msra.mxu0 %v269
    %2331 = vmatpush.msra.mxu0 %v265
    %2332 = vmatpush.msra.mxu0 %v261
    %2333 = vmatpush.msra.mxu0 %v257
    %2334 = vmatmul.f32.gmra.mxu0 %v2277
    %v2335 = vpop.f32.mrf.mxu0
    %v2336 = vadd.f32 0.0, %v2335
    %2337 = vdwg.mxu0
    %2338 = vmatpush.msra.mxu0 %v318
    %2339 = vmatpush.msra.mxu0 %v314
    %2340 = vmatpush.msra.mxu0 %v310
    %2341 = vmatpush.msra.mxu0 %v306
    %2342 = vmatpush.msra.mxu0 %v302
    %2343 = vmatpush.msra.mxu0 %v298
    %2344 = vmatpush.msra.mxu0 %v294
    %2345 = vmatpush.msra.mxu0 %v290
    %2346 = vmatpush.msra.mxu0 %v286
    %2347 = vmatpush.msra.mxu0 %v282
    %2348 = vmatpush.msra.mxu0 %v278
    %2349 = vmatpush.msra.mxu0 %v274
    %2350 = vmatpush.msra.mxu0 %v270
    %2351 = vmatpush.msra.mxu0 %v266
    %2352 = vmatpush.msra.mxu0 %v262
    %2353 = vmatpush.msra.mxu0 %v258
    %2354 = vmatmul.f32.gmra.mxu0 %v2277
    %v2355 = vpop.f32.mrf.mxu0
    %v2356 = vadd.f32 0.0, %v2355
    %2357 = vdwg.mxu0
    %2358 = vmatpush.msra.mxu0 %v251
    %2359 = vmatpush.msra.mxu0 %v247
    %2360 = vmatpush.msra.mxu0 %v243
    %2361 = vmatpush.msra.mxu0 %v239
    %2362 = vmatpush.msra.mxu0 %v235
    %2363 = vmatpush.msra.mxu0 %v231
    %2364 = vmatpush.msra.mxu0 %v227
    %2365 = vmatpush.msra.mxu0 %v223
    %2366 = vmatpush.msra.mxu0 %v219
    %2367 = vmatpush.msra.mxu0 %v215
    %2368 = vmatpush.msra.mxu0 %v211
    %2369 = vmatpush.msra.mxu0 %v207
    %2370 = vmatpush.msra.mxu0 %v203
    %2371 = vmatpush.msra.mxu0 %v199
    %2372 = vmatpush.msra.mxu0 %v195
    %2373 = vmatpush.msra.mxu0 %v191
    %2374 = vmatmul.f32.gmra.mxu0 %v2274
    %v2375 = vpop.f32.mrf.mxu0
    %v2376 = vadd.f32 %v2296, %v2375
    %2377 = vdwg.mxu0
    %2378 = vmatpush.msra.mxu0 %v252
    %2379 = vmatpush.msra.mxu0 %v248
    %2380 = vmatpush.msra.mxu0 %v244
    %2381 = vmatpush.msra.mxu0 %v240
    %2382 = vmatpush.msra.mxu0 %v236
    %2383 = vmatpush.msra.mxu0 %v232
    %2384 = vmatpush.msra.mxu0 %v228
    %2385 = vmatpush.msra.mxu0 %v224
    %2386 = vmatpush.msra.mxu0 %v220
    %2387 = vmatpush.msra.mxu0 %v216
    %2388 = vmatpush.msra.mxu0 %v212
    %2389 = vmatpush.msra.mxu0 %v208
    %2390 = vmatpush.msra.mxu0 %v204
    %2391 = vmatpush.msra.mxu0 %v200
    %2392 = vmatpush.msra.mxu0 %v196
    %2393 = vmatpush.msra.mxu0 %v192
    %2394 = vmatmul.f32.gmra.mxu0 %v2274
    %v2395 = vpop.f32.mrf.mxu0
    %v2396 = vadd.f32 %v2316, %v2395
    %2397 = vdwg.mxu0
    %2398 = vmatpush.msra.mxu0 %v253
    %2399 = vmatpush.msra.mxu0 %v249
    %2400 = vmatpush.msra.mxu0 %v245
    %2401 = vmatpush.msra.mxu0 %v241
    %2402 = vmatpush.msra.mxu0 %v237
    %2403 = vmatpush.msra.mxu0 %v233
    %2404 = vmatpush.msra.mxu0 %v229
    %2405 = vmatpush.msra.mxu0 %v225
    %2406 = vmatpush.msra.mxu0 %v221
    %2407 = vmatpush.msra.mxu0 %v217
    %2408 = vmatpush.msra.mxu0 %v213
    %2409 = vmatpush.msra.mxu0 %v209
    %2410 = vmatpush.msra.mxu0 %v205
    %2411 = vmatpush.msra.mxu0 %v201
    %2412 = vmatpush.msra.mxu0 %v197
    %2413 = vmatpush.msra.mxu0 %v193
    %2414 = vmatmul.f32.gmra.mxu0 %v2274
    %v2415 = vpop.f32.mrf.mxu0
    %v2416 = vadd.f32 %v2336, %v2415
    %2417 = vdwg.mxu0
    %2418 = vmatpush.msra.mxu0 %v254
    %2419 = vmatpush.msra.mxu0 %v250
    %2420 = vmatpush.msra.mxu0 %v246
    %2421 = vmatpush.msra.mxu0 %v242
    %2422 = vmatpush.msra.mxu0 %v238
    %2423 = vmatpush.msra.mxu0 %v234
    %2424 = vmatpush.msra.mxu0 %v230
    %2425 = vmatpush.msra.mxu0 %v226
    %2426 = vmatpush.msra.mxu0 %v222
    %2427 = vmatpush.msra.mxu0 %v218
    %2428 = vmatpush.msra.mxu0 %v214
    %2429 = vmatpush.msra.mxu0 %v210
    %2430 = vmatpush.msra.mxu0 %v206
    %2431 = vmatpush.msra.mxu0 %v202
    %2432 = vmatpush.msra.mxu0 %v198
    %2433 = vmatpush.msra.mxu0 %v194
    %2434 = vmatmul.f32.gmra.mxu0 %v2274
    %v2435 = vpop.f32.mrf.mxu0
    %v2436 = vadd.f32 %v2356, %v2435
    %2437 = vdwg.mxu0
    %v2438 = vadd.f32 %v2376, %v321
    %v2439 = vadd.f32 %v2396, %v322
    %v2440 = vadd.f32 %v2416, %v323
    %v2441 = vadd.f32 %v2436, %v324
    %v2442 = vtanh.pop %v2438
    %v2443 = vtanh.pop %v2439
    %v2444 = vtanh.pop %v2440
    %v2445 = vtanh.pop %v2441
    %v2446 = vmul.f32 %v2442, 0.5
    %v2447 = vmul.f32 %v2443, 0.5
    %v2448 = vmul.f32 %v2444, 0.5
    %v2449 = vmul.f32 %v2445, 0.5
    %v2450 = vadd.f32 %v2446, 0.5
    %v2451 = vadd.f32 %v2447, 0.5
    %v2452 = vadd.f32 %v2448, 0.5
    %v2453 = vadd.f32 %v2449, 0.5
    %v2454 = vsel %vm342, %v2442, %v2450
    %v2455 = vsel %vm343, %v2443, %v2451
    %v2456 = vsel %vm344, %v2444, %v2452
    %v2457 = vsel %vm345, %v2445, %v2453
    %v2458 = vld [vmem:[#allocation5] sm:$0xff]
    %v2459 = vmul.f32 %v2455, %v2458
    %v2460 = vmul.f32 %v2454, %v2456
    %v2461 = vadd.f32 %v2459, %v2460
    %v2462 = vtanh.pop %v2461
    %v2463 = vmul.f32 %v2457, %v2462
    %2464 = vst [vmem:[#allocation5] sm:$0xff] %v2461
    %2465 = vst [vmem:[#allocation4] sm:$0xff] %v2463
    %s2466 = scalar_lea.vmem [#allocation6], 224
    %v2467 = vld [vmem:[%s2466] sm:$0xff]
    %v2468 = vld [vmem:[%s2466 + $0x8] sm:$0xff]
    %v2469 = vld [vmem:[%s2466 + $0x10] sm:$0xff]
    %v2470 = vld [vmem:[%s2466 + $0x18] sm:$0xff]
    %v2471 = vld [vmem:[#allocation2] sm:$0xff]
    %2472 = vmatpush.msra.mxu0 %v187
    %2473 = vmatpush.msra.mxu0 %v183
    %2474 = vmatpush.msra.mxu0 %v179
    %2475 = vmatpush.msra.mxu0 %v175
    %2476 = vmatpush.msra.mxu0 %v171
    %2477 = vmatpush.msra.mxu0 %v167
    %2478 = vmatpush.msra.mxu0 %v163
    %2479 = vmatpush.msra.mxu0 %v159
    %2480 = vmatpush.msra.mxu0 %v155
    %2481 = vmatpush.msra.mxu0 %v151
    %2482 = vmatpush.msra.mxu0 %v147
    %2483 = vmatpush.msra.mxu0 %v143
    %2484 = vmatpush.msra.mxu0 %v139
    %2485 = vmatpush.msra.mxu0 %v135
    %2486 = vmatpush.msra.mxu0 %v131
    %2487 = vmatpush.msra.mxu0 %v127
    %2488 = vmatmul.f32.gmra.mxu0 %v2471
    %v2489 = vpop.f32.mrf.mxu0
    %v2490 = vadd.f32 0.0, %v2489
    %2491 = vdwg.mxu0
    %2492 = vmatpush.msra.mxu0 %v188
    %2493 = vmatpush.msra.mxu0 %v184
    %2494 = vmatpush.msra.mxu0 %v180
    %2495 = vmatpush.msra.mxu0 %v176
    %2496 = vmatpush.msra.mxu0 %v172
    %2497 = vmatpush.msra.mxu0 %v168
    %2498 = vmatpush.msra.mxu0 %v164
    %2499 = vmatpush.msra.mxu0 %v160
    %2500 = vmatpush.msra.mxu0 %v156
    %2501 = vmatpush.msra.mxu0 %v152
    %2502 = vmatpush.msra.mxu0 %v148
    %2503 = vmatpush.msra.mxu0 %v144
    %2504 = vmatpush.msra.mxu0 %v140
    %2505 = vmatpush.msra.mxu0 %v136
    %2506 = vmatpush.msra.mxu0 %v132
    %2507 = vmatpush.msra.mxu0 %v128
    %2508 = vmatmul.f32.gmra.mxu0 %v2471
    %v2509 = vpop.f32.mrf.mxu0
    %v2510 = vadd.f32 0.0, %v2509
    %2511 = vdwg.mxu0
    %2512 = vmatpush.msra.mxu0 %v189
    %2513 = vmatpush.msra.mxu0 %v185
    %2514 = vmatpush.msra.mxu0 %v181
    %2515 = vmatpush.msra.mxu0 %v177
    %2516 = vmatpush.msra.mxu0 %v173
    %2517 = vmatpush.msra.mxu0 %v169
    %2518 = vmatpush.msra.mxu0 %v165
    %2519 = vmatpush.msra.mxu0 %v161
    %2520 = vmatpush.msra.mxu0 %v157
    %2521 = vmatpush.msra.mxu0 %v153
    %2522 = vmatpush.msra.mxu0 %v149
    %2523 = vmatpush.msra.mxu0 %v145
    %2524 = vmatpush.msra.mxu0 %v141
    %2525 = vmatpush.msra.mxu0 %v137
    %2526 = vmatpush.msra.mxu0 %v133
    %2527 = vmatpush.msra.mxu0 %v129
    %2528 = vmatmul.f32.gmra.mxu0 %v2471
    %v2529 = vpop.f32.mrf.mxu0
    %v2530 = vadd.f32 0.0, %v2529
    %2531 = vdwg.mxu0
    %2532 = vmatpush.msra.mxu0 %v190
    %2533 = vmatpush.msra.mxu0 %v186
    %2534 = vmatpush.msra.mxu0 %v182
    %2535 = vmatpush.msra.mxu0 %v178
    %2536 = vmatpush.msra.mxu0 %v174
    %2537 = vmatpush.msra.mxu0 %v170
    %2538 = vmatpush.msra.mxu0 %v166
    %2539 = vmatpush.msra.mxu0 %v162
    %2540 = vmatpush.msra.mxu0 %v158
    %2541 = vmatpush.msra.mxu0 %v154
    %2542 = vmatpush.msra.mxu0 %v150
    %2543 = vmatpush.msra.mxu0 %v146
    %2544 = vmatpush.msra.mxu0 %v142
    %2545 = vmatpush.msra.mxu0 %v138
    %2546 = vmatpush.msra.mxu0 %v134
    %2547 = vmatpush.msra.mxu0 %v130
    %2548 = vmatmul.f32.gmra.mxu0 %v2471
    %v2549 = vpop.f32.mrf.mxu0
    %v2550 = vadd.f32 0.0, %v2549
    %2551 = vdwg.mxu0
    %v2552 = vadd.f32 %v2467, %v2490
    %v2553 = vadd.f32 %v2468, %v2510
    %v2554 = vadd.f32 %v2469, %v2530
    %v2555 = vadd.f32 %v2470, %v2550
    %v2556 = vtanh.pop %v2552
    %v2557 = vtanh.pop %v2553
    %v2558 = vtanh.pop %v2554
    %v2559 = vtanh.pop %v2555
    %v2560 = vmul.f32 %v2556, 0.5
    %v2561 = vmul.f32 %v2557, 0.5
    %v2562 = vmul.f32 %v2558, 0.5
    %v2563 = vmul.f32 %v2559, 0.5
    %v2564 = vadd.f32 %v2560, 0.5
    %v2565 = vadd.f32 %v2561, 0.5
    %v2566 = vadd.f32 %v2562, 0.5
    %v2567 = vadd.f32 %v2563, 0.5
    %v2568 = vsel %vm342, %v2556, %v2564
    %v2569 = vsel %vm343, %v2557, %v2565
    %v2570 = vsel %vm344, %v2558, %v2566
    %v2571 = vsel %vm345, %v2559, %v2567
    %v2572 = vld [vmem:[#allocation3] sm:$0xff]
    %v2573 = vmul.f32 %v2569, %v2572
    %v2574 = vmul.f32 %v2568, %v2570
    %v2575 = vadd.f32 %v2573, %v2574
    %v2576 = vtanh.pop %v2575
    %v2577 = vmul.f32 %v2571, %v2576
    %2578 = vst [vmem:[#allocation3] sm:$0xff] %v2575
    %2579 = vst [vmem:[#allocation2] sm:$0xff] %v2577
    %v2580 = vld [vmem:[#allocation4] sm:$0xff]
    %2581 = vmatpush.msra.mxu0 %v315
    %2582 = vmatpush.msra.mxu0 %v311
    %2583 = vmatpush.msra.mxu0 %v307
    %2584 = vmatpush.msra.mxu0 %v303
    %2585 = vmatpush.msra.mxu0 %v299
    %2586 = vmatpush.msra.mxu0 %v295
    %2587 = vmatpush.msra.mxu0 %v291
    %2588 = vmatpush.msra.mxu0 %v287
    %2589 = vmatpush.msra.mxu0 %v283
    %2590 = vmatpush.msra.mxu0 %v279
    %2591 = vmatpush.msra.mxu0 %v275
    %2592 = vmatpush.msra.mxu0 %v271
    %2593 = vmatpush.msra.mxu0 %v267
    %2594 = vmatpush.msra.mxu0 %v263
    %2595 = vmatpush.msra.mxu0 %v259
    %2596 = vmatpush.msra.mxu0 %v255
    %2597 = vmatmul.f32.gmra.mxu0 %v2580
    %v2598 = vpop.f32.mrf.mxu0
    %v2599 = vadd.f32 0.0, %v2598
    %2600 = vdwg.mxu0
    %2601 = vmatpush.msra.mxu0 %v316
    %2602 = vmatpush.msra.mxu0 %v312
    %2603 = vmatpush.msra.mxu0 %v308
    %2604 = vmatpush.msra.mxu0 %v304
    %2605 = vmatpush.msra.mxu0 %v300
    %2606 = vmatpush.msra.mxu0 %v296
    %2607 = vmatpush.msra.mxu0 %v292
    %2608 = vmatpush.msra.mxu0 %v288
    %2609 = vmatpush.msra.mxu0 %v284
    %2610 = vmatpush.msra.mxu0 %v280
    %2611 = vmatpush.msra.mxu0 %v276
    %2612 = vmatpush.msra.mxu0 %v272
    %2613 = vmatpush.msra.mxu0 %v268
    %2614 = vmatpush.msra.mxu0 %v264
    %2615 = vmatpush.msra.mxu0 %v260
    %2616 = vmatpush.msra.mxu0 %v256
    %2617 = vmatmul.f32.gmra.mxu0 %v2580
    %v2618 = vpop.f32.mrf.mxu0
    %v2619 = vadd.f32 0.0, %v2618
    %2620 = vdwg.mxu0
    %2621 = vmatpush.msra.mxu0 %v317
    %2622 = vmatpush.msra.mxu0 %v313
    %2623 = vmatpush.msra.mxu0 %v309
    %2624 = vmatpush.msra.mxu0 %v305
    %2625 = vmatpush.msra.mxu0 %v301
    %2626 = vmatpush.msra.mxu0 %v297
    %2627 = vmatpush.msra.mxu0 %v293
    %2628 = vmatpush.msra.mxu0 %v289
    %2629 = vmatpush.msra.mxu0 %v285
    %2630 = vmatpush.msra.mxu0 %v281
    %2631 = vmatpush.msra.mxu0 %v277
    %2632 = vmatpush.msra.mxu0 %v273
    %2633 = vmatpush.msra.mxu0 %v269
    %2634 = vmatpush.msra.mxu0 %v265
    %2635 = vmatpush.msra.mxu0 %v261
    %2636 = vmatpush.msra.mxu0 %v257
    %2637 = vmatmul.f32.gmra.mxu0 %v2580
    %v2638 = vpop.f32.mrf.mxu0
    %v2639 = vadd.f32 0.0, %v2638
    %2640 = vdwg.mxu0
    %2641 = vmatpush.msra.mxu0 %v318
    %2642 = vmatpush.msra.mxu0 %v314
    %2643 = vmatpush.msra.mxu0 %v310
    %2644 = vmatpush.msra.mxu0 %v306
    %2645 = vmatpush.msra.mxu0 %v302
    %2646 = vmatpush.msra.mxu0 %v298
    %2647 = vmatpush.msra.mxu0 %v294
    %2648 = vmatpush.msra.mxu0 %v290
    %2649 = vmatpush.msra.mxu0 %v286
    %2650 = vmatpush.msra.mxu0 %v282
    %2651 = vmatpush.msra.mxu0 %v278
    %2652 = vmatpush.msra.mxu0 %v274
    %2653 = vmatpush.msra.mxu0 %v270
    %2654 = vmatpush.msra.mxu0 %v266
    %2655 = vmatpush.msra.mxu0 %v262
    %2656 = vmatpush.msra.mxu0 %v258
    %2657 = vmatmul.f32.gmra.mxu0 %v2580
    %v2658 = vpop.f32.mrf.mxu0
    %v2659 = vadd.f32 0.0, %v2658
    %2660 = vdwg.mxu0
    %2661 = vmatpush.msra.mxu0 %v251
    %2662 = vmatpush.msra.mxu0 %v247
    %2663 = vmatpush.msra.mxu0 %v243
    %2664 = vmatpush.msra.mxu0 %v239
    %2665 = vmatpush.msra.mxu0 %v235
    %2666 = vmatpush.msra.mxu0 %v231
    %2667 = vmatpush.msra.mxu0 %v227
    %2668 = vmatpush.msra.mxu0 %v223
    %2669 = vmatpush.msra.mxu0 %v219
    %2670 = vmatpush.msra.mxu0 %v215
    %2671 = vmatpush.msra.mxu0 %v211
    %2672 = vmatpush.msra.mxu0 %v207
    %2673 = vmatpush.msra.mxu0 %v203
    %2674 = vmatpush.msra.mxu0 %v199
    %2675 = vmatpush.msra.mxu0 %v195
    %2676 = vmatpush.msra.mxu0 %v191
    %2677 = vmatmul.f32.gmra.mxu0 %v2577
    %v2678 = vpop.f32.mrf.mxu0
    %v2679 = vadd.f32 %v2599, %v2678
    %2680 = vdwg.mxu0
    %2681 = vmatpush.msra.mxu0 %v252
    %2682 = vmatpush.msra.mxu0 %v248
    %2683 = vmatpush.msra.mxu0 %v244
    %2684 = vmatpush.msra.mxu0 %v240
    %2685 = vmatpush.msra.mxu0 %v236
    %2686 = vmatpush.msra.mxu0 %v232
    %2687 = vmatpush.msra.mxu0 %v228
    %2688 = vmatpush.msra.mxu0 %v224
    %2689 = vmatpush.msra.mxu0 %v220
    %2690 = vmatpush.msra.mxu0 %v216
    %2691 = vmatpush.msra.mxu0 %v212
    %2692 = vmatpush.msra.mxu0 %v208
    %2693 = vmatpush.msra.mxu0 %v204
    %2694 = vmatpush.msra.mxu0 %v200
    %2695 = vmatpush.msra.mxu0 %v196
    %2696 = vmatpush.msra.mxu0 %v192
    %2697 = vmatmul.f32.gmra.mxu0 %v2577
    %v2698 = vpop.f32.mrf.mxu0
    %v2699 = vadd.f32 %v2619, %v2698
    %2700 = vdwg.mxu0
    %2701 = vmatpush.msra.mxu0 %v253
    %2702 = vmatpush.msra.mxu0 %v249
    %2703 = vmatpush.msra.mxu0 %v245
    %2704 = vmatpush.msra.mxu0 %v241
    %2705 = vmatpush.msra.mxu0 %v237
    %2706 = vmatpush.msra.mxu0 %v233
    %2707 = vmatpush.msra.mxu0 %v229
    %2708 = vmatpush.msra.mxu0 %v225
    %2709 = vmatpush.msra.mxu0 %v221
    %2710 = vmatpush.msra.mxu0 %v217
    %2711 = vmatpush.msra.mxu0 %v213
    %2712 = vmatpush.msra.mxu0 %v209
    %2713 = vmatpush.msra.mxu0 %v205
    %2714 = vmatpush.msra.mxu0 %v201
    %2715 = vmatpush.msra.mxu0 %v197
    %2716 = vmatpush.msra.mxu0 %v193
    %2717 = vmatmul.f32.gmra.mxu0 %v2577
    %v2718 = vpop.f32.mrf.mxu0
    %v2719 = vadd.f32 %v2639, %v2718
    %2720 = vdwg.mxu0
    %2721 = vmatpush.msra.mxu0 %v254
    %2722 = vmatpush.msra.mxu0 %v250
    %2723 = vmatpush.msra.mxu0 %v246
    %2724 = vmatpush.msra.mxu0 %v242
    %2725 = vmatpush.msra.mxu0 %v238
    %2726 = vmatpush.msra.mxu0 %v234
    %2727 = vmatpush.msra.mxu0 %v230
    %2728 = vmatpush.msra.mxu0 %v226
    %2729 = vmatpush.msra.mxu0 %v222
    %2730 = vmatpush.msra.mxu0 %v218
    %2731 = vmatpush.msra.mxu0 %v214
    %2732 = vmatpush.msra.mxu0 %v210
    %2733 = vmatpush.msra.mxu0 %v206
    %2734 = vmatpush.msra.mxu0 %v202
    %2735 = vmatpush.msra.mxu0 %v198
    %2736 = vmatpush.msra.mxu0 %v194
    %2737 = vmatmul.f32.gmra.mxu0 %v2577
    %v2738 = vpop.f32.mrf.mxu0
    %v2739 = vadd.f32 %v2659, %v2738
    %2740 = vdwg.mxu0
    %v2741 = vadd.f32 %v2679, %v321
    %v2742 = vadd.f32 %v2699, %v322
    %v2743 = vadd.f32 %v2719, %v323
    %v2744 = vadd.f32 %v2739, %v324
    %v2745 = vtanh.pop %v2741
    %v2746 = vtanh.pop %v2742
    %v2747 = vtanh.pop %v2743
    %v2748 = vtanh.pop %v2744
    %v2749 = vmul.f32 %v2745, 0.5
    %v2750 = vmul.f32 %v2746, 0.5
    %v2751 = vmul.f32 %v2747, 0.5
    %v2752 = vmul.f32 %v2748, 0.5
    %v2753 = vadd.f32 %v2749, 0.5
    %v2754 = vadd.f32 %v2750, 0.5
    %v2755 = vadd.f32 %v2751, 0.5
    %v2756 = vadd.f32 %v2752, 0.5
    %v2757 = vsel %vm342, %v2745, %v2753
    %v2758 = vsel %vm343, %v2746, %v2754
    %v2759 = vsel %vm344, %v2747, %v2755
    %v2760 = vsel %vm345, %v2748, %v2756
    %v2761 = vld [vmem:[#allocation5] sm:$0xff]
    %v2762 = vmul.f32 %v2758, %v2761
    %v2763 = vmul.f32 %v2757, %v2759
    %v2764 = vadd.f32 %v2762, %v2763
    %v2765 = vtanh.pop %v2764
    %v2766 = vmul.f32 %v2760, %v2765
    %2767 = vst [vmem:[#allocation5] sm:$0xff] %v2764
    %2768 = vst [vmem:[#allocation4] sm:$0xff] %v2766
    // Predicated region
    $region58: #{tpu_custom_call.1} parent=1 // pred_check
      %p2769 = pneg %p119
    $region59: #{tpu_custom_call.1} parent=1 // pred_check_branch
      %2771 = sbr.rel (%p2769) target = $region61
    $region60: #{tpu_custom_call.1} parent=1 // pred_region
      %v2772 = vld [vmem:[#allocation4] sm:$0xff]
      %v2773 = vld [vmem:[#allocation15] sm:$0xff]
      %v2774 = vld [vmem:[#allocation15 + $0x8] sm:$0xff]
      %v2775 = vld [vmem:[#allocation15 + $0x10] sm:$0xff]
      %v2776 = vld [vmem:[#allocation15 + $0x18] sm:$0xff]
      %v2777 = vld [vmem:[#allocation15 + $0x20] sm:$0xff]
      %v2778 = vld [vmem:[#allocation15 + $0x28] sm:$0xff]
      %v2779 = vld [vmem:[#allocation15 + $0x30] sm:$0xff]
      %v2780 = vld [vmem:[#allocation15 + $0x38] sm:$0xff]
      %v2781 = vld [vmem:[#allocation15 + $0x40] sm:$0xff]
      %v2782 = vld [vmem:[#allocation15 + $0x48] sm:$0xff]
      %v2783 = vld [vmem:[#allocation15 + $0x50] sm:$0xff]
      %v2784 = vld [vmem:[#allocation15 + $0x58] sm:$0xff]
      %v2785 = vld [vmem:[#allocation15 + $0x60] sm:$0xff]
      %v2786 = vld [vmem:[#allocation15 + $0x68] sm:$0xff]
      %v2787 = vld [vmem:[#allocation15 + $0x70] sm:$0xff]
      %v2788 = vld [vmem:[#allocation15 + $0x78] sm:$0xff]
      %v2789 = vld [vmem:[%s6] sm:$0x1]
      %v2791 = vperm.slane %v2789, 0
      %2793 = vmatpush.msra.mxu0 %v2788
      %2794 = vmatpush.msra.mxu0 %v2787
      %2795 = vmatpush.msra.mxu0 %v2786
      %2796 = vmatpush.msra.mxu0 %v2785
      %2797 = vmatpush.msra.mxu0 %v2784
      %2798 = vmatpush.msra.mxu0 %v2783
      %2799 = vmatpush.msra.mxu0 %v2782
      %2800 = vmatpush.msra.mxu0 %v2781
      %2801 = vmatpush.msra.mxu0 %v2780
      %2802 = vmatpush.msra.mxu0 %v2779
      %2803 = vmatpush.msra.mxu0 %v2778
      %2804 = vmatpush.msra.mxu0 %v2777
      %2805 = vmatpush.msra.mxu0 %v2776
      %2806 = vmatpush.msra.mxu0 %v2775
      %2807 = vmatpush.msra.mxu0 %v2774
      %2808 = vmatpush.msra.mxu0 %v2773
      %2809 = vmatmul.f32.gmra.mxu0 %v2772
      %v2810 = vpop.f32.mrf.mxu0
      %v2811 = vadd.f32 %v2791, %v2810
      %2812 = vdwg.mxu0
      %2813 = vst [vmem:[#allocation17] sm:$0xff] %v2811
    $region61: #{tpu_custom_call.1} parent=1 // pred_fallthru
      _
    // Predicated region
    $region62: #{tpu_custom_call.1} parent=1 // pred_check
      _
    $region63: #{tpu_custom_call.1} parent=1 // pred_check_branch
      %2815 = sbr.rel (0) target = $region65
    $region64: #{tpu_custom_call.1} parent=1 // pred_region
      %2817 = vsyncadd [#allocation8], 0
      %s2819 = sshll.u32 [#allocation17], 4
      %s2820 = int_to_ptr.vmem [resolvable:$true] %s2819
      %s2821 = sshll.u32 %s7, 4
      %s2822 = int_to_ptr.hbm [resolvable:$true] %s2821
      %2824 = dma.vmem_to_hbm [thread:$0]  %s2820, 128, %s2822, [#allocation8]
    $region65: #{tpu_custom_call.1} parent=1 // pred_fallthru
      _
    // Predicated region
    $region66: #{tpu_custom_call.1} parent=1 // pred_check
      _
    $region67: #{tpu_custom_call.1} parent=1 // pred_check_branch
      %2826 = sbr.rel (0) target = $region69
    $region68: #{tpu_custom_call.1} parent=1 // pred_region
      %2828 = dma.done [#allocation8], 128
    $region69: #{tpu_custom_call.1} parent=1 // pred_fallthru
      _
    %2829 = vsyncpa [#allocation7], 1
    %2830 = vsyncpa [#allocation10], 1
    %2831 = vsyncpa [#allocation13], 1
    %2832 = vsyncpa [#allocation16], 1
    %2833 = vsyncpa [#allocation8], 1

</llo_original>
